<compile_context>
chip_gen: v7x
topology: tpu7x:2x2x1
jax: 0.10.0
libtpu: 0.0.40
codegen_flags: <defaults>
</compile_context>

<pallas_src>
import jax
import jax.numpy as jnp
import numpy as np
from jax import lax
from jax.experimental import pallas as pl
from jax.experimental.pallas import tpu as pltpu

LN_EPS = 1e-5                       # torch nn.LayerNorm default
_PREC = jax.lax.Precision.HIGHEST   # fp32 contract precision (see header note)
_INV_SQRT2 = np.float32(1.0 / np.sqrt(2.0))


def _gelu(x):
    # exact (erf-based) GELU == torch nn.GELU() default
    return 0.5 * x * (1.0 + lax.erf(x * _INV_SQRT2))


def _dot(a, b):
    return jnp.dot(a, b, preferred_element_type=jnp.float32, precision=_PREC)


def mlp_block_kernel(x_ref, w1_ref, w2_ref, w3_ref, w4_ref, bmat_ref, brow_ref,
                     o_ref):
    """One batch element per grid step: x_ref/o_ref are (C, N)."""
    c, n = x_ref.shape
    ci = w1_ref.shape[0]
    ni = w3_ref.shape[1]

    x = x_ref[...].astype(jnp.float32)                       # (C, N)
    # LN averaging matrix built in-kernel (splat constant, zero DMA bytes).
    avg = jnp.full((n, n), 1.0 / n, dtype=jnp.float32)       # (N, N)

    # packed small params
    g1 = brow_ref[0:1, 0:n]                                  # (1, N)
    bl3 = brow_ref[1:2, 0:ni]                                # (1, Ni)
    bl4 = brow_ref[2:3, 0:n]                                 # (1, N)
    b1c = bmat_ref[0:ci, :]                                  # (Ci, N)
    b2c = bmat_ref[ci:ci + c, :]                             # (C, N)

    # ---- cross_location: PreNormResidual(LayerNorm(N) -> Conv1d-1x1 FF over C)
    stats = _dot(jnp.concatenate([x, x * x], axis=0), avg)   # (2C, N): [E[x];E[x^2]]
    m = stats[0:c, :]
    var = stats[c:2 * c, :] - m * m
    xhat = (x - m) * lax.rsqrt(var + LN_EPS)                 # (C, N)
    # LN1 affine folded: (W1 @ (xhat*g1 + b1)) + bc1 == (W1 @ xhat)*g1 + b1c
    h = _gelu(_dot(w1_ref[...], xhat) * g1 + b1c)            # (Ci, N)
    x1 = _dot(w2_ref[...], h) + b2c + x                      # residual, (C, N)

    # ---- pre_location: PreNormResidual(LayerNorm(N) -> Linear FF over N) ----
    stats2 = _dot(jnp.concatenate([x1, x1 * x1], axis=0), avg)
    m2 = stats2[0:c, :]
    var2 = stats2[c:2 * c, :] - m2 * m2
    xhat2 = (x1 - m2) * lax.rsqrt(var2 + LN_EPS)             # (C, N)
    # LN2 affine folded into w3/bl3 at prep time.
    a = _gelu(_dot(xhat2, w3_ref[...]) + bl3)                # (C, Ni)
    o = _dot(a, w4_ref[...]) + bl4 + x1                      # (C, N)

    o_ref[...] = o.astype(o_ref.dtype)


def init_params(key, dim, num_patches, expansion_factor_token, expansion_factor):
    """Deterministic synthetic parameters (shapes match the torch module)."""
    c = num_patches
    n = dim
    ci = int(c * expansion_factor)          # Conv1d inner channels
    ni = int(n * expansion_factor_token)    # Linear inner features
    ks = jax.random.split(key, 8)
    s = 0.02
    return {
        # cross_location: LayerNorm(dim) + Conv1d(c->ci,1), Conv1d(ci->c,1)
        "g1": jnp.ones((n,), jnp.float32),
        "b1": jnp.zeros((n,), jnp.float32),
        "w1": (jax.random.normal(ks[0], (ci, c)) * s).astype(jnp.float32),
        "bc1": (jax.random.normal(ks[1], (ci,)) * s).astype(jnp.float32),
        "w2": (jax.random.normal(ks[2], (c, ci)) * s).astype(jnp.float32),
        "bc2": (jax.random.normal(ks[3], (c,)) * s).astype(jnp.float32),
        # pre_location: LayerNorm(dim) + Linear(n->ni), Linear(ni->n)
        "g2": jnp.ones((n,), jnp.float32),
        "b2": jnp.zeros((n,), jnp.float32),
        # Linear weights stored PRE-TRANSPOSED as (in, out): y @ w3t == Linear(y)
        "w3t": (jax.random.normal(ks[4], (n, ni)) * s).astype(jnp.float32),
        "bl3": (jax.random.normal(ks[5], (ni,)) * s).astype(jnp.float32),
        "w4t": (jax.random.normal(ks[6], (ni, n)) * s).astype(jnp.float32),
        "bl4": (jax.random.normal(ks[7], (n,)) * s).astype(jnp.float32),
    }


def prepare_params(params):
    """One-time (outside jit) prep: fold LN affines, pack tiny params."""
    f32 = jnp.float32
    n = params["g1"].shape[0]
    ci = params["w1"].shape[0]
    c = params["w2"].shape[0]
    ni = params["w3t"].shape[1]

    # cross_location: fold LN1 affine through the k=1 conv.
    #   W1 @ (xhat*g1 + b1) + bc1 = (W1 @ xhat)*g1 + rowsum(W1) b1 + bc1
    b1c = (jnp.sum(params["w1"], axis=1, keepdims=True) * params["b1"][None, :]
           + params["bc1"][:, None]).astype(f32)                         # (Ci, N)
    b2c = jnp.broadcast_to(params["bc2"][:, None], (c, n)).astype(f32)   # (C, N)
    bmat = jnp.concatenate([b1c, b2c], axis=0)                           # (Ci+C, N)

    # pre_location: fold LN2 affine exactly into the token-FF weights.
    w3g = (params["g2"][:, None] * params["w3t"]).astype(f32)            # (N, Ni)
    bl3f = (params["bl3"]
            + jnp.dot(params["b2"], params["w3t"], precision=_PREC))     # (Ni,)

    # pack the remaining tiny row-vector params into one lane-dense buffer
    roww = ((max(n, ni) + 127) // 128) * 128
    brow = jnp.zeros((3, roww), f32)
    brow = brow.at[0, :n].set(params["g1"])
    brow = brow.at[1, :ni].set(bl3f)
    brow = brow.at[2, :n].set(params["bl4"])

    return {
        "w1": params["w1"].astype(f32), "w2": params["w2"].astype(f32),
        "w3g": w3g, "w4t": params["w4t"].astype(f32),
        "bmat": bmat, "brow": brow,
    }


@jax.jit
def mlp_forward(x_nchw, prepped):
    b, c, h, w = x_nchw.shape
    n = h * w
    tokens = x_nchw.reshape(b, c, n)          # free reshape, no transpose HLO

    ci = prepped["w1"].shape[0]
    ni = prepped["w3g"].shape[1]
    br, roww = prepped["brow"].shape
    bm = prepped["bmat"].shape[0]

    out = pl.pallas_call(
        mlp_block_kernel,
        out_shape=jax.ShapeDtypeStruct((b, c, n), x_nchw.dtype),
        grid_spec=pltpu.PrefetchScalarGridSpec(
            num_scalar_prefetch=0,
            grid=(b,),
            in_specs=[
                pl.BlockSpec((None, c, n), lambda i: (i, 0, 0)),   # x (per batch)
                pl.BlockSpec((ci, c), lambda i: (0, 0)),           # w1
                pl.BlockSpec((c, ci), lambda i: (0, 0)),           # w2
                pl.BlockSpec((n, ni), lambda i: (0, 0)),           # w3 (g2 folded)
                pl.BlockSpec((ni, n), lambda i: (0, 0)),           # w4
                pl.BlockSpec((bm, n), lambda i: (0, 0)),           # [b1c ; b2c]
                pl.BlockSpec((br, roww), lambda i: (0, 0)),        # packed row vecs
            ],
            out_specs=pl.BlockSpec((None, c, n), lambda i: (i, 0, 0)),
        ),
        compiler_params=pltpu.CompilerParams(
            dimension_semantics=("parallel",)),   # v7x: batch split across 2 TCs
    )(tokens, prepped["w1"], prepped["w2"], prepped["w3g"], prepped["w4t"],
      prepped["bmat"], prepped["brow"])

    return out.reshape(b, c, h, w)            # free reshape


def mlp_forward_ref(x_nchw, params):
    """Pure-JAX reference mirroring the PyTorch forward."""
    b, c, h, w = x_nchw.shape
    t = x_nchw.reshape(b, c, h * w).astype(jnp.float32)

    def ln(x, g, bt):
        m = jnp.mean(x, axis=-1, keepdims=True)
        v = jnp.mean((x - m) ** 2, axis=-1, keepdims=True)
        return (x - m) * lax.rsqrt(v + LN_EPS) * g + bt

    # cross_location
    y = ln(t, params["g1"], params["b1"])
    z = jnp.einsum("oc,bcn->bon", params["w1"], y,
                   precision=_PREC) + params["bc1"][None, :, None]
    z = _gelu(z)
    z = jnp.einsum("co,bon->bcn", params["w2"], z,
                   precision=_PREC) + params["bc2"][None, :, None]
    x1 = z + t
    # pre_location
    y2 = ln(x1, params["g2"], params["b2"])
    a = jnp.einsum("bcn,no->bco", y2, params["w3t"],
                   precision=_PREC) + params["bl3"][None, None, :]
    a = _gelu(a)
    o = jnp.einsum("bco,on->bcn", a, params["w4t"],
                   precision=_PREC) + params["bl4"][None, None, :]
    return (o + x1).reshape(b, c, h, w)


if __name__ == "__main__":
    # Module hyper-params implied by the forward: dim == H*W, num_patches == C.
    B, C, H, W = 2, 16, 8, 8
    DIM = H * W                       # 64
    NUM_PATCHES = C                   # 16
    EXPANSION_FACTOR = 4              # conv-channel FF: 16 -> 64 -> 16
    EXPANSION_FACTOR_TOKEN = 2        # token FF:        64 -> 128 -> 64

    key = jax.random.PRNGKey(0)
    kx, kp = jax.random.split(key)
    x = jax.random.normal(kx, (B, C, H, W), dtype=jnp.float32)
    params = init_params(kp, DIM, NUM_PATCHES, EXPANSION_FACTOR_TOKEN,
                         EXPANSION_FACTOR)
    prepped = prepare_params(params)   # one-time, outside the jit'd forward

    out = jax.block_until_ready(mlp_forward(x, prepped))
    ref = jax.block_until_ready(mlp_forward_ref(x, params))

    assert out.shape == (B, C, H, W)
    np.testing.assert_allclose(np.asarray(out), np.asarray(ref),
                               rtol=1e-4, atol=1e-4)
    print("KERNEL_OK")
</pallas_src>

<mosaic_0001>
module attributes {stable_mosaic.version = 11 : i64} {
  func.func @mlp_block_kernel(%arg0: i32, %arg1: memref<1x16x64xf32, #tpu.memory_space<vmem>>, %arg2: memref<64x16xf32, #tpu.memory_space<vmem>>, %arg3: memref<16x64xf32, #tpu.memory_space<vmem>>, %arg4: memref<64x128xf32, #tpu.memory_space<vmem>>, %arg5: memref<128x64xf32, #tpu.memory_space<vmem>>, %arg6: memref<80x64xf32, #tpu.memory_space<vmem>>, %arg7: memref<3x128xf32, #tpu.memory_space<vmem>>, %arg8: memref<1x16x64xf32, #tpu.memory_space<vmem>>) attributes {dimension_semantics = [#tpu.dimension_semantics<parallel>], iteration_bounds = array<i64: 2>, scalar_prefetch = 0 : i64, scratch_operands = 0 : i64, tpu.core_type = #tpu.core_type<tc>, window_params = [{transform_indices = @transform_0, window_bounds = array<i64: 1, 16, 64>}, {pipeline_mode = #tpu.pipeline_mode<synchronous>, transform_indices = @transform_1, window_bounds = array<i64: 64, 16>}, {pipeline_mode = #tpu.pipeline_mode<synchronous>, transform_indices = @transform_2, window_bounds = array<i64: 16, 64>}, {pipeline_mode = #tpu.pipeline_mode<synchronous>, transform_indices = @transform_3, window_bounds = array<i64: 64, 128>}, {pipeline_mode = #tpu.pipeline_mode<synchronous>, transform_indices = @transform_4, window_bounds = array<i64: 128, 64>}, {pipeline_mode = #tpu.pipeline_mode<synchronous>, transform_indices = @transform_5, window_bounds = array<i64: 80, 64>}, {pipeline_mode = #tpu.pipeline_mode<synchronous>, transform_indices = @transform_6, window_bounds = array<i64: 3, 128>}, {transform_indices = @transform_7, window_bounds = array<i64: 1, 16, 64>}]} {
    %c0 = arith.constant 0 : index
    %c0_0 = arith.constant 0 : index
    %c0_1 = arith.constant 0 : index
    %0 = vector.load %arg1[%c0, %c0_0, %c0_1] : memref<1x16x64xf32, #tpu.memory_space<vmem>>, vector<1x16x64xf32>
    %1 = vector.shape_cast %0 : vector<1x16x64xf32> to vector<16x64xf32>
    %cst = arith.constant 1.562500e-02 : f32
    %2 = vector.broadcast %cst : f32 to vector<64x64xf32>
    %c0_2 = arith.constant 0 : index
    %c0_3 = arith.constant 0 : index
    %3 = vector.load %arg7[%c0_2, %c0_3] : memref<3x128xf32, #tpu.memory_space<vmem>>, vector<1x64xf32>
    %c1 = arith.constant 1 : index
    %c0_4 = arith.constant 0 : index
    %4 = vector.load %arg7[%c1, %c0_4] : memref<3x128xf32, #tpu.memory_space<vmem>>, vector<1x128xf32>
    %c2 = arith.constant 2 : index
    %c0_5 = arith.constant 0 : index
    %5 = vector.load %arg7[%c2, %c0_5] : memref<3x128xf32, #tpu.memory_space<vmem>>, vector<1x64xf32>
    %c0_6 = arith.constant 0 : index
    %c0_7 = arith.constant 0 : index
    %6 = vector.load %arg6[%c0_6, %c0_7] : memref<80x64xf32, #tpu.memory_space<vmem>>, vector<64x64xf32>
    %c64 = arith.constant 64 : index
    %c0_8 = arith.constant 0 : index
    %7 = vector.load %arg6[%c64, %c0_8] : memref<80x64xf32, #tpu.memory_space<vmem>>, vector<16x64xf32>
    %8 = arith.mulf %1, %1 : vector<16x64xf32>
    %9 = tpu.concatenate %1, %8 in 0 : vector<16x64xf32>, vector<16x64xf32> -> vector<32x64xf32>
    %cst_9 = arith.constant dense<0.000000e+00> : vector<32x64xf32>
    %10 = tpu.matmul %9, %2, %cst_9 {dimension_numbers = #tpu.dot_dimension_numbers<[1], [0], [0], [1], [0, 0, 1, 1], [], []>, precision = #tpu.contract_precision<fp32>} : vector<32x64xf32>, vector<64x64xf32>, vector<32x64xf32> -> vector<32x64xf32>
    %11 = vector.extract_strided_slice %10 {offsets = [0, 0], sizes = [16, 64], strides = [1, 1]} : vector<32x64xf32> to vector<16x64xf32>
    %12 = vector.extract_strided_slice %10 {offsets = [16, 0], sizes = [16, 64], strides = [1, 1]} : vector<32x64xf32> to vector<16x64xf32>
    %13 = arith.mulf %11, %11 : vector<16x64xf32>
    %14 = arith.subf %12, %13 : vector<16x64xf32>
    %15 = arith.subf %1, %11 : vector<16x64xf32>
    %cst_10 = arith.constant 9.99999974E-6 : f32
    %16 = vector.broadcast %cst_10 : f32 to vector<16x64xf32>
    %17 = arith.addf %14, %16 : vector<16x64xf32>
    %18 = math.rsqrt %17 : vector<16x64xf32>
    %19 = arith.mulf %15, %18 : vector<16x64xf32>
    %c0_11 = arith.constant 0 : index
    %c0_12 = arith.constant 0 : index
    %20 = vector.load %arg2[%c0_11, %c0_12] : memref<64x16xf32, #tpu.memory_space<vmem>>, vector<64x16xf32>
    %cst_13 = arith.constant dense<0.000000e+00> : vector<64x64xf32>
    %21 = tpu.matmul %20, %19, %cst_13 {dimension_numbers = #tpu.dot_dimension_numbers<[1], [0], [0], [1], [0, 0, 1, 1], [], []>, precision = #tpu.contract_precision<fp32>} : vector<64x16xf32>, vector<16x64xf32>, vector<64x64xf32> -> vector<64x64xf32>
    %22 = vector.broadcast %3 : vector<1x64xf32> to vector<64x64xf32>
    %23 = arith.mulf %21, %22 : vector<64x64xf32>
    %24 = arith.addf %23, %6 : vector<64x64xf32>
    %cst_14 = arith.constant 5.000000e-01 : f32
    %25 = vector.broadcast %cst_14 : f32 to vector<64x64xf32>
    %26 = arith.mulf %25, %24 : vector<64x64xf32>
    %cst_15 = arith.constant 0.707106769 : f32
    %27 = vector.broadcast %cst_15 : f32 to vector<64x64xf32>
    %28 = arith.mulf %24, %27 : vector<64x64xf32>
    %29 = math.erf %28 : vector<64x64xf32>
    %cst_16 = arith.constant 1.000000e+00 : f32
    %30 = vector.broadcast %cst_16 : f32 to vector<64x64xf32>
    %31 = arith.addf %30, %29 : vector<64x64xf32>
    %32 = arith.mulf %26, %31 : vector<64x64xf32>
    %c0_17 = arith.constant 0 : index
    %c0_18 = arith.constant 0 : index
    %33 = vector.load %arg3[%c0_17, %c0_18] : memref<16x64xf32, #tpu.memory_space<vmem>>, vector<16x64xf32>
    %cst_19 = arith.constant dense<0.000000e+00> : vector<16x64xf32>
    %34 = tpu.matmul %33, %32, %cst_19 {dimension_numbers = #tpu.dot_dimension_numbers<[1], [0], [0], [1], [0, 0, 1, 1], [], []>, precision = #tpu.contract_precision<fp32>} : vector<16x64xf32>, vector<64x64xf32>, vector<16x64xf32> -> vector<16x64xf32>
    %35 = arith.addf %34, %7 : vector<16x64xf32>
    %36 = arith.addf %35, %1 : vector<16x64xf32>
    %37 = arith.mulf %36, %36 : vector<16x64xf32>
    %38 = tpu.concatenate %36, %37 in 0 : vector<16x64xf32>, vector<16x64xf32> -> vector<32x64xf32>
    %cst_20 = arith.constant dense<0.000000e+00> : vector<32x64xf32>
    %39 = tpu.matmul %38, %2, %cst_20 {dimension_numbers = #tpu.dot_dimension_numbers<[1], [0], [0], [1], [0, 0, 1, 1], [], []>, precision = #tpu.contract_precision<fp32>} : vector<32x64xf32>, vector<64x64xf32>, vector<32x64xf32> -> vector<32x64xf32>
    %40 = vector.extract_strided_slice %39 {offsets = [0, 0], sizes = [16, 64], strides = [1, 1]} : vector<32x64xf32> to vector<16x64xf32>
    %41 = vector.extract_strided_slice %39 {offsets = [16, 0], sizes = [16, 64], strides = [1, 1]} : vector<32x64xf32> to vector<16x64xf32>
    %42 = arith.mulf %40, %40 : vector<16x64xf32>
    %43 = arith.subf %41, %42 : vector<16x64xf32>
    %44 = arith.subf %36, %40 : vector<16x64xf32>
    %cst_21 = arith.constant 9.99999974E-6 : f32
    %45 = vector.broadcast %cst_21 : f32 to vector<16x64xf32>
    %46 = arith.addf %43, %45 : vector<16x64xf32>
    %47 = math.rsqrt %46 : vector<16x64xf32>
    %48 = arith.mulf %44, %47 : vector<16x64xf32>
    %c0_22 = arith.constant 0 : index
    %c0_23 = arith.constant 0 : index
    %49 = vector.load %arg4[%c0_22, %c0_23] : memref<64x128xf32, #tpu.memory_space<vmem>>, vector<64x128xf32>
    %cst_24 = arith.constant dense<0.000000e+00> : vector<16x128xf32>
    %50 = tpu.matmul %48, %49, %cst_24 {dimension_numbers = #tpu.dot_dimension_numbers<[1], [0], [0], [1], [0, 0, 1, 1], [], []>, precision = #tpu.contract_precision<fp32>} : vector<16x64xf32>, vector<64x128xf32>, vector<16x128xf32> -> vector<16x128xf32>
    %51 = vector.broadcast %4 : vector<1x128xf32> to vector<16x128xf32>
    %52 = arith.addf %50, %51 : vector<16x128xf32>
    %cst_25 = arith.constant 5.000000e-01 : f32
    %53 = vector.broadcast %cst_25 : f32 to vector<16x128xf32>
    %54 = arith.mulf %53, %52 : vector<16x128xf32>
    %cst_26 = arith.constant 0.707106769 : f32
    %55 = vector.broadcast %cst_26 : f32 to vector<16x128xf32>
    %56 = arith.mulf %52, %55 : vector<16x128xf32>
    %57 = math.erf %56 : vector<16x128xf32>
    %cst_27 = arith.constant 1.000000e+00 : f32
    %58 = vector.broadcast %cst_27 : f32 to vector<16x128xf32>
    %59 = arith.addf %58, %57 : vector<16x128xf32>
    %60 = arith.mulf %54, %59 : vector<16x128xf32>
    %c0_28 = arith.constant 0 : index
    %c0_29 = arith.constant 0 : index
    %61 = vector.load %arg5[%c0_28, %c0_29] : memref<128x64xf32, #tpu.memory_space<vmem>>, vector<128x64xf32>
    %cst_30 = arith.constant dense<0.000000e+00> : vector<16x64xf32>
    %62 = tpu.matmul %60, %61, %cst_30 {dimension_numbers = #tpu.dot_dimension_numbers<[1], [0], [0], [1], [0, 0, 1, 1], [], []>, precision = #tpu.contract_precision<fp32>} : vector<16x128xf32>, vector<128x64xf32>, vector<16x64xf32> -> vector<16x64xf32>
    %63 = vector.broadcast %5 : vector<1x64xf32> to vector<16x64xf32>
    %64 = arith.addf %62, %63 : vector<16x64xf32>
    %65 = arith.addf %64, %36 : vector<16x64xf32>
    %c0_31 = arith.constant 0 : index
    %c0_32 = arith.constant 0 : index
    %c0_33 = arith.constant 0 : index
    %66 = vector.load %arg8[%c0_31, %c0_32, %c0_33] : memref<1x16x64xf32, #tpu.memory_space<vmem>>, vector<1x16x64xf32>
    %67 = vector.shape_cast %66 : vector<1x16x64xf32> to vector<16x64xf32>
    %68 = vector.shape_cast %65 : vector<16x64xf32> to vector<1x16x64xf32>
    tpu.vector_store %arg8[%c0_31, %c0_32, %c0_33], %68 {strides = array<i32>} : memref<1x16x64xf32, #tpu.memory_space<vmem>>, vector<1x16x64xf32>,
    return
  }
  func.func @transform_0(%arg0: i32) -> (i32, i32, i32) {
    %c0_i32 = arith.constant 0 : i32
    %c0_i32_0 = arith.constant 0 : i32
    %c0_i32_1 = arith.constant 0 : i32
    return %arg0, %c0_i32, %c0_i32_0 : i32, i32, i32
  }
  func.func @transform_1(%arg0: i32) -> (i32, i32) {
    %c0_i32 = arith.constant 0 : i32
    %c0_i32_0 = arith.constant 0 : i32
    %c0_i32_1 = arith.constant 0 : i32
    return %c0_i32, %c0_i32_0 : i32, i32
  }
  func.func @transform_2(%arg0: i32) -> (i32, i32) {
    %c0_i32 = arith.constant 0 : i32
    %c0_i32_0 = arith.constant 0 : i32
    %c0_i32_1 = arith.constant 0 : i32
    return %c0_i32, %c0_i32_0 : i32, i32
  }
  func.func @transform_3(%arg0: i32) -> (i32, i32) {
    %c0_i32 = arith.constant 0 : i32
    %c0_i32_0 = arith.constant 0 : i32
    %c0_i32_1 = arith.constant 0 : i32
    return %c0_i32, %c0_i32_0 : i32, i32
  }
  func.func @transform_4(%arg0: i32) -> (i32, i32) {
    %c0_i32 = arith.constant 0 : i32
    %c0_i32_0 = arith.constant 0 : i32
    %c0_i32_1 = arith.constant 0 : i32
    return %c0_i32, %c0_i32_0 : i32, i32
  }
  func.func @transform_5(%arg0: i32) -> (i32, i32) {
    %c0_i32 = arith.constant 0 : i32
    %c0_i32_0 = arith.constant 0 : i32
    %c0_i32_1 = arith.constant 0 : i32
    return %c0_i32, %c0_i32_0 : i32, i32
  }
  func.func @transform_6(%arg0: i32) -> (i32, i32) {
    %c0_i32 = arith.constant 0 : i32
    %c0_i32_0 = arith.constant 0 : i32
    %c0_i32_1 = arith.constant 0 : i32
    return %c0_i32, %c0_i32_0 : i32, i32
  }
  func.func @transform_7(%arg0: i32) -> (i32, i32, i32) {
    %c0_i32 = arith.constant 0 : i32
    %c0_i32_0 = arith.constant 0 : i32
    %c0_i32_1 = arith.constant 0 : i32
    return %arg0, %c0_i32, %c0_i32_0 : i32, i32, i32
  }
}

</mosaic_0001>

<llo_original>
// kernel: mlp_forward.1
$region0: #{mlp_forward.1}
  #allocation0 [shape = 'u32[]', space=smem, size = 0x4, offset = 0x4, fixed_abs, tag = 'smem constant byte address 0x4 - core index']
  #allocation1 [shape = 'u32[144,128]{1,0:T(1,128)}', space=vmem, size = 0x12000, scoped, tag = 'internal scratch']
  %s0 = inlined_call_operand.vmem [shape: f32[2,16,64], index: 0, kind: input, shape index: {}]
  %s1 = inlined_call_operand.vmem [shape: f32[64,16], index: 1, kind: input, shape index: {}]
  %s2 = inlined_call_operand.vmem [shape: f32[16,64], index: 2, kind: input, shape index: {}]
  %s3 = inlined_call_operand.vmem [shape: f32[64,128], index: 3, kind: input, shape index: {}]
  %s4 = inlined_call_operand.vmem [shape: f32[128,64], index: 4, kind: input, shape index: {}]
  %s5 = inlined_call_operand.vmem [shape: f32[80,64], index: 5, kind: input, shape index: {}]
  %s6 = inlined_call_operand.vmem [shape: f32[3,128], index: 6, kind: input, shape index: {}]
  %s7 = inlined_call_operand.vmem [shape: f32[2,16,64], index: 7, kind: output, shape index: {}]
  %s8 = sld [smem:[#allocation0]]
  $region61: #{mlp_forward.1} parent=0
    _
  %s10 = ssub.s32 1, %s8
  %s11 = scalar_select 0, %s10, %s8
  loop: start=0, step=1, limit=4
  $region2: #{mlp_forward.1} parent=0 // loop_pre_header
    _
  $region3: #{mlp_forward.1} parent=0 // loop_header
    %s13 = sphi 0, %s17
    %p14 = scmp.ge.s32.totalorder %s13, 4
    %s23 = sphi 0, %s25
    %s26 = sphi 0, %s23
    %s27 = sphi 0, %s26
    %s43 = sphi 0, %s27
    %s47 = sphi 0, %s47
    %s49 = sphi 0, %s47
    %s50 = sphi 0, %s49
    %s64 = sphi 0, %s50
    %s68 = sphi 0, %s68
    %s70 = sphi 0, %s68
    %s71 = sphi 0, %s70
    %s85 = sphi 0, %s71
    %s89 = sphi 0, %s89
    %s91 = sphi 0, %s89
    %s92 = sphi 0, %s91
    %s106 = sphi 0, %s92
    %s110 = sphi 0, %s110
    %s112 = sphi 0, %s110
    %s113 = sphi 0, %s112
    %s127 = sphi 0, %s113
    %s131 = sphi 0, %s131
    %s133 = sphi 0, %s131
    %s134 = sphi 0, %s133
    %s148 = sphi 0, %s134
    %s152 = sphi 0, %s152
    %s154 = sphi 0, %s152
    %s155 = sphi 0, %s154
    %s169 = sphi 0, %s155
    %s175 = sphi 0, %s177
    %s178 = sphi 0, %s175
    %s179 = sphi 0, %s178
    %s195 = sphi 0, %s179
  $region4: #{mlp_forward.1} parent=0 // loop_header_branch
    %16 = sbr.rel (%p14) target = $region8
  $region5: #{mlp_forward.1} parent=0 // loop_body
    %s18 = ssub.s32 %s13, 1
    %s19 = ssub.s32 %s13, 2
    %s20 = sadd.s32 %s13, 1
    %s21 = ssub.s32 %s13, %s20
    %p22 = scmp.eq.s32.totalorder %s21, 0
    %s24 = sadd.s32 %s23, 1
    %s25 = scalar_select %p22, %s23, %s24
    %p28 = pneg %p22
    %p29 = scmp.eq.s32.totalorder %s13, 1
    %p30 = por %p28, %p29
    %p31 = scmp.ne.s32.totalorder %s23, %s26
    %p32 = scmp.eq.s32.totalorder %s13, 0
    %p33 = por %p31, %p32
    %p34 = scmp.ne.s32.totalorder %s23, %s26
    %p35 = scmp.eq.s32.totalorder %s18, 1
    %p36 = por %p34, %p35
    %p37 = scmp.ne.s32.totalorder %s26, %s27
    %p38 = scmp.eq.s32.totalorder %s18, 0
    %p39 = por %p37, %p38
    %p40 = scmp.ne.s32.totalorder %s26, %s27
    %p41 = scmp.eq.s32.totalorder %s19, 1
    %p42 = por %p40, %p41
    %p44 = scmp.ne.s32.totalorder %s27, %s43
    %p45 = scmp.eq.s32.totalorder %s19, 0
    %p46 = por %p44, %p45
    %s48 = sadd.s32 %s47, 1
    %p51 = scmp.eq.s32.totalorder %s13, 1
    %p52 = scmp.ne.s32.totalorder %s47, %s49
    %p53 = scmp.eq.s32.totalorder %s13, 0
    %p54 = por %p52, %p53
    %p55 = scmp.ne.s32.totalorder %s47, %s49
    %p56 = scmp.eq.s32.totalorder %s18, 1
    %p57 = por %p55, %p56
    %p58 = scmp.ne.s32.totalorder %s49, %s50
    %p59 = scmp.eq.s32.totalorder %s18, 0
    %p60 = por %p58, %p59
    %p61 = scmp.ne.s32.totalorder %s49, %s50
    %p62 = scmp.eq.s32.totalorder %s19, 1
    %p63 = por %p61, %p62
    %p65 = scmp.ne.s32.totalorder %s50, %s64
    %p66 = scmp.eq.s32.totalorder %s19, 0
    %p67 = por %p65, %p66
    %s69 = sadd.s32 %s68, 1
    %p72 = scmp.eq.s32.totalorder %s13, 1
    %p73 = scmp.ne.s32.totalorder %s68, %s70
    %p74 = scmp.eq.s32.totalorder %s13, 0
    %p75 = por %p73, %p74
    %p76 = scmp.ne.s32.totalorder %s68, %s70
    %p77 = scmp.eq.s32.totalorder %s18, 1
    %p78 = por %p76, %p77
    %p79 = scmp.ne.s32.totalorder %s70, %s71
    %p80 = scmp.eq.s32.totalorder %s18, 0
    %p81 = por %p79, %p80
    %p82 = scmp.ne.s32.totalorder %s70, %s71
    %p83 = scmp.eq.s32.totalorder %s19, 1
    %p84 = por %p82, %p83
    %p86 = scmp.ne.s32.totalorder %s71, %s85
    %p87 = scmp.eq.s32.totalorder %s19, 0
    %p88 = por %p86, %p87
    %s90 = sadd.s32 %s89, 1
    %p93 = scmp.eq.s32.totalorder %s13, 1
    %p94 = scmp.ne.s32.totalorder %s89, %s91
    %p95 = scmp.eq.s32.totalorder %s13, 0
    %p96 = por %p94, %p95
    %p97 = scmp.ne.s32.totalorder %s89, %s91
    %p98 = scmp.eq.s32.totalorder %s18, 1
    %p99 = por %p97, %p98
    %p100 = scmp.ne.s32.totalorder %s91, %s92
    %p101 = scmp.eq.s32.totalorder %s18, 0
    %p102 = por %p100, %p101
    %p103 = scmp.ne.s32.totalorder %s91, %s92
    %p104 = scmp.eq.s32.totalorder %s19, 1
    %p105 = por %p103, %p104
    %p107 = scmp.ne.s32.totalorder %s92, %s106
    %p108 = scmp.eq.s32.totalorder %s19, 0
    %p109 = por %p107, %p108
    %s111 = sadd.s32 %s110, 1
    %p114 = scmp.eq.s32.totalorder %s13, 1
    %p115 = scmp.ne.s32.totalorder %s110, %s112
    %p116 = scmp.eq.s32.totalorder %s13, 0
    %p117 = por %p115, %p116
    %p118 = scmp.ne.s32.totalorder %s110, %s112
    %p119 = scmp.eq.s32.totalorder %s18, 1
    %p120 = por %p118, %p119
    %p121 = scmp.ne.s32.totalorder %s112, %s113
    %p122 = scmp.eq.s32.totalorder %s18, 0
    %p123 = por %p121, %p122
    %p124 = scmp.ne.s32.totalorder %s112, %s113
    %p125 = scmp.eq.s32.totalorder %s19, 1
    %p126 = por %p124, %p125
    %p128 = scmp.ne.s32.totalorder %s113, %s127
    %p129 = scmp.eq.s32.totalorder %s19, 0
    %p130 = por %p128, %p129
    %s132 = sadd.s32 %s131, 1
    %p135 = scmp.eq.s32.totalorder %s13, 1
    %p136 = scmp.ne.s32.totalorder %s131, %s133
    %p137 = scmp.eq.s32.totalorder %s13, 0
    %p138 = por %p136, %p137
    %p139 = scmp.ne.s32.totalorder %s131, %s133
    %p140 = scmp.eq.s32.totalorder %s18, 1
    %p141 = por %p139, %p140
    %p142 = scmp.ne.s32.totalorder %s133, %s134
    %p143 = scmp.eq.s32.totalorder %s18, 0
    %p144 = por %p142, %p143
    %p145 = scmp.ne.s32.totalorder %s133, %s134
    %p146 = scmp.eq.s32.totalorder %s19, 1
    %p147 = por %p145, %p146
    %p149 = scmp.ne.s32.totalorder %s134, %s148
    %p150 = scmp.eq.s32.totalorder %s19, 0
    %p151 = por %p149, %p150
    %s153 = sadd.s32 %s152, 1
    %p156 = scmp.eq.s32.totalorder %s13, 1
    %p157 = scmp.ne.s32.totalorder %s152, %s154
    %p158 = scmp.eq.s32.totalorder %s13, 0
    %p159 = por %p157, %p158
    %p160 = scmp.ne.s32.totalorder %s152, %s154
    %p161 = scmp.eq.s32.totalorder %s18, 1
    %p162 = por %p160, %p161
    %p163 = scmp.ne.s32.totalorder %s154, %s155
    %p164 = scmp.eq.s32.totalorder %s18, 0
    %p165 = por %p163, %p164
    %p166 = scmp.ne.s32.totalorder %s154, %s155
    %p167 = scmp.eq.s32.totalorder %s19, 1
    %p168 = por %p166, %p167
    %p170 = scmp.ne.s32.totalorder %s155, %s169
    %p171 = scmp.eq.s32.totalorder %s19, 0
    %p172 = por %p170, %p171
    %s173 = ssub.s32 %s13, %s20
    %p174 = scmp.eq.s32.totalorder %s173, 0
    %s176 = sadd.s32 %s175, 1
    %s177 = scalar_select %p174, %s175, %s176
    %p180 = pneg %p174
    %p181 = scmp.eq.s32.totalorder %s13, 1
    %p182 = por %p180, %p181
    %p183 = scmp.ne.s32.totalorder %s175, %s178
    %p184 = scmp.eq.s32.totalorder %s13, 0
    %p185 = por %p183, %p184
    %p186 = scmp.ne.s32.totalorder %s175, %s178
    %p187 = scmp.eq.s32.totalorder %s18, 1
    %p188 = por %p186, %p187
    %p189 = scmp.ne.s32.totalorder %s178, %s179
    %p190 = scmp.eq.s32.totalorder %s18, 0
    %p191 = por %p189, %p190
    %p192 = scmp.ne.s32.totalorder %s178, %s179
    %p193 = scmp.eq.s32.totalorder %s19, 1
    %p194 = por %p192, %p193
    %p196 = scmp.ne.s32.totalorder %s179, %s195
    %p197 = scmp.eq.s32.totalorder %s19, 0
    %p198 = por %p196, %p197
    %p199 = scmp.le.s32.totalorder 1, %s13
    %p200 = scmp.lt.s32.totalorder %s13, 3
    %p201 = pnand %p199, %p200
    %p202 = pneg %p201
    // Predicated region
    $region9: #{mlp_forward.1} parent=5 // pred_check
      _
    $region10: #{mlp_forward.1} parent=5 // pred_check_branch
      %204 = sbr.rel (%p201) target = $region12
    $region11: #{mlp_forward.1} parent=5 // pred_region
      %s205 = ssub.s32 %s13, 1
      // Predicated region
      $region13: #{mlp_forward.1} parent=11 // pred_check
        %p206 = pneg %p60
      $region14: #{mlp_forward.1} parent=11 // pred_check_branch
        %208 = sbr.rel (%p206) target = $region16
      $region15: #{mlp_forward.1} parent=11 // pred_region
        _
      $region16: #{mlp_forward.1} parent=11 // pred_fallthru
        _
      // Predicated region
      $region17: #{mlp_forward.1} parent=11 // pred_check
        %p209 = pneg %p81
      $region18: #{mlp_forward.1} parent=11 // pred_check_branch
        %211 = sbr.rel (%p209) target = $region20
      $region19: #{mlp_forward.1} parent=11 // pred_region
        _
      $region20: #{mlp_forward.1} parent=11 // pred_fallthru
        _
      // Predicated region
      $region21: #{mlp_forward.1} parent=11 // pred_check
        %p212 = pneg %p102
      $region22: #{mlp_forward.1} parent=11 // pred_check_branch
        %214 = sbr.rel (%p212) target = $region24
      $region23: #{mlp_forward.1} parent=11 // pred_region
        _
      $region24: #{mlp_forward.1} parent=11 // pred_fallthru
        _
      // Predicated region
      $region25: #{mlp_forward.1} parent=11 // pred_check
        %p215 = pneg %p123
      $region26: #{mlp_forward.1} parent=11 // pred_check_branch
        %217 = sbr.rel (%p215) target = $region28
      $region27: #{mlp_forward.1} parent=11 // pred_region
        _
      $region28: #{mlp_forward.1} parent=11 // pred_fallthru
        _
      // Predicated region
      $region29: #{mlp_forward.1} parent=11 // pred_check
        %p218 = pneg %p144
      $region30: #{mlp_forward.1} parent=11 // pred_check_branch
        %220 = sbr.rel (%p218) target = $region32
      $region31: #{mlp_forward.1} parent=11 // pred_region
        _
      $region32: #{mlp_forward.1} parent=11 // pred_fallthru
        _
      // Predicated region
      $region33: #{mlp_forward.1} parent=11 // pred_check
        %p221 = pneg %p165
      $region34: #{mlp_forward.1} parent=11 // pred_check_branch
        %223 = sbr.rel (%p221) target = $region36
      $region35: #{mlp_forward.1} parent=11 // pred_region
        _
      $region36: #{mlp_forward.1} parent=11 // pred_fallthru
        _
    $region12: #{mlp_forward.1} parent=5 // pred_fallthru
      _
    %p224 = scmp.lt.s32.totalorder %s13, 2
    // Predicated region
    $region37: #{mlp_forward.1} parent=5 // pred_check
      %p225 = pneg %p224
    $region38: #{mlp_forward.1} parent=5 // pred_check_branch
      %227 = sbr.rel (%p225) target = $region40
    $region39: #{mlp_forward.1} parent=5 // pred_region
      // Predicated region
      $region41: #{mlp_forward.1} parent=39 // pred_check
        %p228 = pneg %p33
      $region42: #{mlp_forward.1} parent=39 // pred_check_branch
        %230 = sbr.rel (%p228) target = $region44
      $region43: #{mlp_forward.1} parent=39 // pred_region
        %p231 = scmp.lt.s32.totalorder %s13, 1
        %s232 = scalar_select %p231, %s13, 1
        %s233 = smul.addr %s232, 2
        %s234 = smul.addr %s233, 8
        %s235 = scalar_lea.vmem %s0, %s234
      $region44: #{mlp_forward.1} parent=39 // pred_fallthru
        _
    $region40: #{mlp_forward.1} parent=5 // pred_fallthru
      _
    %p236 = scmp.le.s32.totalorder 1, %s13
    %p237 = scmp.lt.s32.totalorder %s13, 3
    %p238 = pnand %p236, %p237
    %p239 = pneg %p238
    // Predicated region
    $region45: #{mlp_forward.1} parent=5 // pred_check
      _
    $region46: #{mlp_forward.1} parent=5 // pred_check_branch
      %241 = sbr.rel (%p238) target = $region48
    $region47: #{mlp_forward.1} parent=5 // pred_region
      %s242 = ssub.s32 %s13, 1
      %p243 = scmp.lt.s32.totalorder %s18, 1
      %s244 = scalar_select %p243, %s18, 1
      %s245 = smul.addr %s244, 2
      %s246 = smul.addr %s245, 8
      %s247 = scalar_lea.vmem %s0, %s246
      %p248 = pneg %p39
      %p249 = pneg %p36
      %p250 = pneg %p60
      %p251 = pneg %p57
      %p252 = pneg %p81
      %p253 = pneg %p78
      %p254 = pneg %p102
      %p255 = pneg %p99
      %p256 = pneg %p123
      %p257 = pneg %p120
      %p258 = pneg %p144
      %p259 = pneg %p141
      %p260 = pneg %p165
      %p261 = pneg %p162
      %p262 = pneg %p191
      %p263 = pneg %p188
      %p264 = scmp.lt.s32.totalorder %s18, 1
      %s265 = scalar_select %p264, %s18, 1
      %s266 = smul.addr %s265, 2
      %s267 = smul.addr %s266, 8
      %s268 = scalar_lea.vmem %s7, %s267
      %p269 = scmp.lt.s32.totalorder %s18, 1
      %s270 = scalar_select %p269, %s18, 1
      %s271 = smul.addr %s270, 2
      %s272 = smul.addr %s271, 8
      %s273 = scalar_lea.vmem %s0, %s272
      %p274 = scmp.lt.s32.totalorder %s18, 1
      %s275 = scalar_select %p274, %s18, 1
      %s276 = smul.addr %s275, 2
      %s277 = smul.addr %s276, 8
      %s278 = scalar_lea.vmem %s7, %s277
      %v279 = vld [vmem:[%s273] sm:$0xff]
      %v280 = vld [vmem:[%s273 + $0x8] sm:$0xff]
      %v281 = vld [vmem:[%s6] sm:$0x1]
      %v282 = vld [vmem:[%s6 + $0x1] sm:$0x1]
      %v283 = vld [vmem:[%s6 + $0x2] sm:$0x1]
      %v284 = vld [vmem:[%s5] sm:$0xff]
      %v285 = vld [vmem:[%s5 + $0x8] sm:$0xff]
      %v286 = vld [vmem:[%s5 + $0x10] sm:$0xff]
      %v287 = vld [vmem:[%s5 + $0x18] sm:$0xff]
      %v288 = vld [vmem:[%s5 + $0x20] sm:$0xff]
      %v289 = vld [vmem:[%s5 + $0x28] sm:$0xff]
      %v290 = vld [vmem:[%s5 + $0x30] sm:$0xff]
      %v291 = vld [vmem:[%s5 + $0x38] sm:$0xff]
      %v292 = vld [vmem:[%s5 + $0x40] sm:$0xff]
      %v293 = vld [vmem:[%s5 + $0x48] sm:$0xff]
      %v294 = vmul.f32 %v279, %v279
      %v295 = vmul.f32 %v280, %v280
      %vm296 = vcmask 523264
      %v298 = vsel %vm296, %v279, 0
      %v301 = vsel %vm296, %v280, 0
      %v304 = vsel %vm296, %v294, 0
      %v307 = vsel %vm296, %v295, 0
      %309 = vmatprep.subr.mxu0 0.0
      %310 = vmatpush1.msra.mxu0 0.015625
      %311 = vmatprep.subr.mxu0 0.0
      %312 = vmatpush1.msra.mxu0 0.015625
      %313 = vmatprep.subr.mxu0 0.0
      %314 = vmatpush1.msra.mxu0 0.015625
      %315 = vmatprep.subr.mxu0 0.0
      %316 = vmatpush1.msra.mxu0 0.015625
      %317 = vmatprep.subr.mxu0 0.0
      %318 = vmatpush1.msra.mxu0 0.015625
      %319 = vmatprep.subr.mxu0 0.0
      %320 = vmatpush1.msra.mxu0 0.015625
      %321 = vmatprep.subr.mxu0 0.0
      %322 = vmatpush1.msra.mxu0 0.015625
      %323 = vmatprep.subr.mxu0 0.0
      %324 = vmatpush1.msra.mxu0 0.015625
      %325 = vmatprep.subr.mxu0 0.0
      %326 = vmatpush1.msra.mxu0 0.0
      %327 = vmatprep.subr.mxu0 0.0
      %328 = vmatpush1.msra.mxu0 0.0
      %329 = vmatprep.subr.mxu0 0.0
      %330 = vmatpush1.msra.mxu0 0.0
      %331 = vmatprep.subr.mxu0 0.0
      %332 = vmatpush1.msra.mxu0 0.0
      %333 = vmatprep.subr.mxu0 0.0
      %334 = vmatpush1.msra.mxu0 0.0
      %335 = vmatprep.subr.mxu0 0.0
      %336 = vmatpush1.msra.mxu0 0.0
      %337 = vmatprep.subr.mxu0 0.0
      %338 = vmatpush1.msra.mxu0 0.0
      %339 = vmatprep.subr.mxu0 0.0
      %340 = vmatpush1.msra.mxu0 0.0
      %341 = vmatprep.subr.mxu0 0.0
      %342 = vmatpush1.msra.mxu0 0.0
      %343 = vmatprep.subr.mxu0 0.0
      %344 = vmatpush1.msra.mxu0 0.0
      %345 = vmatprep.subr.mxu0 0.0
      %346 = vmatpush1.msra.mxu0 0.0
      %347 = vmatprep.subr.mxu0 0.0
      %348 = vmatpush1.msra.mxu0 0.0
      %349 = vmatprep.subr.mxu0 0.0
      %350 = vmatpush1.msra.mxu0 0.0
      %351 = vmatprep.subr.mxu0 0.0
      %352 = vmatpush1.msra.mxu0 0.0
      %353 = vmatprep.subr.mxu0 0.0
      %354 = vmatpush1.msra.mxu0 0.0
      %355 = vmatprep.subr.mxu0 0.0
      %356 = vmatpush1.msra.mxu0 0.0
      %357 = vmatprep.subr.mxu0 0.0
      %358 = vmatpush1.msra.mxu0 0.0
      %359 = vmatprep.subr.mxu0 0.0
      %360 = vmatpush1.msra.mxu0 0.0
      %361 = vmatprep.subr.mxu0 0.0
      %362 = vmatpush1.msra.mxu0 0.0
      %363 = vmatprep.subr.mxu0 0.0
      %364 = vmatpush1.msra.mxu0 0.0
      %365 = vmatprep.subr.mxu0 0.0
      %366 = vmatpush1.msra.mxu0 0.0
      %367 = vmatprep.subr.mxu0 0.0
      %368 = vmatpush1.msra.mxu0 0.0
      %369 = vmatprep.subr.mxu0 0.0
      %370 = vmatpush1.msra.mxu0 0.0
      %371 = vmatprep.subr.mxu0 0.0
      %372 = vmatpush1.msra.mxu0 0.0
      %373 = vmatprep.mubr.f32.mxu0 0.0
      %v374 = vand.u32 %v298, 4294901760
      %v375 = vsub.f32 %v298, %v374
      %v376 = vand.u32 %v375, 4294901760
      %v377 = vsub.f32 %v375, %v376
      %v378 = vand.u32 %v377, 4294901760
      %379 = vmatmul.mubr.f32.gmra.mrb[0].mxu0 %v378
      %v380 = vpop.f32.mrb[0].mxu0
      %v381 = vadd.f32 0.0, %v380
      %v382 = vpop.f32.mrb[0].mxu0
      %383 = vmatprep.mubr.f32.mxu0 0.0
      %v384 = vand.u32 %v301, 4294901760
      %v385 = vsub.f32 %v301, %v384
      %v386 = vand.u32 %v385, 4294901760
      %v387 = vsub.f32 %v385, %v386
      %v388 = vand.u32 %v387, 4294901760
      %389 = vmatmul.mubr.f32.gmra.mrb[0].mxu0 %v388
      %v390 = vpop.f32.mrb[0].mxu0
      %v391 = vadd.f32 0.0, %v390
      %v392 = vpop.f32.mrb[0].mxu0
      %393 = vmatprep.mubr.f32.mxu0 0.0
      %v394 = vand.u32 %v304, 4294901760
      %v395 = vsub.f32 %v304, %v394
      %v396 = vand.u32 %v395, 4294901760
      %v397 = vsub.f32 %v395, %v396
      %v398 = vand.u32 %v397, 4294901760
      %399 = vmatmul.mubr.f32.gmra.mrb[0].mxu0 %v398
      %v400 = vpop.f32.mrb[0].mxu0
      %v401 = vadd.f32 0.0, %v400
      %v402 = vpop.f32.mrb[0].mxu0
      %403 = vmatprep.mubr.f32.mxu0 0.0
      %v404 = vand.u32 %v307, 4294901760
      %v405 = vsub.f32 %v307, %v404
      %v406 = vand.u32 %v405, 4294901760
      %v407 = vsub.f32 %v405, %v406
      %v408 = vand.u32 %v407, 4294901760
      %409 = vmatmul.mubr.f32.gmra.mrb[0].mxu0 %v408
      %v410 = vpop.f32.mrb[0].mxu0
      %v411 = vadd.f32 0.0, %v410
      %v412 = vpop.f32.mrb[0].mxu0
      %413 = vdwg.mxu0
      %414 = vmatprep.subr.mxu0 0.0
      %415 = vmatpush1.msra.mxu0 0.0
      %416 = vmatprep.subr.mxu0 0.0
      %417 = vmatpush1.msra.mxu0 0.0
      %418 = vmatprep.subr.mxu0 0.0
      %419 = vmatpush1.msra.mxu0 0.0
      %420 = vmatprep.subr.mxu0 0.0
      %421 = vmatpush1.msra.mxu0 0.0
      %422 = vmatprep.subr.mxu0 0.0
      %423 = vmatpush1.msra.mxu0 0.0
      %424 = vmatprep.subr.mxu0 0.0
      %425 = vmatpush1.msra.mxu0 0.0
      %426 = vmatprep.subr.mxu0 0.0
      %427 = vmatpush1.msra.mxu0 0.0
      %428 = vmatprep.subr.mxu0 0.0
      %429 = vmatpush1.msra.mxu0 0.0
      %430 = vmatprep.subr.mxu0 0.0
      %431 = vmatpush1.msra.mxu0 0.0
      %432 = vmatprep.subr.mxu0 0.0
      %433 = vmatpush1.msra.mxu0 0.0
      %434 = vmatprep.subr.mxu0 0.0
      %435 = vmatpush1.msra.mxu0 0.0
      %436 = vmatprep.subr.mxu0 0.0
      %437 = vmatpush1.msra.mxu0 0.0
      %438 = vmatprep.subr.mxu0 0.0
      %439 = vmatpush1.msra.mxu0 0.0
      %440 = vmatprep.subr.mxu0 0.0
      %441 = vmatpush1.msra.mxu0 0.0
      %442 = vmatprep.subr.mxu0 0.0
      %443 = vmatpush1.msra.mxu0 0.0
      %444 = vmatprep.subr.mxu0 0.0
      %445 = vmatpush1.msra.mxu0 0.0
      %446 = vmatprep.subr.mxu0 0.0
      %447 = vmatpush1.msra.mxu0 0.0
      %448 = vmatprep.subr.mxu0 0.0
      %449 = vmatpush1.msra.mxu0 0.0
      %450 = vmatprep.subr.mxu0 0.0
      %451 = vmatpush1.msra.mxu0 0.0
      %452 = vmatprep.subr.mxu0 0.0
      %453 = vmatpush1.msra.mxu0 0.0
      %454 = vmatprep.subr.mxu0 0.0
      %455 = vmatpush1.msra.mxu0 0.0
      %456 = vmatprep.subr.mxu0 0.0
      %457 = vmatpush1.msra.mxu0 0.0
      %458 = vmatprep.subr.mxu0 0.0
      %459 = vmatpush1.msra.mxu0 0.0
      %460 = vmatprep.subr.mxu0 0.0
      %461 = vmatpush1.msra.mxu0 0.0
      %462 = vmatprep.subr.mxu0 0.0
      %463 = vmatpush1.msra.mxu0 0.0
      %464 = vmatprep.subr.mxu0 0.0
      %465 = vmatpush1.msra.mxu0 0.0
      %466 = vmatprep.subr.mxu0 0.0
      %467 = vmatpush1.msra.mxu0 0.0
      %468 = vmatprep.subr.mxu0 0.0
      %469 = vmatpush1.msra.mxu0 0.0
      %470 = vmatprep.subr.mxu0 0.0
      %471 = vmatpush1.msra.mxu0 0.0
      %472 = vmatprep.subr.mxu0 0.0
      %473 = vmatpush1.msra.mxu0 0.0
      %474 = vmatprep.subr.mxu0 0.0
      %475 = vmatpush1.msra.mxu0 0.0
      %476 = vmatprep.subr.mxu0 0.0
      %477 = vmatpush1.msra.mxu0 0.0
      %478 = vmatprep.mubr.f32.mxu0 0.0
      %v479 = vand.u32 %v298, 4294901760
      %480 = vmatmul.mubr.f32.gmra.mrb[0].mxu0 %v479
      %v481 = vpop.f32.mrb[0].mxu0
      %v482 = vadd.f32 %v381, %v481
      %v483 = vpop.f32.mrb[0].mxu0
      %484 = vmatprep.mubr.f32.mxu0 0.0
      %v485 = vand.u32 %v301, 4294901760
      %486 = vmatmul.mubr.f32.gmra.mrb[0].mxu0 %v485
      %v487 = vpop.f32.mrb[0].mxu0
      %v488 = vadd.f32 %v391, %v487
      %v489 = vpop.f32.mrb[0].mxu0
      %490 = vmatprep.mubr.f32.mxu0 0.0
      %v491 = vand.u32 %v304, 4294901760
      %492 = vmatmul.mubr.f32.gmra.mrb[0].mxu0 %v491
      %v493 = vpop.f32.mrb[0].mxu0
      %v494 = vadd.f32 %v401, %v493
      %v495 = vpop.f32.mrb[0].mxu0
      %496 = vmatprep.mubr.f32.mxu0 0.0
      %v497 = vand.u32 %v307, 4294901760
      %498 = vmatmul.mubr.f32.gmra.mrb[0].mxu0 %v497
      %v499 = vpop.f32.mrb[0].mxu0
      %v500 = vadd.f32 %v411, %v499
      %v501 = vpop.f32.mrb[0].mxu0
      %502 = vdwg.mxu0
      %503 = vmatprep.subr.mxu0 0.0
      %504 = vmatpush1.msra.mxu0 0.0
      %505 = vmatprep.subr.mxu0 0.0
      %506 = vmatpush1.msra.mxu0 0.0
      %507 = vmatprep.subr.mxu0 0.0
      %508 = vmatpush1.msra.mxu0 0.0
      %509 = vmatprep.subr.mxu0 0.0
      %510 = vmatpush1.msra.mxu0 0.0
      %511 = vmatprep.subr.mxu0 0.0
      %512 = vmatpush1.msra.mxu0 0.0
      %513 = vmatprep.subr.mxu0 0.0
      %514 = vmatpush1.msra.mxu0 0.0
      %515 = vmatprep.subr.mxu0 0.0
      %516 = vmatpush1.msra.mxu0 0.0
      %517 = vmatprep.subr.mxu0 0.0
      %518 = vmatpush1.msra.mxu0 0.0
      %519 = vmatprep.subr.mxu0 0.0
      %520 = vmatpush1.msra.mxu0 0.0
      %521 = vmatprep.subr.mxu0 0.0
      %522 = vmatpush1.msra.mxu0 0.0
      %523 = vmatprep.subr.mxu0 0.0
      %524 = vmatpush1.msra.mxu0 0.0
      %525 = vmatprep.subr.mxu0 0.0
      %526 = vmatpush1.msra.mxu0 0.0
      %527 = vmatprep.subr.mxu0 0.0
      %528 = vmatpush1.msra.mxu0 0.0
      %529 = vmatprep.subr.mxu0 0.0
      %530 = vmatpush1.msra.mxu0 0.0
      %531 = vmatprep.subr.mxu0 0.0
      %532 = vmatpush1.msra.mxu0 0.0
      %533 = vmatprep.subr.mxu0 0.0
      %534 = vmatpush1.msra.mxu0 0.0
      %535 = vmatprep.subr.mxu0 0.0
      %536 = vmatpush1.msra.mxu0 0.0
      %537 = vmatprep.subr.mxu0 0.0
      %538 = vmatpush1.msra.mxu0 0.0
      %539 = vmatprep.subr.mxu0 0.0
      %540 = vmatpush1.msra.mxu0 0.0
      %541 = vmatprep.subr.mxu0 0.0
      %542 = vmatpush1.msra.mxu0 0.0
      %543 = vmatprep.subr.mxu0 0.0
      %544 = vmatpush1.msra.mxu0 0.0
      %545 = vmatprep.subr.mxu0 0.0
      %546 = vmatpush1.msra.mxu0 0.0
      %547 = vmatprep.subr.mxu0 0.0
      %548 = vmatpush1.msra.mxu0 0.0
      %549 = vmatprep.subr.mxu0 0.0
      %550 = vmatpush1.msra.mxu0 0.0
      %551 = vmatprep.subr.mxu0 0.0
      %552 = vmatpush1.msra.mxu0 0.0
      %553 = vmatprep.subr.mxu0 0.0
      %554 = vmatpush1.msra.mxu0 0.0
      %555 = vmatprep.subr.mxu0 0.0
      %556 = vmatpush1.msra.mxu0 0.0
      %557 = vmatprep.subr.mxu0 0.0
      %558 = vmatpush1.msra.mxu0 0.0
      %559 = vmatprep.subr.mxu0 0.0
      %560 = vmatpush1.msra.mxu0 0.0
      %561 = vmatprep.subr.mxu0 0.0
      %562 = vmatpush1.msra.mxu0 0.0
      %563 = vmatprep.subr.mxu0 0.0
      %564 = vmatpush1.msra.mxu0 0.0
      %565 = vmatprep.subr.mxu0 0.0
      %566 = vmatpush1.msra.mxu0 0.0
      %567 = vmatprep.mubr.f32.mxu0 0.0
      %v568 = vand.u32 %v298, 4294901760
      %v569 = vsub.f32 %v298, %v568
      %570 = vmatmul.mubr.f32.gmra.mrb[0].mxu0 %v569
      %v571 = vpop.f32.mrb[0].mxu0
      %v572 = vadd.f32 %v482, %v571
      %v573 = vpop.f32.mrb[0].mxu0
      %574 = vmatprep.mubr.f32.mxu0 0.0
      %v575 = vand.u32 %v301, 4294901760
      %v576 = vsub.f32 %v301, %v575
      %577 = vmatmul.mubr.f32.gmra.mrb[0].mxu0 %v576
      %v578 = vpop.f32.mrb[0].mxu0
      %v579 = vadd.f32 %v488, %v578
      %v580 = vpop.f32.mrb[0].mxu0
      %581 = vmatprep.mubr.f32.mxu0 0.0
      %v582 = vand.u32 %v304, 4294901760
      %v583 = vsub.f32 %v304, %v582
      %584 = vmatmul.mubr.f32.gmra.mrb[0].mxu0 %v583
      %v585 = vpop.f32.mrb[0].mxu0
      %v586 = vadd.f32 %v494, %v585
      %v587 = vpop.f32.mrb[0].mxu0
      %588 = vmatprep.mubr.f32.mxu0 0.0
      %v589 = vand.u32 %v307, 4294901760
      %v590 = vsub.f32 %v307, %v589
      %591 = vmatmul.mubr.f32.gmra.mrb[0].mxu0 %v590
      %v592 = vpop.f32.mrb[0].mxu0
      %v593 = vadd.f32 %v500, %v592
      %v594 = vpop.f32.mrb[0].mxu0
      %595 = vdwg.mxu0
      %596 = vmatprep.subr.mxu0 0.0
      %597 = vmatpush1.msra.mxu0 0.015625
      %598 = vmatprep.subr.mxu0 0.0
      %599 = vmatpush1.msra.mxu0 0.015625
      %600 = vmatprep.subr.mxu0 0.0
      %601 = vmatpush1.msra.mxu0 0.015625
      %602 = vmatprep.subr.mxu0 0.0
      %603 = vmatpush1.msra.mxu0 0.015625
      %604 = vmatprep.subr.mxu0 0.0
      %605 = vmatpush1.msra.mxu0 0.015625
      %606 = vmatprep.subr.mxu0 0.0
      %607 = vmatpush1.msra.mxu0 0.015625
      %608 = vmatprep.subr.mxu0 0.0
      %609 = vmatpush1.msra.mxu0 0.015625
      %610 = vmatprep.subr.mxu0 0.0
      %611 = vmatpush1.msra.mxu0 0.015625
      %612 = vmatprep.subr.mxu0 0.0
      %613 = vmatpush1.msra.mxu0 0.0
      %614 = vmatprep.subr.mxu0 0.0
      %615 = vmatpush1.msra.mxu0 0.0
      %616 = vmatprep.subr.mxu0 0.0
      %617 = vmatpush1.msra.mxu0 0.0
      %618 = vmatprep.subr.mxu0 0.0
      %619 = vmatpush1.msra.mxu0 0.0
      %620 = vmatprep.subr.mxu0 0.0
      %621 = vmatpush1.msra.mxu0 0.0
      %622 = vmatprep.subr.mxu0 0.0
      %623 = vmatpush1.msra.mxu0 0.0
      %624 = vmatprep.subr.mxu0 0.0
      %625 = vmatpush1.msra.mxu0 0.0
      %626 = vmatprep.subr.mxu0 0.0
      %627 = vmatpush1.msra.mxu0 0.0
      %628 = vmatprep.subr.mxu0 0.0
      %629 = vmatpush1.msra.mxu0 0.0
      %630 = vmatprep.subr.mxu0 0.0
      %631 = vmatpush1.msra.mxu0 0.0
      %632 = vmatprep.subr.mxu0 0.0
      %633 = vmatpush1.msra.mxu0 0.0
      %634 = vmatprep.subr.mxu0 0.0
      %635 = vmatpush1.msra.mxu0 0.0
      %636 = vmatprep.subr.mxu0 0.0
      %637 = vmatpush1.msra.mxu0 0.0
      %638 = vmatprep.subr.mxu0 0.0
      %639 = vmatpush1.msra.mxu0 0.0
      %640 = vmatprep.subr.mxu0 0.0
      %641 = vmatpush1.msra.mxu0 0.0
      %642 = vmatprep.subr.mxu0 0.0
      %643 = vmatpush1.msra.mxu0 0.0
      %644 = vmatprep.subr.mxu0 0.0
      %645 = vmatpush1.msra.mxu0 0.0
      %646 = vmatprep.subr.mxu0 0.0
      %647 = vmatpush1.msra.mxu0 0.0
      %648 = vmatprep.subr.mxu0 0.0
      %649 = vmatpush1.msra.mxu0 0.0
      %650 = vmatprep.subr.mxu0 0.0
      %651 = vmatpush1.msra.mxu0 0.0
      %652 = vmatprep.subr.mxu0 0.0
      %653 = vmatpush1.msra.mxu0 0.0
      %654 = vmatprep.subr.mxu0 0.0
      %655 = vmatpush1.msra.mxu0 0.0
      %656 = vmatprep.subr.mxu0 0.0
      %657 = vmatpush1.msra.mxu0 0.0
      %658 = vmatprep.subr.mxu0 0.0
      %659 = vmatpush1.msra.mxu0 0.0
      %660 = vmatprep.mubr.f32.mxu0 0.0
      %v661 = vand.u32 %v298, 4294901760
      %v662 = vsub.f32 %v298, %v661
      %v663 = vand.u32 %v662, 4294901760
      %664 = vmatmul.mubr.f32.gmra.mrb[0].mxu0 %v663
      %v665 = vpop.f32.mrb[0].mxu0
      %v666 = vadd.f32 %v572, %v665
      %v667 = vpop.f32.mrb[0].mxu0
      %668 = vmatprep.mubr.f32.mxu0 0.0
      %v669 = vand.u32 %v301, 4294901760
      %v670 = vsub.f32 %v301, %v669
      %v671 = vand.u32 %v670, 4294901760
      %672 = vmatmul.mubr.f32.gmra.mrb[0].mxu0 %v671
      %v673 = vpop.f32.mrb[0].mxu0
      %v674 = vadd.f32 %v579, %v673
      %v675 = vpop.f32.mrb[0].mxu0
      %676 = vmatprep.mubr.f32.mxu0 0.0
      %v677 = vand.u32 %v304, 4294901760
      %v678 = vsub.f32 %v304, %v677
      %v679 = vand.u32 %v678, 4294901760
      %680 = vmatmul.mubr.f32.gmra.mrb[0].mxu0 %v679
      %v681 = vpop.f32.mrb[0].mxu0
      %v682 = vadd.f32 %v586, %v681
      %v683 = vpop.f32.mrb[0].mxu0
      %684 = vmatprep.mubr.f32.mxu0 0.0
      %v685 = vand.u32 %v307, 4294901760
      %v686 = vsub.f32 %v307, %v685
      %v687 = vand.u32 %v686, 4294901760
      %688 = vmatmul.mubr.f32.gmra.mrb[0].mxu0 %v687
      %v689 = vpop.f32.mrb[0].mxu0
      %v690 = vadd.f32 %v593, %v689
      %v691 = vpop.f32.mrb[0].mxu0
      %692 = vdwg.mxu0
      %693 = vmatprep.subr.mxu0 0.0
      %694 = vmatpush1.msra.mxu0 0.0
      %695 = vmatprep.subr.mxu0 0.0
      %696 = vmatpush1.msra.mxu0 0.0
      %697 = vmatprep.subr.mxu0 0.0
      %698 = vmatpush1.msra.mxu0 0.0
      %699 = vmatprep.subr.mxu0 0.0
      %700 = vmatpush1.msra.mxu0 0.0
      %701 = vmatprep.subr.mxu0 0.0
      %702 = vmatpush1.msra.mxu0 0.0
      %703 = vmatprep.subr.mxu0 0.0
      %704 = vmatpush1.msra.mxu0 0.0
      %705 = vmatprep.subr.mxu0 0.0
      %706 = vmatpush1.msra.mxu0 0.0
      %707 = vmatprep.subr.mxu0 0.0
      %708 = vmatpush1.msra.mxu0 0.0
      %709 = vmatprep.subr.mxu0 0.0
      %710 = vmatpush1.msra.mxu0 0.0
      %711 = vmatprep.subr.mxu0 0.0
      %712 = vmatpush1.msra.mxu0 0.0
      %713 = vmatprep.subr.mxu0 0.0
      %714 = vmatpush1.msra.mxu0 0.0
      %715 = vmatprep.subr.mxu0 0.0
      %716 = vmatpush1.msra.mxu0 0.0
      %717 = vmatprep.subr.mxu0 0.0
      %718 = vmatpush1.msra.mxu0 0.0
      %719 = vmatprep.subr.mxu0 0.0
      %720 = vmatpush1.msra.mxu0 0.0
      %721 = vmatprep.subr.mxu0 0.0
      %722 = vmatpush1.msra.mxu0 0.0
      %723 = vmatprep.subr.mxu0 0.0
      %724 = vmatpush1.msra.mxu0 0.0
      %725 = vmatprep.subr.mxu0 0.0
      %726 = vmatpush1.msra.mxu0 0.0
      %727 = vmatprep.subr.mxu0 0.0
      %728 = vmatpush1.msra.mxu0 0.0
      %729 = vmatprep.subr.mxu0 0.0
      %730 = vmatpush1.msra.mxu0 0.0
      %731 = vmatprep.subr.mxu0 0.0
      %732 = vmatpush1.msra.mxu0 0.0
      %733 = vmatprep.subr.mxu0 0.0
      %734 = vmatpush1.msra.mxu0 0.0
      %735 = vmatprep.subr.mxu0 0.0
      %736 = vmatpush1.msra.mxu0 0.0
      %737 = vmatprep.subr.mxu0 0.0
      %738 = vmatpush1.msra.mxu0 0.0
      %739 = vmatprep.subr.mxu0 0.0
      %740 = vmatpush1.msra.mxu0 0.0
      %741 = vmatprep.subr.mxu0 0.0
      %742 = vmatpush1.msra.mxu0 0.0
      %743 = vmatprep.subr.mxu0 0.0
      %744 = vmatpush1.msra.mxu0 0.0
      %745 = vmatprep.subr.mxu0 0.0
      %746 = vmatpush1.msra.mxu0 0.0
      %747 = vmatprep.subr.mxu0 0.0
      %748 = vmatpush1.msra.mxu0 0.0
      %749 = vmatprep.subr.mxu0 0.0
      %750 = vmatpush1.msra.mxu0 0.0
      %751 = vmatprep.subr.mxu0 0.0
      %752 = vmatpush1.msra.mxu0 0.0
      %753 = vmatprep.subr.mxu0 0.0
      %754 = vmatpush1.msra.mxu0 0.0
      %755 = vmatprep.subr.mxu0 0.0
      %756 = vmatpush1.msra.mxu0 0.0
      %757 = vmatprep.mubr.f32.mxu0 0.0
      %v758 = vand.u32 %v298, 4294901760
      %759 = vmatmul.mubr.f32.gmra.mrb[0].mxu0 %v758
      %v760 = vpop.f32.mrb[0].mxu0
      %v761 = vadd.f32 %v666, %v760
      %v762 = vpop.f32.mrb[0].mxu0
      %763 = vmatprep.mubr.f32.mxu0 0.0
      %v764 = vand.u32 %v301, 4294901760
      %765 = vmatmul.mubr.f32.gmra.mrb[0].mxu0 %v764
      %v766 = vpop.f32.mrb[0].mxu0
      %v767 = vadd.f32 %v674, %v766
      %v768 = vpop.f32.mrb[0].mxu0
      %769 = vmatprep.mubr.f32.mxu0 0.0
      %v770 = vand.u32 %v304, 4294901760
      %771 = vmatmul.mubr.f32.gmra.mrb[0].mxu0 %v770
      %v772 = vpop.f32.mrb[0].mxu0
      %v773 = vadd.f32 %v682, %v772
      %v774 = vpop.f32.mrb[0].mxu0
      %775 = vmatprep.mubr.f32.mxu0 0.0
      %v776 = vand.u32 %v307, 4294901760
      %777 = vmatmul.mubr.f32.gmra.mrb[0].mxu0 %v776
      %v778 = vpop.f32.mrb[0].mxu0
      %v779 = vadd.f32 %v690, %v778
      %v780 = vpop.f32.mrb[0].mxu0
      %781 = vdwg.mxu0
      %782 = vmatprep.subr.mxu0 0.0
      %783 = vmatpush1.msra.mxu0 0.015625
      %784 = vmatprep.subr.mxu0 0.0
      %785 = vmatpush1.msra.mxu0 0.015625
      %786 = vmatprep.subr.mxu0 0.0
      %787 = vmatpush1.msra.mxu0 0.015625
      %788 = vmatprep.subr.mxu0 0.0
      %789 = vmatpush1.msra.mxu0 0.015625
      %790 = vmatprep.subr.mxu0 0.0
      %791 = vmatpush1.msra.mxu0 0.015625
      %792 = vmatprep.subr.mxu0 0.0
      %793 = vmatpush1.msra.mxu0 0.015625
      %794 = vmatprep.subr.mxu0 0.0
      %795 = vmatpush1.msra.mxu0 0.015625
      %796 = vmatprep.subr.mxu0 0.0
      %797 = vmatpush1.msra.mxu0 0.015625
      %798 = vmatprep.subr.mxu0 0.0
      %799 = vmatpush1.msra.mxu0 0.0
      %800 = vmatprep.subr.mxu0 0.0
      %801 = vmatpush1.msra.mxu0 0.0
      %802 = vmatprep.subr.mxu0 0.0
      %803 = vmatpush1.msra.mxu0 0.0
      %804 = vmatprep.subr.mxu0 0.0
      %805 = vmatpush1.msra.mxu0 0.0
      %806 = vmatprep.subr.mxu0 0.0
      %807 = vmatpush1.msra.mxu0 0.0
      %808 = vmatprep.subr.mxu0 0.0
      %809 = vmatpush1.msra.mxu0 0.0
      %810 = vmatprep.subr.mxu0 0.0
      %811 = vmatpush1.msra.mxu0 0.0
      %812 = vmatprep.subr.mxu0 0.0
      %813 = vmatpush1.msra.mxu0 0.0
      %814 = vmatprep.subr.mxu0 0.0
      %815 = vmatpush1.msra.mxu0 0.0
      %816 = vmatprep.subr.mxu0 0.0
      %817 = vmatpush1.msra.mxu0 0.0
      %818 = vmatprep.subr.mxu0 0.0
      %819 = vmatpush1.msra.mxu0 0.0
      %820 = vmatprep.subr.mxu0 0.0
      %821 = vmatpush1.msra.mxu0 0.0
      %822 = vmatprep.subr.mxu0 0.0
      %823 = vmatpush1.msra.mxu0 0.0
      %824 = vmatprep.subr.mxu0 0.0
      %825 = vmatpush1.msra.mxu0 0.0
      %826 = vmatprep.subr.mxu0 0.0
      %827 = vmatpush1.msra.mxu0 0.0
      %828 = vmatprep.subr.mxu0 0.0
      %829 = vmatpush1.msra.mxu0 0.0
      %830 = vmatprep.subr.mxu0 0.0
      %831 = vmatpush1.msra.mxu0 0.0
      %832 = vmatprep.subr.mxu0 0.0
      %833 = vmatpush1.msra.mxu0 0.0
      %834 = vmatprep.subr.mxu0 0.0
      %835 = vmatpush1.msra.mxu0 0.0
      %836 = vmatprep.subr.mxu0 0.0
      %837 = vmatpush1.msra.mxu0 0.0
      %838 = vmatprep.subr.mxu0 0.0
      %839 = vmatpush1.msra.mxu0 0.0
      %840 = vmatprep.subr.mxu0 0.0
      %841 = vmatpush1.msra.mxu0 0.0
      %842 = vmatprep.subr.mxu0 0.0
      %843 = vmatpush1.msra.mxu0 0.0
      %844 = vmatprep.subr.mxu0 0.0
      %845 = vmatpush1.msra.mxu0 0.0
      %846 = vmatprep.mubr.f32.mxu0 0.0
      %v847 = vand.u32 %v298, 4294901760
      %848 = vmatmul.mubr.f32.gmra.mrb[0].mxu0 %v847
      %v849 = vpop.f32.mrb[0].mxu0
      %v850 = vadd.f32 %v761, %v849
      %v851 = vpop.f32.mrb[0].mxu0
      %852 = vmatprep.mubr.f32.mxu0 0.0
      %v853 = vand.u32 %v301, 4294901760
      %854 = vmatmul.mubr.f32.gmra.mrb[0].mxu0 %v853
      %v855 = vpop.f32.mrb[0].mxu0
      %v856 = vadd.f32 %v767, %v855
      %v857 = vpop.f32.mrb[0].mxu0
      %858 = vmatprep.mubr.f32.mxu0 0.0
      %v859 = vand.u32 %v304, 4294901760
      %860 = vmatmul.mubr.f32.gmra.mrb[0].mxu0 %v859
      %v861 = vpop.f32.mrb[0].mxu0
      %v862 = vadd.f32 %v773, %v861
      %v863 = vpop.f32.mrb[0].mxu0
      %864 = vmatprep.mubr.f32.mxu0 0.0
      %v865 = vand.u32 %v307, 4294901760
      %866 = vmatmul.mubr.f32.gmra.mrb[0].mxu0 %v865
      %v867 = vpop.f32.mrb[0].mxu0
      %v868 = vadd.f32 %v779, %v867
      %v869 = vpop.f32.mrb[0].mxu0
      %870 = vdwg.mxu0
      %v871 = vmul.f32 %v850, %v850
      %v872 = vmul.f32 %v856, %v856
      %v873 = vsub.f32 %v862, %v871
      %v874 = vsub.f32 %v868, %v872
      %v875 = vsub.f32 %v279, %v850
      %v876 = vsub.f32 %v280, %v856
      %v877 = vadd.f32 %v873, 1e-05
      %v878 = vadd.f32 %v874, 1e-05
      %v879 = vrsqrt.pop %v877
      %v880 = vrsqrt.pop %v878
      %v881 = vmul.f32 %v875, %v879
      %v882 = vmul.f32 %v876, %v880
      %v883 = vld [vmem:[%s1] sm:$0xff]
      %v884 = vld [vmem:[%s1 + $0x8] sm:$0xff]
      %v885 = vld [vmem:[%s1 + $0x10] sm:$0xff]
      %v886 = vld [vmem:[%s1 + $0x18] sm:$0xff]
      %v887 = vld [vmem:[%s1 + $0x20] sm:$0xff]
      %v888 = vld [vmem:[%s1 + $0x28] sm:$0xff]
      %v889 = vld [vmem:[%s1 + $0x30] sm:$0xff]
      %v890 = vld [vmem:[%s1 + $0x38] sm:$0xff]
      %vm891 = vcmask 130048
      %v893 = vsel %vm891, %v883, 0
      %v896 = vsel %vm891, %v884, 0
      %v899 = vsel %vm891, %v885, 0
      %v902 = vsel %vm891, %v886, 0
      %v905 = vsel %vm891, %v887, 0
      %v908 = vsel %vm891, %v888, 0
      %v911 = vsel %vm891, %v889, 0
      %v914 = vsel %vm891, %v890, 0
      %916 = vmatprep.subr.mxu0 0.0
      %v917 = vand.u32 %v881, 4294901760
      %918 = vmatpush1.msra.mxu0 %v917
      %919 = vmatprep.subr.mxu0 0.0
      %v920 = vand.u32 %v882, 4294901760
      %921 = vmatpush1.msra.mxu0 %v920
      %922 = vmatprep.subr.mxu0 0.0
      %923 = vmatpush1.msra.mxu0 0.0
      %924 = vmatprep.subr.mxu0 0.0
      %925 = vmatpush1.msra.mxu0 0.0
      %926 = vmatprep.subr.mxu0 0.0
      %927 = vmatpush1.msra.mxu0 0.0
      %928 = vmatprep.subr.mxu0 0.0
      %929 = vmatpush1.msra.mxu0 0.0
      %930 = vmatprep.subr.mxu0 0.0
      %931 = vmatpush1.msra.mxu0 0.0
      %932 = vmatprep.subr.mxu0 0.0
      %933 = vmatpush1.msra.mxu0 0.0
      %934 = vmatprep.subr.mxu0 0.0
      %935 = vmatpush1.msra.mxu0 0.0
      %936 = vmatprep.subr.mxu0 0.0
      %937 = vmatpush1.msra.mxu0 0.0
      %938 = vmatprep.subr.mxu0 0.0
      %939 = vmatpush1.msra.mxu0 0.0
      %940 = vmatprep.subr.mxu0 0.0
      %941 = vmatpush1.msra.mxu0 0.0
      %942 = vmatprep.subr.mxu0 0.0
      %943 = vmatpush1.msra.mxu0 0.0
      %944 = vmatprep.subr.mxu0 0.0
      %945 = vmatpush1.msra.mxu0 0.0
      %946 = vmatprep.subr.mxu0 0.0
      %947 = vmatpush1.msra.mxu0 0.0
      %948 = vmatprep.subr.mxu0 0.0
      %949 = vmatpush1.msra.mxu0 0.0
      %950 = vmatprep.subr.mxu0 0.0
      %951 = vmatpush1.msra.mxu0 0.0
      %952 = vmatprep.subr.mxu0 0.0
      %953 = vmatpush1.msra.mxu0 0.0
      %954 = vmatprep.subr.mxu0 0.0
      %955 = vmatpush1.msra.mxu0 0.0
      %956 = vmatprep.subr.mxu0 0.0
      %957 = vmatpush1.msra.mxu0 0.0
      %958 = vmatprep.subr.mxu0 0.0
      %959 = vmatpush1.msra.mxu0 0.0
      %960 = vmatprep.subr.mxu0 0.0
      %961 = vmatpush1.msra.mxu0 0.0
      %962 = vmatprep.subr.mxu0 0.0
      %963 = vmatpush1.msra.mxu0 0.0
      %964 = vmatprep.subr.mxu0 0.0
      %965 = vmatpush1.msra.mxu0 0.0
      %966 = vmatprep.subr.mxu0 0.0
      %967 = vmatpush1.msra.mxu0 0.0
      %968 = vmatprep.subr.mxu0 0.0
      %969 = vmatpush1.msra.mxu0 0.0
      %970 = vmatprep.subr.mxu0 0.0
      %971 = vmatpush1.msra.mxu0 0.0
      %972 = vmatprep.subr.mxu0 0.0
      %973 = vmatpush1.msra.mxu0 0.0
      %974 = vmatprep.subr.mxu0 0.0
      %975 = vmatpush1.msra.mxu0 0.0
      %976 = vmatprep.subr.mxu0 0.0
      %977 = vmatpush1.msra.mxu0 0.0
      %978 = vmatprep.subr.mxu0 0.0
      %979 = vmatpush1.msra.mxu0 0.0
      %980 = vmatprep.subr.mxu0 0.0
      %981 = vmatpush1.msra.mxu0 0.0
      %982 = vmatprep.mubr.f32.mxu0 0.0
      %v983 = vand.u32 %v893, 4294901760
      %v984 = vsub.f32 %v893, %v983
      %v985 = vand.u32 %v984, 4294901760
      %v986 = vsub.f32 %v984, %v985
      %v987 = vand.u32 %v986, 4294901760
      %988 = vmatmul.mubr.f32.gmra.mrb[0].mxu0 %v987
      %v989 = vpop.f32.mrb[0].mxu0
      %v990 = vadd.f32 0.0, %v989
      %v991 = vpop.f32.mrb[0].mxu0
      %992 = vmatprep.mubr.f32.mxu0 0.0
      %v993 = vand.u32 %v896, 4294901760
      %v994 = vsub.f32 %v896, %v993
      %v995 = vand.u32 %v994, 4294901760
      %v996 = vsub.f32 %v994, %v995
      %v997 = vand.u32 %v996, 4294901760
      %998 = vmatmul.mubr.f32.gmra.mrb[0].mxu0 %v997
      %v999 = vpop.f32.mrb[0].mxu0
      %v1000 = vadd.f32 0.0, %v999
      %v1001 = vpop.f32.mrb[0].mxu0
      %1002 = vmatprep.mubr.f32.mxu0 0.0
      %v1003 = vand.u32 %v899, 4294901760
      %v1004 = vsub.f32 %v899, %v1003
      %v1005 = vand.u32 %v1004, 4294901760
      %v1006 = vsub.f32 %v1004, %v1005
      %v1007 = vand.u32 %v1006, 4294901760
      %1008 = vmatmul.mubr.f32.gmra.mrb[0].mxu0 %v1007
      %v1009 = vpop.f32.mrb[0].mxu0
      %v1010 = vadd.f32 0.0, %v1009
      %v1011 = vpop.f32.mrb[0].mxu0
      %1012 = vmatprep.mubr.f32.mxu0 0.0
      %v1013 = vand.u32 %v902, 4294901760
      %v1014 = vsub.f32 %v902, %v1013
      %v1015 = vand.u32 %v1014, 4294901760
      %v1016 = vsub.f32 %v1014, %v1015
      %v1017 = vand.u32 %v1016, 4294901760
      %1018 = vmatmul.mubr.f32.gmra.mrb[0].mxu0 %v1017
      %v1019 = vpop.f32.mrb[0].mxu0
      %v1020 = vadd.f32 0.0, %v1019
      %v1021 = vpop.f32.mrb[0].mxu0
      %1022 = vmatprep.mubr.f32.mxu0 0.0
      %v1023 = vand.u32 %v905, 4294901760
      %v1024 = vsub.f32 %v905, %v1023
      %v1025 = vand.u32 %v1024, 4294901760
      %v1026 = vsub.f32 %v1024, %v1025
      %v1027 = vand.u32 %v1026, 4294901760
      %1028 = vmatmul.mubr.f32.gmra.mrb[0].mxu0 %v1027
      %v1029 = vpop.f32.mrb[0].mxu0
      %v1030 = vadd.f32 0.0, %v1029
      %v1031 = vpop.f32.mrb[0].mxu0
      %1032 = vmatprep.mubr.f32.mxu0 0.0
      %v1033 = vand.u32 %v908, 4294901760
      %v1034 = vsub.f32 %v908, %v1033
      %v1035 = vand.u32 %v1034, 4294901760
      %v1036 = vsub.f32 %v1034, %v1035
      %v1037 = vand.u32 %v1036, 4294901760
      %1038 = vmatmul.mubr.f32.gmra.mrb[0].mxu0 %v1037
      %v1039 = vpop.f32.mrb[0].mxu0
      %v1040 = vadd.f32 0.0, %v1039
      %v1041 = vpop.f32.mrb[0].mxu0
      %1042 = vmatprep.mubr.f32.mxu0 0.0
      %v1043 = vand.u32 %v911, 4294901760
      %v1044 = vsub.f32 %v911, %v1043
      %v1045 = vand.u32 %v1044, 4294901760
      %v1046 = vsub.f32 %v1044, %v1045
      %v1047 = vand.u32 %v1046, 4294901760
      %1048 = vmatmul.mubr.f32.gmra.mrb[0].mxu0 %v1047
      %v1049 = vpop.f32.mrb[0].mxu0
      %v1050 = vadd.f32 0.0, %v1049
      %v1051 = vpop.f32.mrb[0].mxu0
      %1052 = vmatprep.mubr.f32.mxu0 0.0
      %v1053 = vand.u32 %v914, 4294901760
      %v1054 = vsub.f32 %v914, %v1053
      %v1055 = vand.u32 %v1054, 4294901760
      %v1056 = vsub.f32 %v1054, %v1055
      %v1057 = vand.u32 %v1056, 4294901760
      %1058 = vmatmul.mubr.f32.gmra.mrb[0].mxu0 %v1057
      %v1059 = vpop.f32.mrb[0].mxu0
      %v1060 = vadd.f32 0.0, %v1059
      %v1061 = vpop.f32.mrb[0].mxu0
      %1062 = vdwg.mxu0
      %1063 = vmatprep.subr.mxu0 0.0
      %v1064 = vand.u32 %v881, 4294901760
      %v1065 = vsub.f32 %v881, %v1064
      %v1066 = vand.u32 %v1065, 4294901760
      %v1067 = vsub.f32 %v1065, %v1066
      %v1068 = vand.u32 %v1067, 4294901760
      %1069 = vmatpush1.msra.mxu0 %v1068
      %1070 = vmatprep.subr.mxu0 0.0
      %v1071 = vand.u32 %v882, 4294901760
      %v1072 = vsub.f32 %v882, %v1071
      %v1073 = vand.u32 %v1072, 4294901760
      %v1074 = vsub.f32 %v1072, %v1073
      %v1075 = vand.u32 %v1074, 4294901760
      %1076 = vmatpush1.msra.mxu0 %v1075
      %1077 = vmatprep.subr.mxu0 0.0
      %1078 = vmatpush1.msra.mxu0 0.0
      %1079 = vmatprep.subr.mxu0 0.0
      %1080 = vmatpush1.msra.mxu0 0.0
      %1081 = vmatprep.subr.mxu0 0.0
      %1082 = vmatpush1.msra.mxu0 0.0
      %1083 = vmatprep.subr.mxu0 0.0
      %1084 = vmatpush1.msra.mxu0 0.0
      %1085 = vmatprep.subr.mxu0 0.0
      %1086 = vmatpush1.msra.mxu0 0.0
      %1087 = vmatprep.subr.mxu0 0.0
      %1088 = vmatpush1.msra.mxu0 0.0
      %1089 = vmatprep.subr.mxu0 0.0
      %1090 = vmatpush1.msra.mxu0 0.0
      %1091 = vmatprep.subr.mxu0 0.0
      %1092 = vmatpush1.msra.mxu0 0.0
      %1093 = vmatprep.subr.mxu0 0.0
      %1094 = vmatpush1.msra.mxu0 0.0
      %1095 = vmatprep.subr.mxu0 0.0
      %1096 = vmatpush1.msra.mxu0 0.0
      %1097 = vmatprep.subr.mxu0 0.0
      %1098 = vmatpush1.msra.mxu0 0.0
      %1099 = vmatprep.subr.mxu0 0.0
      %1100 = vmatpush1.msra.mxu0 0.0
      %1101 = vmatprep.subr.mxu0 0.0
      %1102 = vmatpush1.msra.mxu0 0.0
      %1103 = vmatprep.subr.mxu0 0.0
      %1104 = vmatpush1.msra.mxu0 0.0
      %1105 = vmatprep.subr.mxu0 0.0
      %1106 = vmatpush1.msra.mxu0 0.0
      %1107 = vmatprep.subr.mxu0 0.0
      %1108 = vmatpush1.msra.mxu0 0.0
      %1109 = vmatprep.subr.mxu0 0.0
      %1110 = vmatpush1.msra.mxu0 0.0
      %1111 = vmatprep.subr.mxu0 0.0
      %1112 = vmatpush1.msra.mxu0 0.0
      %1113 = vmatprep.subr.mxu0 0.0
      %1114 = vmatpush1.msra.mxu0 0.0
      %1115 = vmatprep.subr.mxu0 0.0
      %1116 = vmatpush1.msra.mxu0 0.0
      %1117 = vmatprep.subr.mxu0 0.0
      %1118 = vmatpush1.msra.mxu0 0.0
      %1119 = vmatprep.subr.mxu0 0.0
      %1120 = vmatpush1.msra.mxu0 0.0
      %1121 = vmatprep.subr.mxu0 0.0
      %1122 = vmatpush1.msra.mxu0 0.0
      %1123 = vmatprep.subr.mxu0 0.0
      %1124 = vmatpush1.msra.mxu0 0.0
      %1125 = vmatprep.subr.mxu0 0.0
      %1126 = vmatpush1.msra.mxu0 0.0
      %1127 = vmatprep.subr.mxu0 0.0
      %1128 = vmatpush1.msra.mxu0 0.0
      %1129 = vmatprep.subr.mxu0 0.0
      %1130 = vmatpush1.msra.mxu0 0.0
      %1131 = vmatprep.subr.mxu0 0.0
      %1132 = vmatpush1.msra.mxu0 0.0
      %1133 = vmatprep.subr.mxu0 0.0
      %1134 = vmatpush1.msra.mxu0 0.0
      %1135 = vmatprep.subr.mxu0 0.0
      %1136 = vmatpush1.msra.mxu0 0.0
      %1137 = vmatprep.mubr.f32.mxu0 0.0
      %v1138 = vand.u32 %v893, 4294901760
      %1139 = vmatmul.mubr.f32.gmra.mrb[0].mxu0 %v1138
      %v1140 = vpop.f32.mrb[0].mxu0
      %v1141 = vadd.f32 %v990, %v1140
      %v1142 = vpop.f32.mrb[0].mxu0
      %1143 = vmatprep.mubr.f32.mxu0 0.0
      %v1144 = vand.u32 %v896, 4294901760
      %1145 = vmatmul.mubr.f32.gmra.mrb[0].mxu0 %v1144
      %v1146 = vpop.f32.mrb[0].mxu0
      %v1147 = vadd.f32 %v1000, %v1146
      %v1148 = vpop.f32.mrb[0].mxu0
      %1149 = vmatprep.mubr.f32.mxu0 0.0
      %v1150 = vand.u32 %v899, 4294901760
      %1151 = vmatmul.mubr.f32.gmra.mrb[0].mxu0 %v1150
      %v1152 = vpop.f32.mrb[0].mxu0
      %v1153 = vadd.f32 %v1010, %v1152
      %v1154 = vpop.f32.mrb[0].mxu0
      %1155 = vmatprep.mubr.f32.mxu0 0.0
      %v1156 = vand.u32 %v902, 4294901760
      %1157 = vmatmul.mubr.f32.gmra.mrb[0].mxu0 %v1156
      %v1158 = vpop.f32.mrb[0].mxu0
      %v1159 = vadd.f32 %v1020, %v1158
      %v1160 = vpop.f32.mrb[0].mxu0
      %1161 = vmatprep.mubr.f32.mxu0 0.0
      %v1162 = vand.u32 %v905, 4294901760
      %1163 = vmatmul.mubr.f32.gmra.mrb[0].mxu0 %v1162
      %v1164 = vpop.f32.mrb[0].mxu0
      %v1165 = vadd.f32 %v1030, %v1164
      %v1166 = vpop.f32.mrb[0].mxu0
      %1167 = vmatprep.mubr.f32.mxu0 0.0
      %v1168 = vand.u32 %v908, 4294901760
      %1169 = vmatmul.mubr.f32.gmra.mrb[0].mxu0 %v1168
      %v1170 = vpop.f32.mrb[0].mxu0
      %v1171 = vadd.f32 %v1040, %v1170
      %v1172 = vpop.f32.mrb[0].mxu0
      %1173 = vmatprep.mubr.f32.mxu0 0.0
      %v1174 = vand.u32 %v911, 4294901760
      %1175 = vmatmul.mubr.f32.gmra.mrb[0].mxu0 %v1174
      %v1176 = vpop.f32.mrb[0].mxu0
      %v1177 = vadd.f32 %v1050, %v1176
      %v1178 = vpop.f32.mrb[0].mxu0
      %1179 = vmatprep.mubr.f32.mxu0 0.0
      %v1180 = vand.u32 %v914, 4294901760
      %1181 = vmatmul.mubr.f32.gmra.mrb[0].mxu0 %v1180
      %v1182 = vpop.f32.mrb[0].mxu0
      %v1183 = vadd.f32 %v1060, %v1182
      %v1184 = vpop.f32.mrb[0].mxu0
      %1185 = vdwg.mxu0
      %1186 = vmatprep.subr.mxu0 0.0
      %v1187 = vand.u32 %v881, 4294901760
      %v1188 = vsub.f32 %v881, %v1187
      %1189 = vmatpush1.msra.mxu0 %v1188
      %1190 = vmatprep.subr.mxu0 0.0
      %v1191 = vand.u32 %v882, 4294901760
      %v1192 = vsub.f32 %v882, %v1191
      %1193 = vmatpush1.msra.mxu0 %v1192
      %1194 = vmatprep.subr.mxu0 0.0
      %1195 = vmatpush1.msra.mxu0 0.0
      %1196 = vmatprep.subr.mxu0 0.0
      %1197 = vmatpush1.msra.mxu0 0.0
      %1198 = vmatprep.subr.mxu0 0.0
      %1199 = vmatpush1.msra.mxu0 0.0
      %1200 = vmatprep.subr.mxu0 0.0
      %1201 = vmatpush1.msra.mxu0 0.0
      %1202 = vmatprep.subr.mxu0 0.0
      %1203 = vmatpush1.msra.mxu0 0.0
      %1204 = vmatprep.subr.mxu0 0.0
      %1205 = vmatpush1.msra.mxu0 0.0
      %1206 = vmatprep.subr.mxu0 0.0
      %1207 = vmatpush1.msra.mxu0 0.0
      %1208 = vmatprep.subr.mxu0 0.0
      %1209 = vmatpush1.msra.mxu0 0.0
      %1210 = vmatprep.subr.mxu0 0.0
      %1211 = vmatpush1.msra.mxu0 0.0
      %1212 = vmatprep.subr.mxu0 0.0
      %1213 = vmatpush1.msra.mxu0 0.0
      %1214 = vmatprep.subr.mxu0 0.0
      %1215 = vmatpush1.msra.mxu0 0.0
      %1216 = vmatprep.subr.mxu0 0.0
      %1217 = vmatpush1.msra.mxu0 0.0
      %1218 = vmatprep.subr.mxu0 0.0
      %1219 = vmatpush1.msra.mxu0 0.0
      %1220 = vmatprep.subr.mxu0 0.0
      %1221 = vmatpush1.msra.mxu0 0.0
      %1222 = vmatprep.subr.mxu0 0.0
      %1223 = vmatpush1.msra.mxu0 0.0
      %1224 = vmatprep.subr.mxu0 0.0
      %1225 = vmatpush1.msra.mxu0 0.0
      %1226 = vmatprep.subr.mxu0 0.0
      %1227 = vmatpush1.msra.mxu0 0.0
      %1228 = vmatprep.subr.mxu0 0.0
      %1229 = vmatpush1.msra.mxu0 0.0
      %1230 = vmatprep.subr.mxu0 0.0
      %1231 = vmatpush1.msra.mxu0 0.0
      %1232 = vmatprep.subr.mxu0 0.0
      %1233 = vmatpush1.msra.mxu0 0.0
      %1234 = vmatprep.subr.mxu0 0.0
      %1235 = vmatpush1.msra.mxu0 0.0
      %1236 = vmatprep.subr.mxu0 0.0
      %1237 = vmatpush1.msra.mxu0 0.0
      %1238 = vmatprep.subr.mxu0 0.0
      %1239 = vmatpush1.msra.mxu0 0.0
      %1240 = vmatprep.subr.mxu0 0.0
      %1241 = vmatpush1.msra.mxu0 0.0
      %1242 = vmatprep.subr.mxu0 0.0
      %1243 = vmatpush1.msra.mxu0 0.0
      %1244 = vmatprep.subr.mxu0 0.0
      %1245 = vmatpush1.msra.mxu0 0.0
      %1246 = vmatprep.subr.mxu0 0.0
      %1247 = vmatpush1.msra.mxu0 0.0
      %1248 = vmatprep.subr.mxu0 0.0
      %1249 = vmatpush1.msra.mxu0 0.0
      %1250 = vmatprep.subr.mxu0 0.0
      %1251 = vmatpush1.msra.mxu0 0.0
      %1252 = vmatprep.subr.mxu0 0.0
      %1253 = vmatpush1.msra.mxu0 0.0
      %1254 = vmatprep.mubr.f32.mxu0 0.0
      %v1255 = vand.u32 %v893, 4294901760
      %v1256 = vsub.f32 %v893, %v1255
      %1257 = vmatmul.mubr.f32.gmra.mrb[0].mxu0 %v1256
      %v1258 = vpop.f32.mrb[0].mxu0
      %v1259 = vadd.f32 %v1141, %v1258
      %v1260 = vpop.f32.mrb[0].mxu0
      %1261 = vmatprep.mubr.f32.mxu0 0.0
      %v1262 = vand.u32 %v896, 4294901760
      %v1263 = vsub.f32 %v896, %v1262
      %1264 = vmatmul.mubr.f32.gmra.mrb[0].mxu0 %v1263
      %v1265 = vpop.f32.mrb[0].mxu0
      %v1266 = vadd.f32 %v1147, %v1265
      %v1267 = vpop.f32.mrb[0].mxu0
      %1268 = vmatprep.mubr.f32.mxu0 0.0
      %v1269 = vand.u32 %v899, 4294901760
      %v1270 = vsub.f32 %v899, %v1269
      %1271 = vmatmul.mubr.f32.gmra.mrb[0].mxu0 %v1270
      %v1272 = vpop.f32.mrb[0].mxu0
      %v1273 = vadd.f32 %v1153, %v1272
      %v1274 = vpop.f32.mrb[0].mxu0
      %1275 = vmatprep.mubr.f32.mxu0 0.0
      %v1276 = vand.u32 %v902, 4294901760
      %v1277 = vsub.f32 %v902, %v1276
      %1278 = vmatmul.mubr.f32.gmra.mrb[0].mxu0 %v1277
      %v1279 = vpop.f32.mrb[0].mxu0
      %v1280 = vadd.f32 %v1159, %v1279
      %v1281 = vpop.f32.mrb[0].mxu0
      %1282 = vmatprep.mubr.f32.mxu0 0.0
      %v1283 = vand.u32 %v905, 4294901760
      %v1284 = vsub.f32 %v905, %v1283
      %1285 = vmatmul.mubr.f32.gmra.mrb[0].mxu0 %v1284
      %v1286 = vpop.f32.mrb[0].mxu0
      %v1287 = vadd.f32 %v1165, %v1286
      %v1288 = vpop.f32.mrb[0].mxu0
      %1289 = vmatprep.mubr.f32.mxu0 0.0
      %v1290 = vand.u32 %v908, 4294901760
      %v1291 = vsub.f32 %v908, %v1290
      %1292 = vmatmul.mubr.f32.gmra.mrb[0].mxu0 %v1291
      %v1293 = vpop.f32.mrb[0].mxu0
      %v1294 = vadd.f32 %v1171, %v1293
      %v1295 = vpop.f32.mrb[0].mxu0
      %1296 = vmatprep.mubr.f32.mxu0 0.0
      %v1297 = vand.u32 %v911, 4294901760
      %v1298 = vsub.f32 %v911, %v1297
      %1299 = vmatmul.mubr.f32.gmra.mrb[0].mxu0 %v1298
      %v1300 = vpop.f32.mrb[0].mxu0
      %v1301 = vadd.f32 %v1177, %v1300
      %v1302 = vpop.f32.mrb[0].mxu0
      %1303 = vmatprep.mubr.f32.mxu0 0.0
      %v1304 = vand.u32 %v914, 4294901760
      %v1305 = vsub.f32 %v914, %v1304
      %1306 = vmatmul.mubr.f32.gmra.mrb[0].mxu0 %v1305
      %v1307 = vpop.f32.mrb[0].mxu0
      %v1308 = vadd.f32 %v1183, %v1307
      %v1309 = vpop.f32.mrb[0].mxu0
      %1310 = vdwg.mxu0
      %1311 = vmatprep.subr.mxu0 0.0
      %v1312 = vand.u32 %v881, 4294901760
      %1313 = vmatpush1.msra.mxu0 %v1312
      %1314 = vmatprep.subr.mxu0 0.0
      %v1315 = vand.u32 %v882, 4294901760
      %1316 = vmatpush1.msra.mxu0 %v1315
      %1317 = vmatprep.subr.mxu0 0.0
      %1318 = vmatpush1.msra.mxu0 0.0
      %1319 = vmatprep.subr.mxu0 0.0
      %1320 = vmatpush1.msra.mxu0 0.0
      %1321 = vmatprep.subr.mxu0 0.0
      %1322 = vmatpush1.msra.mxu0 0.0
      %1323 = vmatprep.subr.mxu0 0.0
      %1324 = vmatpush1.msra.mxu0 0.0
      %1325 = vmatprep.subr.mxu0 0.0
      %1326 = vmatpush1.msra.mxu0 0.0
      %1327 = vmatprep.subr.mxu0 0.0
      %1328 = vmatpush1.msra.mxu0 0.0
      %1329 = vmatprep.subr.mxu0 0.0
      %1330 = vmatpush1.msra.mxu0 0.0
      %1331 = vmatprep.subr.mxu0 0.0
      %1332 = vmatpush1.msra.mxu0 0.0
      %1333 = vmatprep.subr.mxu0 0.0
      %1334 = vmatpush1.msra.mxu0 0.0
      %1335 = vmatprep.subr.mxu0 0.0
      %1336 = vmatpush1.msra.mxu0 0.0
      %1337 = vmatprep.subr.mxu0 0.0
      %1338 = vmatpush1.msra.mxu0 0.0
      %1339 = vmatprep.subr.mxu0 0.0
      %1340 = vmatpush1.msra.mxu0 0.0
      %1341 = vmatprep.subr.mxu0 0.0
      %1342 = vmatpush1.msra.mxu0 0.0
      %1343 = vmatprep.subr.mxu0 0.0
      %1344 = vmatpush1.msra.mxu0 0.0
      %1345 = vmatprep.subr.mxu0 0.0
      %1346 = vmatpush1.msra.mxu0 0.0
      %1347 = vmatprep.subr.mxu0 0.0
      %1348 = vmatpush1.msra.mxu0 0.0
      %1349 = vmatprep.subr.mxu0 0.0
      %1350 = vmatpush1.msra.mxu0 0.0
      %1351 = vmatprep.subr.mxu0 0.0
      %1352 = vmatpush1.msra.mxu0 0.0
      %1353 = vmatprep.subr.mxu0 0.0
      %1354 = vmatpush1.msra.mxu0 0.0
      %1355 = vmatprep.subr.mxu0 0.0
      %1356 = vmatpush1.msra.mxu0 0.0
      %1357 = vmatprep.subr.mxu0 0.0
      %1358 = vmatpush1.msra.mxu0 0.0
      %1359 = vmatprep.subr.mxu0 0.0
      %1360 = vmatpush1.msra.mxu0 0.0
      %1361 = vmatprep.subr.mxu0 0.0
      %1362 = vmatpush1.msra.mxu0 0.0
      %1363 = vmatprep.subr.mxu0 0.0
      %1364 = vmatpush1.msra.mxu0 0.0
      %1365 = vmatprep.subr.mxu0 0.0
      %1366 = vmatpush1.msra.mxu0 0.0
      %1367 = vmatprep.subr.mxu0 0.0
      %1368 = vmatpush1.msra.mxu0 0.0
      %1369 = vmatprep.subr.mxu0 0.0
      %1370 = vmatpush1.msra.mxu0 0.0
      %1371 = vmatprep.subr.mxu0 0.0
      %1372 = vmatpush1.msra.mxu0 0.0
      %1373 = vmatprep.subr.mxu0 0.0
      %1374 = vmatpush1.msra.mxu0 0.0
      %1375 = vmatprep.subr.mxu0 0.0
      %1376 = vmatpush1.msra.mxu0 0.0
      %1377 = vmatprep.mubr.f32.mxu0 0.0
      %v1378 = vand.u32 %v893, 4294901760
      %v1379 = vsub.f32 %v893, %v1378
      %v1380 = vand.u32 %v1379, 4294901760
      %1381 = vmatmul.mubr.f32.gmra.mrb[0].mxu0 %v1380
      %v1382 = vpop.f32.mrb[0].mxu0
      %v1383 = vadd.f32 %v1259, %v1382
      %v1384 = vpop.f32.mrb[0].mxu0
      %1385 = vmatprep.mubr.f32.mxu0 0.0
      %v1386 = vand.u32 %v896, 4294901760
      %v1387 = vsub.f32 %v896, %v1386
      %v1388 = vand.u32 %v1387, 4294901760
      %1389 = vmatmul.mubr.f32.gmra.mrb[0].mxu0 %v1388
      %v1390 = vpop.f32.mrb[0].mxu0
      %v1391 = vadd.f32 %v1266, %v1390
      %v1392 = vpop.f32.mrb[0].mxu0
      %1393 = vmatprep.mubr.f32.mxu0 0.0
      %v1394 = vand.u32 %v899, 4294901760
      %v1395 = vsub.f32 %v899, %v1394
      %v1396 = vand.u32 %v1395, 4294901760
      %1397 = vmatmul.mubr.f32.gmra.mrb[0].mxu0 %v1396
      %v1398 = vpop.f32.mrb[0].mxu0
      %v1399 = vadd.f32 %v1273, %v1398
      %v1400 = vpop.f32.mrb[0].mxu0
      %1401 = vmatprep.mubr.f32.mxu0 0.0
      %v1402 = vand.u32 %v902, 4294901760
      %v1403 = vsub.f32 %v902, %v1402
      %v1404 = vand.u32 %v1403, 4294901760
      %1405 = vmatmul.mubr.f32.gmra.mrb[0].mxu0 %v1404
      %v1406 = vpop.f32.mrb[0].mxu0
      %v1407 = vadd.f32 %v1280, %v1406
      %v1408 = vpop.f32.mrb[0].mxu0
      %1409 = vmatprep.mubr.f32.mxu0 0.0
      %v1410 = vand.u32 %v905, 4294901760
      %v1411 = vsub.f32 %v905, %v1410
      %v1412 = vand.u32 %v1411, 4294901760
      %1413 = vmatmul.mubr.f32.gmra.mrb[0].mxu0 %v1412
      %v1414 = vpop.f32.mrb[0].mxu0
      %v1415 = vadd.f32 %v1287, %v1414
      %v1416 = vpop.f32.mrb[0].mxu0
      %1417 = vmatprep.mubr.f32.mxu0 0.0
      %v1418 = vand.u32 %v908, 4294901760
      %v1419 = vsub.f32 %v908, %v1418
      %v1420 = vand.u32 %v1419, 4294901760
      %1421 = vmatmul.mubr.f32.gmra.mrb[0].mxu0 %v1420
      %v1422 = vpop.f32.mrb[0].mxu0
      %v1423 = vadd.f32 %v1294, %v1422
      %v1424 = vpop.f32.mrb[0].mxu0
      %1425 = vmatprep.mubr.f32.mxu0 0.0
      %v1426 = vand.u32 %v911, 4294901760
      %v1427 = vsub.f32 %v911, %v1426
      %v1428 = vand.u32 %v1427, 4294901760
      %1429 = vmatmul.mubr.f32.gmra.mrb[0].mxu0 %v1428
      %v1430 = vpop.f32.mrb[0].mxu0
      %v1431 = vadd.f32 %v1301, %v1430
      %v1432 = vpop.f32.mrb[0].mxu0
      %1433 = vmatprep.mubr.f32.mxu0 0.0
      %v1434 = vand.u32 %v914, 4294901760
      %v1435 = vsub.f32 %v914, %v1434
      %v1436 = vand.u32 %v1435, 4294901760
      %1437 = vmatmul.mubr.f32.gmra.mrb[0].mxu0 %v1436
      %v1438 = vpop.f32.mrb[0].mxu0
      %v1439 = vadd.f32 %v1308, %v1438
      %v1440 = vpop.f32.mrb[0].mxu0
      %1441 = vdwg.mxu0
      %1442 = vmatprep.subr.mxu0 0.0
      %v1443 = vand.u32 %v881, 4294901760
      %v1444 = vsub.f32 %v881, %v1443
      %v1445 = vand.u32 %v1444, 4294901760
      %1446 = vmatpush1.msra.mxu0 %v1445
      %1447 = vmatprep.subr.mxu0 0.0
      %v1448 = vand.u32 %v882, 4294901760
      %v1449 = vsub.f32 %v882, %v1448
      %v1450 = vand.u32 %v1449, 4294901760
      %1451 = vmatpush1.msra.mxu0 %v1450
      %1452 = vmatprep.subr.mxu0 0.0
      %1453 = vmatpush1.msra.mxu0 0.0
      %1454 = vmatprep.subr.mxu0 0.0
      %1455 = vmatpush1.msra.mxu0 0.0
      %1456 = vmatprep.subr.mxu0 0.0
      %1457 = vmatpush1.msra.mxu0 0.0
      %1458 = vmatprep.subr.mxu0 0.0
      %1459 = vmatpush1.msra.mxu0 0.0
      %1460 = vmatprep.subr.mxu0 0.0
      %1461 = vmatpush1.msra.mxu0 0.0
      %1462 = vmatprep.subr.mxu0 0.0
      %1463 = vmatpush1.msra.mxu0 0.0
      %1464 = vmatprep.subr.mxu0 0.0
      %1465 = vmatpush1.msra.mxu0 0.0
      %1466 = vmatprep.subr.mxu0 0.0
      %1467 = vmatpush1.msra.mxu0 0.0
      %1468 = vmatprep.subr.mxu0 0.0
      %1469 = vmatpush1.msra.mxu0 0.0
      %1470 = vmatprep.subr.mxu0 0.0
      %1471 = vmatpush1.msra.mxu0 0.0
      %1472 = vmatprep.subr.mxu0 0.0
      %1473 = vmatpush1.msra.mxu0 0.0
      %1474 = vmatprep.subr.mxu0 0.0
      %1475 = vmatpush1.msra.mxu0 0.0
      %1476 = vmatprep.subr.mxu0 0.0
      %1477 = vmatpush1.msra.mxu0 0.0
      %1478 = vmatprep.subr.mxu0 0.0
      %1479 = vmatpush1.msra.mxu0 0.0
      %1480 = vmatprep.subr.mxu0 0.0
      %1481 = vmatpush1.msra.mxu0 0.0
      %1482 = vmatprep.subr.mxu0 0.0
      %1483 = vmatpush1.msra.mxu0 0.0
      %1484 = vmatprep.subr.mxu0 0.0
      %1485 = vmatpush1.msra.mxu0 0.0
      %1486 = vmatprep.subr.mxu0 0.0
      %1487 = vmatpush1.msra.mxu0 0.0
      %1488 = vmatprep.subr.mxu0 0.0
      %1489 = vmatpush1.msra.mxu0 0.0
      %1490 = vmatprep.subr.mxu0 0.0
      %1491 = vmatpush1.msra.mxu0 0.0
      %1492 = vmatprep.subr.mxu0 0.0
      %1493 = vmatpush1.msra.mxu0 0.0
      %1494 = vmatprep.subr.mxu0 0.0
      %1495 = vmatpush1.msra.mxu0 0.0
      %1496 = vmatprep.subr.mxu0 0.0
      %1497 = vmatpush1.msra.mxu0 0.0
      %1498 = vmatprep.subr.mxu0 0.0
      %1499 = vmatpush1.msra.mxu0 0.0
      %1500 = vmatprep.subr.mxu0 0.0
      %1501 = vmatpush1.msra.mxu0 0.0
      %1502 = vmatprep.subr.mxu0 0.0
      %1503 = vmatpush1.msra.mxu0 0.0
      %1504 = vmatprep.subr.mxu0 0.0
      %1505 = vmatpush1.msra.mxu0 0.0
      %1506 = vmatprep.subr.mxu0 0.0
      %1507 = vmatpush1.msra.mxu0 0.0
      %1508 = vmatprep.subr.mxu0 0.0
      %1509 = vmatpush1.msra.mxu0 0.0
      %1510 = vmatprep.subr.mxu0 0.0
      %1511 = vmatpush1.msra.mxu0 0.0
      %1512 = vmatprep.mubr.f32.mxu0 0.0
      %v1513 = vand.u32 %v893, 4294901760
      %1514 = vmatmul.mubr.f32.gmra.mrb[0].mxu0 %v1513
      %v1515 = vpop.f32.mrb[0].mxu0
      %v1516 = vadd.f32 %v1383, %v1515
      %v1517 = vpop.f32.mrb[0].mxu0
      %1518 = vmatprep.mubr.f32.mxu0 0.0
      %v1519 = vand.u32 %v896, 4294901760
      %1520 = vmatmul.mubr.f32.gmra.mrb[0].mxu0 %v1519
      %v1521 = vpop.f32.mrb[0].mxu0
      %v1522 = vadd.f32 %v1391, %v1521
      %v1523 = vpop.f32.mrb[0].mxu0
      %1524 = vmatprep.mubr.f32.mxu0 0.0
      %v1525 = vand.u32 %v899, 4294901760
      %1526 = vmatmul.mubr.f32.gmra.mrb[0].mxu0 %v1525
      %v1527 = vpop.f32.mrb[0].mxu0
      %v1528 = vadd.f32 %v1399, %v1527
      %v1529 = vpop.f32.mrb[0].mxu0
      %1530 = vmatprep.mubr.f32.mxu0 0.0
      %v1531 = vand.u32 %v902, 4294901760
      %1532 = vmatmul.mubr.f32.gmra.mrb[0].mxu0 %v1531
      %v1533 = vpop.f32.mrb[0].mxu0
      %v1534 = vadd.f32 %v1407, %v1533
      %v1535 = vpop.f32.mrb[0].mxu0
      %1536 = vmatprep.mubr.f32.mxu0 0.0
      %v1537 = vand.u32 %v905, 4294901760
      %1538 = vmatmul.mubr.f32.gmra.mrb[0].mxu0 %v1537
      %v1539 = vpop.f32.mrb[0].mxu0
      %v1540 = vadd.f32 %v1415, %v1539
      %v1541 = vpop.f32.mrb[0].mxu0
      %1542 = vmatprep.mubr.f32.mxu0 0.0
      %v1543 = vand.u32 %v908, 4294901760
      %1544 = vmatmul.mubr.f32.gmra.mrb[0].mxu0 %v1543
      %v1545 = vpop.f32.mrb[0].mxu0
      %v1546 = vadd.f32 %v1423, %v1545
      %v1547 = vpop.f32.mrb[0].mxu0
      %1548 = vmatprep.mubr.f32.mxu0 0.0
      %v1549 = vand.u32 %v911, 4294901760
      %1550 = vmatmul.mubr.f32.gmra.mrb[0].mxu0 %v1549
      %v1551 = vpop.f32.mrb[0].mxu0
      %v1552 = vadd.f32 %v1431, %v1551
      %v1553 = vpop.f32.mrb[0].mxu0
      %1554 = vmatprep.mubr.f32.mxu0 0.0
      %v1555 = vand.u32 %v914, 4294901760
      %1556 = vmatmul.mubr.f32.gmra.mrb[0].mxu0 %v1555
      %v1557 = vpop.f32.mrb[0].mxu0
      %v1558 = vadd.f32 %v1439, %v1557
      %v1559 = vpop.f32.mrb[0].mxu0
      %1560 = vdwg.mxu0
      %1561 = vmatprep.subr.mxu0 0.0
      %v1562 = vand.u32 %v881, 4294901760
      %1563 = vmatpush1.msra.mxu0 %v1562
      %1564 = vmatprep.subr.mxu0 0.0
      %v1565 = vand.u32 %v882, 4294901760
      %1566 = vmatpush1.msra.mxu0 %v1565
      %1567 = vmatprep.subr.mxu0 0.0
      %1568 = vmatpush1.msra.mxu0 0.0
      %1569 = vmatprep.subr.mxu0 0.0
      %1570 = vmatpush1.msra.mxu0 0.0
      %1571 = vmatprep.subr.mxu0 0.0
      %1572 = vmatpush1.msra.mxu0 0.0
      %1573 = vmatprep.subr.mxu0 0.0
      %1574 = vmatpush1.msra.mxu0 0.0
      %1575 = vmatprep.subr.mxu0 0.0
      %1576 = vmatpush1.msra.mxu0 0.0
      %1577 = vmatprep.subr.mxu0 0.0
      %1578 = vmatpush1.msra.mxu0 0.0
      %1579 = vmatprep.subr.mxu0 0.0
      %1580 = vmatpush1.msra.mxu0 0.0
      %1581 = vmatprep.subr.mxu0 0.0
      %1582 = vmatpush1.msra.mxu0 0.0
      %1583 = vmatprep.subr.mxu0 0.0
      %1584 = vmatpush1.msra.mxu0 0.0
      %1585 = vmatprep.subr.mxu0 0.0
      %1586 = vmatpush1.msra.mxu0 0.0
      %1587 = vmatprep.subr.mxu0 0.0
      %1588 = vmatpush1.msra.mxu0 0.0
      %1589 = vmatprep.subr.mxu0 0.0
      %1590 = vmatpush1.msra.mxu0 0.0
      %1591 = vmatprep.subr.mxu0 0.0
      %1592 = vmatpush1.msra.mxu0 0.0
      %1593 = vmatprep.subr.mxu0 0.0
      %1594 = vmatpush1.msra.mxu0 0.0
      %1595 = vmatprep.subr.mxu0 0.0
      %1596 = vmatpush1.msra.mxu0 0.0
      %1597 = vmatprep.subr.mxu0 0.0
      %1598 = vmatpush1.msra.mxu0 0.0
      %1599 = vmatprep.subr.mxu0 0.0
      %1600 = vmatpush1.msra.mxu0 0.0
      %1601 = vmatprep.subr.mxu0 0.0
      %1602 = vmatpush1.msra.mxu0 0.0
      %1603 = vmatprep.subr.mxu0 0.0
      %1604 = vmatpush1.msra.mxu0 0.0
      %1605 = vmatprep.subr.mxu0 0.0
      %1606 = vmatpush1.msra.mxu0 0.0
      %1607 = vmatprep.subr.mxu0 0.0
      %1608 = vmatpush1.msra.mxu0 0.0
      %1609 = vmatprep.subr.mxu0 0.0
      %1610 = vmatpush1.msra.mxu0 0.0
      %1611 = vmatprep.subr.mxu0 0.0
      %1612 = vmatpush1.msra.mxu0 0.0
      %1613 = vmatprep.subr.mxu0 0.0
      %1614 = vmatpush1.msra.mxu0 0.0
      %1615 = vmatprep.subr.mxu0 0.0
      %1616 = vmatpush1.msra.mxu0 0.0
      %1617 = vmatprep.subr.mxu0 0.0
      %1618 = vmatpush1.msra.mxu0 0.0
      %1619 = vmatprep.subr.mxu0 0.0
      %1620 = vmatpush1.msra.mxu0 0.0
      %1621 = vmatprep.subr.mxu0 0.0
      %1622 = vmatpush1.msra.mxu0 0.0
      %1623 = vmatprep.subr.mxu0 0.0
      %1624 = vmatpush1.msra.mxu0 0.0
      %1625 = vmatprep.subr.mxu0 0.0
      %1626 = vmatpush1.msra.mxu0 0.0
      %1627 = vmatprep.mubr.f32.mxu0 0.0
      %v1628 = vand.u32 %v893, 4294901760
      %1629 = vmatmul.mubr.f32.gmra.mrb[0].mxu0 %v1628
      %v1630 = vpop.f32.mrb[0].mxu0
      %v1631 = vadd.f32 %v1516, %v1630
      %v1632 = vpop.f32.mrb[0].mxu0
      %1633 = vmatprep.mubr.f32.mxu0 0.0
      %v1634 = vand.u32 %v896, 4294901760
      %1635 = vmatmul.mubr.f32.gmra.mrb[0].mxu0 %v1634
      %v1636 = vpop.f32.mrb[0].mxu0
      %v1637 = vadd.f32 %v1522, %v1636
      %v1638 = vpop.f32.mrb[0].mxu0
      %1639 = vmatprep.mubr.f32.mxu0 0.0
      %v1640 = vand.u32 %v899, 4294901760
      %1641 = vmatmul.mubr.f32.gmra.mrb[0].mxu0 %v1640
      %v1642 = vpop.f32.mrb[0].mxu0
      %v1643 = vadd.f32 %v1528, %v1642
      %v1644 = vpop.f32.mrb[0].mxu0
      %1645 = vmatprep.mubr.f32.mxu0 0.0
      %v1646 = vand.u32 %v902, 4294901760
      %1647 = vmatmul.mubr.f32.gmra.mrb[0].mxu0 %v1646
      %v1648 = vpop.f32.mrb[0].mxu0
      %v1649 = vadd.f32 %v1534, %v1648
      %v1650 = vpop.f32.mrb[0].mxu0
      %1651 = vmatprep.mubr.f32.mxu0 0.0
      %v1652 = vand.u32 %v905, 4294901760
      %1653 = vmatmul.mubr.f32.gmra.mrb[0].mxu0 %v1652
      %v1654 = vpop.f32.mrb[0].mxu0
      %v1655 = vadd.f32 %v1540, %v1654
      %v1656 = vpop.f32.mrb[0].mxu0
      %1657 = vmatprep.mubr.f32.mxu0 0.0
      %v1658 = vand.u32 %v908, 4294901760
      %1659 = vmatmul.mubr.f32.gmra.mrb[0].mxu0 %v1658
      %v1660 = vpop.f32.mrb[0].mxu0
      %v1661 = vadd.f32 %v1546, %v1660
      %v1662 = vpop.f32.mrb[0].mxu0
      %1663 = vmatprep.mubr.f32.mxu0 0.0
      %v1664 = vand.u32 %v911, 4294901760
      %1665 = vmatmul.mubr.f32.gmra.mrb[0].mxu0 %v1664
      %v1666 = vpop.f32.mrb[0].mxu0
      %v1667 = vadd.f32 %v1552, %v1666
      %v1668 = vpop.f32.mrb[0].mxu0
      %1669 = vmatprep.mubr.f32.mxu0 0.0
      %v1670 = vand.u32 %v914, 4294901760
      %1671 = vmatmul.mubr.f32.gmra.mrb[0].mxu0 %v1670
      %v1672 = vpop.f32.mrb[0].mxu0
      %v1673 = vadd.f32 %v1558, %v1672
      %v1674 = vpop.f32.mrb[0].mxu0
      %1675 = vdwg.mxu0
      %v1676 = vlaneseq
      %v1677 = vshrl.u32 %v1676, 7
      %v1678 = vsub.s32 0, %v1677
      %v1679 = vrot.slane %v281, %v1678
      %v1680 = vmul.f32 %v1631, %v1679
      %v1681 = vmul.f32 %v1637, %v1679
      %v1682 = vmul.f32 %v1643, %v1679
      %v1683 = vmul.f32 %v1649, %v1679
      %v1684 = vmul.f32 %v1655, %v1679
      %v1685 = vmul.f32 %v1661, %v1679
      %v1686 = vmul.f32 %v1667, %v1679
      %v1687 = vmul.f32 %v1673, %v1679
      %v1688 = vadd.f32 %v1680, %v284
      %v1689 = vadd.f32 %v1681, %v285
      %v1690 = vadd.f32 %v1682, %v286
      %v1691 = vadd.f32 %v1683, %v287
      %v1692 = vadd.f32 %v1684, %v288
      %v1693 = vadd.f32 %v1685, %v289
      %v1694 = vadd.f32 %v1686, %v290
      %v1695 = vadd.f32 %v1687, %v291
      %v1696 = vmul.f32 %v1688, 0.5
      %v1697 = vmul.f32 %v1689, 0.5
      %v1698 = vmul.f32 %v1690, 0.5
      %v1699 = vmul.f32 %v1691, 0.5
      %v1700 = vmul.f32 %v1692, 0.5
      %v1701 = vmul.f32 %v1693, 0.5
      %v1702 = vmul.f32 %v1694, 0.5
      %v1703 = vmul.f32 %v1695, 0.5
      %v1704 = vmul.f32 %v1688, 0.70710677
      %v1705 = vmul.f32 %v1689, 0.70710677
      %v1706 = vmul.f32 %v1690, 0.70710677
      %v1707 = vmul.f32 %v1691, 0.70710677
      %v1708 = vmul.f32 %v1692, 0.70710677
      %v1709 = vmul.f32 %v1693, 0.70710677
      %v1710 = vmul.f32 %v1694, 0.70710677
      %v1711 = vmul.f32 %v1695, 0.70710677
      %v1712 = verf.f32.pop %v1704
      %v1713 = verf.f32.pop %v1705
      %v1714 = verf.f32.pop %v1706
      %v1715 = verf.f32.pop %v1707
      %v1716 = verf.f32.pop %v1708
      %v1717 = verf.f32.pop %v1709
      %v1718 = verf.f32.pop %v1710
      %v1719 = verf.f32.pop %v1711
      %v1720 = vadd.f32 %v1712, 1.0
      %v1721 = vadd.f32 %v1713, 1.0
      %v1722 = vadd.f32 %v1714, 1.0
      %v1723 = vadd.f32 %v1715, 1.0
      %v1724 = vadd.f32 %v1716, 1.0
      %v1725 = vadd.f32 %v1717, 1.0
      %v1726 = vadd.f32 %v1718, 1.0
      %v1727 = vadd.f32 %v1719, 1.0
      %v1728 = vmul.f32 %v1696, %v1720
      %v1729 = vmul.f32 %v1697, %v1721
      %v1730 = vmul.f32 %v1698, %v1722
      %v1731 = vmul.f32 %v1699, %v1723
      %v1732 = vmul.f32 %v1700, %v1724
      %v1733 = vmul.f32 %v1701, %v1725
      %v1734 = vmul.f32 %v1702, %v1726
      %v1735 = vmul.f32 %v1703, %v1727
      %v1736 = vld [vmem:[%s2] sm:$0xff]
      %v1737 = vld [vmem:[%s2 + $0x8] sm:$0xff]
      %v1739 = vsel %vm296, %v1736, 0
      %v1742 = vsel %vm296, %v1737, 0
      %1744 = vmatprep.subr.mxu0 0.0
      %v1745 = vand.u32 %v1728, 4294901760
      %1746 = vmatpush1.msra.mxu0 %v1745
      %1747 = vmatprep.subr.mxu0 0.0
      %v1748 = vand.u32 %v1729, 4294901760
      %1749 = vmatpush1.msra.mxu0 %v1748
      %1750 = vmatprep.subr.mxu0 0.0
      %v1751 = vand.u32 %v1730, 4294901760
      %1752 = vmatpush1.msra.mxu0 %v1751
      %1753 = vmatprep.subr.mxu0 0.0
      %v1754 = vand.u32 %v1731, 4294901760
      %1755 = vmatpush1.msra.mxu0 %v1754
      %1756 = vmatprep.subr.mxu0 0.0
      %v1757 = vand.u32 %v1732, 4294901760
      %1758 = vmatpush1.msra.mxu0 %v1757
      %1759 = vmatprep.subr.mxu0 0.0
      %v1760 = vand.u32 %v1733, 4294901760
      %1761 = vmatpush1.msra.mxu0 %v1760
      %1762 = vmatprep.subr.mxu0 0.0
      %v1763 = vand.u32 %v1734, 4294901760
      %1764 = vmatpush1.msra.mxu0 %v1763
      %1765 = vmatprep.subr.mxu0 0.0
      %v1766 = vand.u32 %v1735, 4294901760
      %1767 = vmatpush1.msra.mxu0 %v1766
      %1768 = vmatprep.subr.mxu0 0.0
      %1769 = vmatpush1.msra.mxu0 0.0
      %1770 = vmatprep.subr.mxu0 0.0
      %1771 = vmatpush1.msra.mxu0 0.0
      %1772 = vmatprep.subr.mxu0 0.0
      %1773 = vmatpush1.msra.mxu0 0.0
      %1774 = vmatprep.subr.mxu0 0.0
      %1775 = vmatpush1.msra.mxu0 0.0
      %1776 = vmatprep.subr.mxu0 0.0
      %1777 = vmatpush1.msra.mxu0 0.0
      %1778 = vmatprep.subr.mxu0 0.0
      %1779 = vmatpush1.msra.mxu0 0.0
      %1780 = vmatprep.subr.mxu0 0.0
      %1781 = vmatpush1.msra.mxu0 0.0
      %1782 = vmatprep.subr.mxu0 0.0
      %1783 = vmatpush1.msra.mxu0 0.0
      %1784 = vmatprep.subr.mxu0 0.0
      %1785 = vmatpush1.msra.mxu0 0.0
      %1786 = vmatprep.subr.mxu0 0.0
      %1787 = vmatpush1.msra.mxu0 0.0
      %1788 = vmatprep.subr.mxu0 0.0
      %1789 = vmatpush1.msra.mxu0 0.0
      %1790 = vmatprep.subr.mxu0 0.0
      %1791 = vmatpush1.msra.mxu0 0.0
      %1792 = vmatprep.subr.mxu0 0.0
      %1793 = vmatpush1.msra.mxu0 0.0
      %1794 = vmatprep.subr.mxu0 0.0
      %1795 = vmatpush1.msra.mxu0 0.0
      %1796 = vmatprep.subr.mxu0 0.0
      %1797 = vmatpush1.msra.mxu0 0.0
      %1798 = vmatprep.subr.mxu0 0.0
      %1799 = vmatpush1.msra.mxu0 0.0
      %1800 = vmatprep.subr.mxu0 0.0
      %1801 = vmatpush1.msra.mxu0 0.0
      %1802 = vmatprep.subr.mxu0 0.0
      %1803 = vmatpush1.msra.mxu0 0.0
      %1804 = vmatprep.subr.mxu0 0.0
      %1805 = vmatpush1.msra.mxu0 0.0
      %1806 = vmatprep.subr.mxu0 0.0
      %1807 = vmatpush1.msra.mxu0 0.0
      %1808 = vmatprep.subr.mxu0 0.0
      %1809 = vmatpush1.msra.mxu0 0.0
      %1810 = vmatprep.subr.mxu0 0.0
      %1811 = vmatpush1.msra.mxu0 0.0
      %1812 = vmatprep.subr.mxu0 0.0
      %1813 = vmatpush1.msra.mxu0 0.0
      %1814 = vmatprep.subr.mxu0 0.0
      %1815 = vmatpush1.msra.mxu0 0.0
      %1816 = vmatprep.mubr.f32.mxu0 0.0
      %v1817 = vand.u32 %v1739, 4294901760
      %v1818 = vsub.f32 %v1739, %v1817
      %v1819 = vand.u32 %v1818, 4294901760
      %v1820 = vsub.f32 %v1818, %v1819
      %v1821 = vand.u32 %v1820, 4294901760
      %1822 = vmatmul.mubr.f32.gmra.mrb[0].mxu0 %v1821
      %v1823 = vpop.f32.mrb[0].mxu0
      %v1824 = vadd.f32 %v292, %v1823
      %v1825 = vpop.f32.mrb[0].mxu0
      %1826 = vmatprep.mubr.f32.mxu0 0.0
      %v1827 = vand.u32 %v1742, 4294901760
      %v1828 = vsub.f32 %v1742, %v1827
      %v1829 = vand.u32 %v1828, 4294901760
      %v1830 = vsub.f32 %v1828, %v1829
      %v1831 = vand.u32 %v1830, 4294901760
      %1832 = vmatmul.mubr.f32.gmra.mrb[0].mxu0 %v1831
      %v1833 = vpop.f32.mrb[0].mxu0
      %v1834 = vadd.f32 %v293, %v1833
      %v1835 = vpop.f32.mrb[0].mxu0
      %1836 = vdwg.mxu0
      %1837 = vmatprep.subr.mxu0 0.0
      %v1838 = vand.u32 %v1728, 4294901760
      %v1839 = vsub.f32 %v1728, %v1838
      %v1840 = vand.u32 %v1839, 4294901760
      %v1841 = vsub.f32 %v1839, %v1840
      %v1842 = vand.u32 %v1841, 4294901760
      %1843 = vmatpush1.msra.mxu0 %v1842
      %1844 = vmatprep.subr.mxu0 0.0
      %v1845 = vand.u32 %v1729, 4294901760
      %v1846 = vsub.f32 %v1729, %v1845
      %v1847 = vand.u32 %v1846, 4294901760
      %v1848 = vsub.f32 %v1846, %v1847
      %v1849 = vand.u32 %v1848, 4294901760
      %1850 = vmatpush1.msra.mxu0 %v1849
      %1851 = vmatprep.subr.mxu0 0.0
      %v1852 = vand.u32 %v1730, 4294901760
      %v1853 = vsub.f32 %v1730, %v1852
      %v1854 = vand.u32 %v1853, 4294901760
      %v1855 = vsub.f32 %v1853, %v1854
      %v1856 = vand.u32 %v1855, 4294901760
      %1857 = vmatpush1.msra.mxu0 %v1856
      %1858 = vmatprep.subr.mxu0 0.0
      %v1859 = vand.u32 %v1731, 4294901760
      %v1860 = vsub.f32 %v1731, %v1859
      %v1861 = vand.u32 %v1860, 4294901760
      %v1862 = vsub.f32 %v1860, %v1861
      %v1863 = vand.u32 %v1862, 4294901760
      %1864 = vmatpush1.msra.mxu0 %v1863
      %1865 = vmatprep.subr.mxu0 0.0
      %v1866 = vand.u32 %v1732, 4294901760
      %v1867 = vsub.f32 %v1732, %v1866
      %v1868 = vand.u32 %v1867, 4294901760
      %v1869 = vsub.f32 %v1867, %v1868
      %v1870 = vand.u32 %v1869, 4294901760
      %1871 = vmatpush1.msra.mxu0 %v1870
      %1872 = vmatprep.subr.mxu0 0.0
      %v1873 = vand.u32 %v1733, 4294901760
      %v1874 = vsub.f32 %v1733, %v1873
      %v1875 = vand.u32 %v1874, 4294901760
      %v1876 = vsub.f32 %v1874, %v1875
      %v1877 = vand.u32 %v1876, 4294901760
      %1878 = vmatpush1.msra.mxu0 %v1877
      %1879 = vmatprep.subr.mxu0 0.0
      %v1880 = vand.u32 %v1734, 4294901760
      %v1881 = vsub.f32 %v1734, %v1880
      %v1882 = vand.u32 %v1881, 4294901760
      %v1883 = vsub.f32 %v1881, %v1882
      %v1884 = vand.u32 %v1883, 4294901760
      %1885 = vmatpush1.msra.mxu0 %v1884
      %1886 = vmatprep.subr.mxu0 0.0
      %v1887 = vand.u32 %v1735, 4294901760
      %v1888 = vsub.f32 %v1735, %v1887
      %v1889 = vand.u32 %v1888, 4294901760
      %v1890 = vsub.f32 %v1888, %v1889
      %v1891 = vand.u32 %v1890, 4294901760
      %1892 = vmatpush1.msra.mxu0 %v1891
      %1893 = vmatprep.subr.mxu0 0.0
      %1894 = vmatpush1.msra.mxu0 0.0
      %1895 = vmatprep.subr.mxu0 0.0
      %1896 = vmatpush1.msra.mxu0 0.0
      %1897 = vmatprep.subr.mxu0 0.0
      %1898 = vmatpush1.msra.mxu0 0.0
      %1899 = vmatprep.subr.mxu0 0.0
      %1900 = vmatpush1.msra.mxu0 0.0
      %1901 = vmatprep.subr.mxu0 0.0
      %1902 = vmatpush1.msra.mxu0 0.0
      %1903 = vmatprep.subr.mxu0 0.0
      %1904 = vmatpush1.msra.mxu0 0.0
      %1905 = vmatprep.subr.mxu0 0.0
      %1906 = vmatpush1.msra.mxu0 0.0
      %1907 = vmatprep.subr.mxu0 0.0
      %1908 = vmatpush1.msra.mxu0 0.0
      %1909 = vmatprep.subr.mxu0 0.0
      %1910 = vmatpush1.msra.mxu0 0.0
      %1911 = vmatprep.subr.mxu0 0.0
      %1912 = vmatpush1.msra.mxu0 0.0
      %1913 = vmatprep.subr.mxu0 0.0
      %1914 = vmatpush1.msra.mxu0 0.0
      %1915 = vmatprep.subr.mxu0 0.0
      %1916 = vmatpush1.msra.mxu0 0.0
      %1917 = vmatprep.subr.mxu0 0.0
      %1918 = vmatpush1.msra.mxu0 0.0
      %1919 = vmatprep.subr.mxu0 0.0
      %1920 = vmatpush1.msra.mxu0 0.0
      %1921 = vmatprep.subr.mxu0 0.0
      %1922 = vmatpush1.msra.mxu0 0.0
      %1923 = vmatprep.subr.mxu0 0.0
      %1924 = vmatpush1.msra.mxu0 0.0
      %1925 = vmatprep.subr.mxu0 0.0
      %1926 = vmatpush1.msra.mxu0 0.0
      %1927 = vmatprep.subr.mxu0 0.0
      %1928 = vmatpush1.msra.mxu0 0.0
      %1929 = vmatprep.subr.mxu0 0.0
      %1930 = vmatpush1.msra.mxu0 0.0
      %1931 = vmatprep.subr.mxu0 0.0
      %1932 = vmatpush1.msra.mxu0 0.0
      %1933 = vmatprep.subr.mxu0 0.0
      %1934 = vmatpush1.msra.mxu0 0.0
      %1935 = vmatprep.subr.mxu0 0.0
      %1936 = vmatpush1.msra.mxu0 0.0
      %1937 = vmatprep.subr.mxu0 0.0
      %1938 = vmatpush1.msra.mxu0 0.0
      %1939 = vmatprep.subr.mxu0 0.0
      %1940 = vmatpush1.msra.mxu0 0.0
      %1941 = vmatprep.mubr.f32.mxu0 0.0
      %v1942 = vand.u32 %v1739, 4294901760
      %1943 = vmatmul.mubr.f32.gmra.mrb[0].mxu0 %v1942
      %v1944 = vpop.f32.mrb[0].mxu0
      %v1945 = vadd.f32 %v1824, %v1944
      %v1946 = vpop.f32.mrb[0].mxu0
      %1947 = vmatprep.mubr.f32.mxu0 0.0
      %v1948 = vand.u32 %v1742, 4294901760
      %1949 = vmatmul.mubr.f32.gmra.mrb[0].mxu0 %v1948
      %v1950 = vpop.f32.mrb[0].mxu0
      %v1951 = vadd.f32 %v1834, %v1950
      %v1952 = vpop.f32.mrb[0].mxu0
      %1953 = vdwg.mxu0
      %1954 = vmatprep.subr.mxu0 0.0
      %v1955 = vand.u32 %v1728, 4294901760
      %v1956 = vsub.f32 %v1728, %v1955
      %1957 = vmatpush1.msra.mxu0 %v1956
      %1958 = vmatprep.subr.mxu0 0.0
      %v1959 = vand.u32 %v1729, 4294901760
      %v1960 = vsub.f32 %v1729, %v1959
      %1961 = vmatpush1.msra.mxu0 %v1960
      %1962 = vmatprep.subr.mxu0 0.0
      %v1963 = vand.u32 %v1730, 4294901760
      %v1964 = vsub.f32 %v1730, %v1963
      %1965 = vmatpush1.msra.mxu0 %v1964
      %1966 = vmatprep.subr.mxu0 0.0
      %v1967 = vand.u32 %v1731, 4294901760
      %v1968 = vsub.f32 %v1731, %v1967
      %1969 = vmatpush1.msra.mxu0 %v1968
      %1970 = vmatprep.subr.mxu0 0.0
      %v1971 = vand.u32 %v1732, 4294901760
      %v1972 = vsub.f32 %v1732, %v1971
      %1973 = vmatpush1.msra.mxu0 %v1972
      %1974 = vmatprep.subr.mxu0 0.0
      %v1975 = vand.u32 %v1733, 4294901760
      %v1976 = vsub.f32 %v1733, %v1975
      %1977 = vmatpush1.msra.mxu0 %v1976
      %1978 = vmatprep.subr.mxu0 0.0
      %v1979 = vand.u32 %v1734, 4294901760
      %v1980 = vsub.f32 %v1734, %v1979
      %1981 = vmatpush1.msra.mxu0 %v1980
      %1982 = vmatprep.subr.mxu0 0.0
      %v1983 = vand.u32 %v1735, 4294901760
      %v1984 = vsub.f32 %v1735, %v1983
      %1985 = vmatpush1.msra.mxu0 %v1984
      %1986 = vmatprep.subr.mxu0 0.0
      %1987 = vmatpush1.msra.mxu0 0.0
      %1988 = vmatprep.subr.mxu0 0.0
      %1989 = vmatpush1.msra.mxu0 0.0
      %1990 = vmatprep.subr.mxu0 0.0
      %1991 = vmatpush1.msra.mxu0 0.0
      %1992 = vmatprep.subr.mxu0 0.0
      %1993 = vmatpush1.msra.mxu0 0.0
      %1994 = vmatprep.subr.mxu0 0.0
      %1995 = vmatpush1.msra.mxu0 0.0
      %1996 = vmatprep.subr.mxu0 0.0
      %1997 = vmatpush1.msra.mxu0 0.0
      %1998 = vmatprep.subr.mxu0 0.0
      %1999 = vmatpush1.msra.mxu0 0.0
      %2000 = vmatprep.subr.mxu0 0.0
      %2001 = vmatpush1.msra.mxu0 0.0
      %2002 = vmatprep.subr.mxu0 0.0
      %2003 = vmatpush1.msra.mxu0 0.0
      %2004 = vmatprep.subr.mxu0 0.0
      %2005 = vmatpush1.msra.mxu0 0.0
      %2006 = vmatprep.subr.mxu0 0.0
      %2007 = vmatpush1.msra.mxu0 0.0
      %2008 = vmatprep.subr.mxu0 0.0
      %2009 = vmatpush1.msra.mxu0 0.0
      %2010 = vmatprep.subr.mxu0 0.0
      %2011 = vmatpush1.msra.mxu0 0.0
      %2012 = vmatprep.subr.mxu0 0.0
      %2013 = vmatpush1.msra.mxu0 0.0
      %2014 = vmatprep.subr.mxu0 0.0
      %2015 = vmatpush1.msra.mxu0 0.0
      %2016 = vmatprep.subr.mxu0 0.0
      %2017 = vmatpush1.msra.mxu0 0.0
      %2018 = vmatprep.subr.mxu0 0.0
      %2019 = vmatpush1.msra.mxu0 0.0
      %2020 = vmatprep.subr.mxu0 0.0
      %2021 = vmatpush1.msra.mxu0 0.0
      %2022 = vmatprep.subr.mxu0 0.0
      %2023 = vmatpush1.msra.mxu0 0.0
      %2024 = vmatprep.subr.mxu0 0.0
      %2025 = vmatpush1.msra.mxu0 0.0
      %2026 = vmatprep.subr.mxu0 0.0
      %2027 = vmatpush1.msra.mxu0 0.0
      %2028 = vmatprep.subr.mxu0 0.0
      %2029 = vmatpush1.msra.mxu0 0.0
      %2030 = vmatprep.subr.mxu0 0.0
      %2031 = vmatpush1.msra.mxu0 0.0
      %2032 = vmatprep.subr.mxu0 0.0
      %2033 = vmatpush1.msra.mxu0 0.0
      %2034 = vmatprep.mubr.f32.mxu0 0.0
      %v2035 = vand.u32 %v1739, 4294901760
      %v2036 = vsub.f32 %v1739, %v2035
      %2037 = vmatmul.mubr.f32.gmra.mrb[0].mxu0 %v2036
      %v2038 = vpop.f32.mrb[0].mxu0
      %v2039 = vadd.f32 %v1945, %v2038
      %v2040 = vpop.f32.mrb[0].mxu0
      %2041 = vmatprep.mubr.f32.mxu0 0.0
      %v2042 = vand.u32 %v1742, 4294901760
      %v2043 = vsub.f32 %v1742, %v2042
      %2044 = vmatmul.mubr.f32.gmra.mrb[0].mxu0 %v2043
      %v2045 = vpop.f32.mrb[0].mxu0
      %v2046 = vadd.f32 %v1951, %v2045
      %v2047 = vpop.f32.mrb[0].mxu0
      %2048 = vdwg.mxu0
      %2049 = vmatprep.subr.mxu0 0.0
      %v2050 = vand.u32 %v1728, 4294901760
      %2051 = vmatpush1.msra.mxu0 %v2050
      %2052 = vmatprep.subr.mxu0 0.0
      %v2053 = vand.u32 %v1729, 4294901760
      %2054 = vmatpush1.msra.mxu0 %v2053
      %2055 = vmatprep.subr.mxu0 0.0
      %v2056 = vand.u32 %v1730, 4294901760
      %2057 = vmatpush1.msra.mxu0 %v2056
      %2058 = vmatprep.subr.mxu0 0.0
      %v2059 = vand.u32 %v1731, 4294901760
      %2060 = vmatpush1.msra.mxu0 %v2059
      %2061 = vmatprep.subr.mxu0 0.0
      %v2062 = vand.u32 %v1732, 4294901760
      %2063 = vmatpush1.msra.mxu0 %v2062
      %2064 = vmatprep.subr.mxu0 0.0
      %v2065 = vand.u32 %v1733, 4294901760
      %2066 = vmatpush1.msra.mxu0 %v2065
      %2067 = vmatprep.subr.mxu0 0.0
      %v2068 = vand.u32 %v1734, 4294901760
      %2069 = vmatpush1.msra.mxu0 %v2068
      %2070 = vmatprep.subr.mxu0 0.0
      %v2071 = vand.u32 %v1735, 4294901760
      %2072 = vmatpush1.msra.mxu0 %v2071
      %2073 = vmatprep.subr.mxu0 0.0
      %2074 = vmatpush1.msra.mxu0 0.0
      %2075 = vmatprep.subr.mxu0 0.0
      %2076 = vmatpush1.msra.mxu0 0.0
      %2077 = vmatprep.subr.mxu0 0.0
      %2078 = vmatpush1.msra.mxu0 0.0
      %2079 = vmatprep.subr.mxu0 0.0
      %2080 = vmatpush1.msra.mxu0 0.0
      %2081 = vmatprep.subr.mxu0 0.0
      %2082 = vmatpush1.msra.mxu0 0.0
      %2083 = vmatprep.subr.mxu0 0.0
      %2084 = vmatpush1.msra.mxu0 0.0
      %2085 = vmatprep.subr.mxu0 0.0
      %2086 = vmatpush1.msra.mxu0 0.0
      %2087 = vmatprep.subr.mxu0 0.0
      %2088 = vmatpush1.msra.mxu0 0.0
      %2089 = vmatprep.subr.mxu0 0.0
      %2090 = vmatpush1.msra.mxu0 0.0
      %2091 = vmatprep.subr.mxu0 0.0
      %2092 = vmatpush1.msra.mxu0 0.0
      %2093 = vmatprep.subr.mxu0 0.0
      %2094 = vmatpush1.msra.mxu0 0.0
      %2095 = vmatprep.subr.mxu0 0.0
      %2096 = vmatpush1.msra.mxu0 0.0
      %2097 = vmatprep.subr.mxu0 0.0
      %2098 = vmatpush1.msra.mxu0 0.0
      %2099 = vmatprep.subr.mxu0 0.0
      %2100 = vmatpush1.msra.mxu0 0.0
      %2101 = vmatprep.subr.mxu0 0.0
      %2102 = vmatpush1.msra.mxu0 0.0
      %2103 = vmatprep.subr.mxu0 0.0
      %2104 = vmatpush1.msra.mxu0 0.0
      %2105 = vmatprep.subr.mxu0 0.0
      %2106 = vmatpush1.msra.mxu0 0.0
      %2107 = vmatprep.subr.mxu0 0.0
      %2108 = vmatpush1.msra.mxu0 0.0
      %2109 = vmatprep.subr.mxu0 0.0
      %2110 = vmatpush1.msra.mxu0 0.0
      %2111 = vmatprep.subr.mxu0 0.0
      %2112 = vmatpush1.msra.mxu0 0.0
      %2113 = vmatprep.subr.mxu0 0.0
      %2114 = vmatpush1.msra.mxu0 0.0
      %2115 = vmatprep.subr.mxu0 0.0
      %2116 = vmatpush1.msra.mxu0 0.0
      %2117 = vmatprep.subr.mxu0 0.0
      %2118 = vmatpush1.msra.mxu0 0.0
      %2119 = vmatprep.subr.mxu0 0.0
      %2120 = vmatpush1.msra.mxu0 0.0
      %2121 = vmatprep.mubr.f32.mxu0 0.0
      %v2122 = vand.u32 %v1739, 4294901760
      %v2123 = vsub.f32 %v1739, %v2122
      %v2124 = vand.u32 %v2123, 4294901760
      %2125 = vmatmul.mubr.f32.gmra.mrb[0].mxu0 %v2124
      %v2126 = vpop.f32.mrb[0].mxu0
      %v2127 = vadd.f32 %v2039, %v2126
      %v2128 = vpop.f32.mrb[0].mxu0
      %2129 = vmatprep.mubr.f32.mxu0 0.0
      %v2130 = vand.u32 %v1742, 4294901760
      %v2131 = vsub.f32 %v1742, %v2130
      %v2132 = vand.u32 %v2131, 4294901760
      %2133 = vmatmul.mubr.f32.gmra.mrb[0].mxu0 %v2132
      %v2134 = vpop.f32.mrb[0].mxu0
      %v2135 = vadd.f32 %v2046, %v2134
      %v2136 = vpop.f32.mrb[0].mxu0
      %2137 = vdwg.mxu0
      %2138 = vmatprep.subr.mxu0 0.0
      %v2139 = vand.u32 %v1728, 4294901760
      %v2140 = vsub.f32 %v1728, %v2139
      %v2141 = vand.u32 %v2140, 4294901760
      %2142 = vmatpush1.msra.mxu0 %v2141
      %2143 = vmatprep.subr.mxu0 0.0
      %v2144 = vand.u32 %v1729, 4294901760
      %v2145 = vsub.f32 %v1729, %v2144
      %v2146 = vand.u32 %v2145, 4294901760
      %2147 = vmatpush1.msra.mxu0 %v2146
      %2148 = vmatprep.subr.mxu0 0.0
      %v2149 = vand.u32 %v1730, 4294901760
      %v2150 = vsub.f32 %v1730, %v2149
      %v2151 = vand.u32 %v2150, 4294901760
      %2152 = vmatpush1.msra.mxu0 %v2151
      %2153 = vmatprep.subr.mxu0 0.0
      %v2154 = vand.u32 %v1731, 4294901760
      %v2155 = vsub.f32 %v1731, %v2154
      %v2156 = vand.u32 %v2155, 4294901760
      %2157 = vmatpush1.msra.mxu0 %v2156
      %2158 = vmatprep.subr.mxu0 0.0
      %v2159 = vand.u32 %v1732, 4294901760
      %v2160 = vsub.f32 %v1732, %v2159
      %v2161 = vand.u32 %v2160, 4294901760
      %2162 = vmatpush1.msra.mxu0 %v2161
      %2163 = vmatprep.subr.mxu0 0.0
      %v2164 = vand.u32 %v1733, 4294901760
      %v2165 = vsub.f32 %v1733, %v2164
      %v2166 = vand.u32 %v2165, 4294901760
      %2167 = vmatpush1.msra.mxu0 %v2166
      %2168 = vmatprep.subr.mxu0 0.0
      %v2169 = vand.u32 %v1734, 4294901760
      %v2170 = vsub.f32 %v1734, %v2169
      %v2171 = vand.u32 %v2170, 4294901760
      %2172 = vmatpush1.msra.mxu0 %v2171
      %2173 = vmatprep.subr.mxu0 0.0
      %v2174 = vand.u32 %v1735, 4294901760
      %v2175 = vsub.f32 %v1735, %v2174
      %v2176 = vand.u32 %v2175, 4294901760
      %2177 = vmatpush1.msra.mxu0 %v2176
      %2178 = vmatprep.subr.mxu0 0.0
      %2179 = vmatpush1.msra.mxu0 0.0
      %2180 = vmatprep.subr.mxu0 0.0
      %2181 = vmatpush1.msra.mxu0 0.0
      %2182 = vmatprep.subr.mxu0 0.0
      %2183 = vmatpush1.msra.mxu0 0.0
      %2184 = vmatprep.subr.mxu0 0.0
      %2185 = vmatpush1.msra.mxu0 0.0
      %2186 = vmatprep.subr.mxu0 0.0
      %2187 = vmatpush1.msra.mxu0 0.0
      %2188 = vmatprep.subr.mxu0 0.0
      %2189 = vmatpush1.msra.mxu0 0.0
      %2190 = vmatprep.subr.mxu0 0.0
      %2191 = vmatpush1.msra.mxu0 0.0
      %2192 = vmatprep.subr.mxu0 0.0
      %2193 = vmatpush1.msra.mxu0 0.0
      %2194 = vmatprep.subr.mxu0 0.0
      %2195 = vmatpush1.msra.mxu0 0.0
      %2196 = vmatprep.subr.mxu0 0.0
      %2197 = vmatpush1.msra.mxu0 0.0
      %2198 = vmatprep.subr.mxu0 0.0
      %2199 = vmatpush1.msra.mxu0 0.0
      %2200 = vmatprep.subr.mxu0 0.0
      %2201 = vmatpush1.msra.mxu0 0.0
      %2202 = vmatprep.subr.mxu0 0.0
      %2203 = vmatpush1.msra.mxu0 0.0
      %2204 = vmatprep.subr.mxu0 0.0
      %2205 = vmatpush1.msra.mxu0 0.0
      %2206 = vmatprep.subr.mxu0 0.0
      %2207 = vmatpush1.msra.mxu0 0.0
      %2208 = vmatprep.subr.mxu0 0.0
      %2209 = vmatpush1.msra.mxu0 0.0
      %2210 = vmatprep.subr.mxu0 0.0
      %2211 = vmatpush1.msra.mxu0 0.0
      %2212 = vmatprep.subr.mxu0 0.0
      %2213 = vmatpush1.msra.mxu0 0.0
      %2214 = vmatprep.subr.mxu0 0.0
      %2215 = vmatpush1.msra.mxu0 0.0
      %2216 = vmatprep.subr.mxu0 0.0
      %2217 = vmatpush1.msra.mxu0 0.0
      %2218 = vmatprep.subr.mxu0 0.0
      %2219 = vmatpush1.msra.mxu0 0.0
      %2220 = vmatprep.subr.mxu0 0.0
      %2221 = vmatpush1.msra.mxu0 0.0
      %2222 = vmatprep.subr.mxu0 0.0
      %2223 = vmatpush1.msra.mxu0 0.0
      %2224 = vmatprep.subr.mxu0 0.0
      %2225 = vmatpush1.msra.mxu0 0.0
      %2226 = vmatprep.mubr.f32.mxu0 0.0
      %v2227 = vand.u32 %v1739, 4294901760
      %2228 = vmatmul.mubr.f32.gmra.mrb[0].mxu0 %v2227
      %v2229 = vpop.f32.mrb[0].mxu0
      %v2230 = vadd.f32 %v2127, %v2229
      %v2231 = vpop.f32.mrb[0].mxu0
      %2232 = vmatprep.mubr.f32.mxu0 0.0
      %v2233 = vand.u32 %v1742, 4294901760
      %2234 = vmatmul.mubr.f32.gmra.mrb[0].mxu0 %v2233
      %v2235 = vpop.f32.mrb[0].mxu0
      %v2236 = vadd.f32 %v2135, %v2235
      %v2237 = vpop.f32.mrb[0].mxu0
      %2238 = vdwg.mxu0
      %2239 = vmatprep.subr.mxu0 0.0
      %v2240 = vand.u32 %v1728, 4294901760
      %2241 = vmatpush1.msra.mxu0 %v2240
      %2242 = vmatprep.subr.mxu0 0.0
      %v2243 = vand.u32 %v1729, 4294901760
      %2244 = vmatpush1.msra.mxu0 %v2243
      %2245 = vmatprep.subr.mxu0 0.0
      %v2246 = vand.u32 %v1730, 4294901760
      %2247 = vmatpush1.msra.mxu0 %v2246
      %2248 = vmatprep.subr.mxu0 0.0
      %v2249 = vand.u32 %v1731, 4294901760
      %2250 = vmatpush1.msra.mxu0 %v2249
      %2251 = vmatprep.subr.mxu0 0.0
      %v2252 = vand.u32 %v1732, 4294901760
      %2253 = vmatpush1.msra.mxu0 %v2252
      %2254 = vmatprep.subr.mxu0 0.0
      %v2255 = vand.u32 %v1733, 4294901760
      %2256 = vmatpush1.msra.mxu0 %v2255
      %2257 = vmatprep.subr.mxu0 0.0
      %v2258 = vand.u32 %v1734, 4294901760
      %2259 = vmatpush1.msra.mxu0 %v2258
      %2260 = vmatprep.subr.mxu0 0.0
      %v2261 = vand.u32 %v1735, 4294901760
      %2262 = vmatpush1.msra.mxu0 %v2261
      %2263 = vmatprep.subr.mxu0 0.0
      %2264 = vmatpush1.msra.mxu0 0.0
      %2265 = vmatprep.subr.mxu0 0.0
      %2266 = vmatpush1.msra.mxu0 0.0
      %2267 = vmatprep.subr.mxu0 0.0
      %2268 = vmatpush1.msra.mxu0 0.0
      %2269 = vmatprep.subr.mxu0 0.0
      %2270 = vmatpush1.msra.mxu0 0.0
      %2271 = vmatprep.subr.mxu0 0.0
      %2272 = vmatpush1.msra.mxu0 0.0
      %2273 = vmatprep.subr.mxu0 0.0
      %2274 = vmatpush1.msra.mxu0 0.0
      %2275 = vmatprep.subr.mxu0 0.0
      %2276 = vmatpush1.msra.mxu0 0.0
      %2277 = vmatprep.subr.mxu0 0.0
      %2278 = vmatpush1.msra.mxu0 0.0
      %2279 = vmatprep.subr.mxu0 0.0
      %2280 = vmatpush1.msra.mxu0 0.0
      %2281 = vmatprep.subr.mxu0 0.0
      %2282 = vmatpush1.msra.mxu0 0.0
      %2283 = vmatprep.subr.mxu0 0.0
      %2284 = vmatpush1.msra.mxu0 0.0
      %2285 = vmatprep.subr.mxu0 0.0
      %2286 = vmatpush1.msra.mxu0 0.0
      %2287 = vmatprep.subr.mxu0 0.0
      %2288 = vmatpush1.msra.mxu0 0.0
      %2289 = vmatprep.subr.mxu0 0.0
      %2290 = vmatpush1.msra.mxu0 0.0
      %2291 = vmatprep.subr.mxu0 0.0
      %2292 = vmatpush1.msra.mxu0 0.0
      %2293 = vmatprep.subr.mxu0 0.0
      %2294 = vmatpush1.msra.mxu0 0.0
      %2295 = vmatprep.subr.mxu0 0.0
      %2296 = vmatpush1.msra.mxu0 0.0
      %2297 = vmatprep.subr.mxu0 0.0
      %2298 = vmatpush1.msra.mxu0 0.0
      %2299 = vmatprep.subr.mxu0 0.0
      %2300 = vmatpush1.msra.mxu0 0.0
      %2301 = vmatprep.subr.mxu0 0.0
      %2302 = vmatpush1.msra.mxu0 0.0
      %2303 = vmatprep.subr.mxu0 0.0
      %2304 = vmatpush1.msra.mxu0 0.0
      %2305 = vmatprep.subr.mxu0 0.0
      %2306 = vmatpush1.msra.mxu0 0.0
      %2307 = vmatprep.subr.mxu0 0.0
      %2308 = vmatpush1.msra.mxu0 0.0
      %2309 = vmatprep.subr.mxu0 0.0
      %2310 = vmatpush1.msra.mxu0 0.0
      %2311 = vmatprep.mubr.f32.mxu0 0.0
      %v2312 = vand.u32 %v1739, 4294901760
      %2313 = vmatmul.mubr.f32.gmra.mrb[0].mxu0 %v2312
      %v2314 = vpop.f32.mrb[0].mxu0
      %v2315 = vadd.f32 %v2230, %v2314
      %v2316 = vpop.f32.mrb[0].mxu0
      %2317 = vmatprep.mubr.f32.mxu0 0.0
      %v2318 = vand.u32 %v1742, 4294901760
      %2319 = vmatmul.mubr.f32.gmra.mrb[0].mxu0 %v2318
      %v2320 = vpop.f32.mrb[0].mxu0
      %v2321 = vadd.f32 %v2236, %v2320
      %v2322 = vpop.f32.mrb[0].mxu0
      %2323 = vdwg.mxu0
      %v2324 = vadd.f32 %v2315, %v279
      %v2325 = vadd.f32 %v2321, %v280
      %v2326 = vmul.f32 %v2324, %v2324
      %v2327 = vmul.f32 %v2325, %v2325
      %v2329 = vsel %vm296, %v2324, 0
      %v2332 = vsel %vm296, %v2325, 0
      %v2335 = vsel %vm296, %v2326, 0
      %v2338 = vsel %vm296, %v2327, 0
      %2340 = vmatprep.subr.mxu0 0.0
      %2341 = vmatpush1.msra.mxu0 0.015625
      %2342 = vmatprep.subr.mxu0 0.0
      %2343 = vmatpush1.msra.mxu0 0.015625
      %2344 = vmatprep.subr.mxu0 0.0
      %2345 = vmatpush1.msra.mxu0 0.015625
      %2346 = vmatprep.subr.mxu0 0.0
      %2347 = vmatpush1.msra.mxu0 0.015625
      %2348 = vmatprep.subr.mxu0 0.0
      %2349 = vmatpush1.msra.mxu0 0.015625
      %2350 = vmatprep.subr.mxu0 0.0
      %2351 = vmatpush1.msra.mxu0 0.015625
      %2352 = vmatprep.subr.mxu0 0.0
      %2353 = vmatpush1.msra.mxu0 0.015625
      %2354 = vmatprep.subr.mxu0 0.0
      %2355 = vmatpush1.msra.mxu0 0.015625
      %2356 = vmatprep.subr.mxu0 0.0
      %2357 = vmatpush1.msra.mxu0 0.0
      %2358 = vmatprep.subr.mxu0 0.0
      %2359 = vmatpush1.msra.mxu0 0.0
      %2360 = vmatprep.subr.mxu0 0.0
      %2361 = vmatpush1.msra.mxu0 0.0
      %2362 = vmatprep.subr.mxu0 0.0
      %2363 = vmatpush1.msra.mxu0 0.0
      %2364 = vmatprep.subr.mxu0 0.0
      %2365 = vmatpush1.msra.mxu0 0.0
      %2366 = vmatprep.subr.mxu0 0.0
      %2367 = vmatpush1.msra.mxu0 0.0
      %2368 = vmatprep.subr.mxu0 0.0
      %2369 = vmatpush1.msra.mxu0 0.0
      %2370 = vmatprep.subr.mxu0 0.0
      %2371 = vmatpush1.msra.mxu0 0.0
      %2372 = vmatprep.subr.mxu0 0.0
      %2373 = vmatpush1.msra.mxu0 0.0
      %2374 = vmatprep.subr.mxu0 0.0
      %2375 = vmatpush1.msra.mxu0 0.0
      %2376 = vmatprep.subr.mxu0 0.0
      %2377 = vmatpush1.msra.mxu0 0.0
      %2378 = vmatprep.subr.mxu0 0.0
      %2379 = vmatpush1.msra.mxu0 0.0
      %2380 = vmatprep.subr.mxu0 0.0
      %2381 = vmatpush1.msra.mxu0 0.0
      %2382 = vmatprep.subr.mxu0 0.0
      %2383 = vmatpush1.msra.mxu0 0.0
      %2384 = vmatprep.subr.mxu0 0.0
      %2385 = vmatpush1.msra.mxu0 0.0
      %2386 = vmatprep.subr.mxu0 0.0
      %2387 = vmatpush1.msra.mxu0 0.0
      %2388 = vmatprep.subr.mxu0 0.0
      %2389 = vmatpush1.msra.mxu0 0.0
      %2390 = vmatprep.subr.mxu0 0.0
      %2391 = vmatpush1.msra.mxu0 0.0
      %2392 = vmatprep.subr.mxu0 0.0
      %2393 = vmatpush1.msra.mxu0 0.0
      %2394 = vmatprep.subr.mxu0 0.0
      %2395 = vmatpush1.msra.mxu0 0.0
      %2396 = vmatprep.subr.mxu0 0.0
      %2397 = vmatpush1.msra.mxu0 0.0
      %2398 = vmatprep.subr.mxu0 0.0
      %2399 = vmatpush1.msra.mxu0 0.0
      %2400 = vmatprep.subr.mxu0 0.0
      %2401 = vmatpush1.msra.mxu0 0.0
      %2402 = vmatprep.subr.mxu0 0.0
      %2403 = vmatpush1.msra.mxu0 0.0
      %2404 = vmatprep.mubr.f32.mxu0 0.0
      %v2405 = vand.u32 %v2329, 4294901760
      %v2406 = vsub.f32 %v2329, %v2405
      %v2407 = vand.u32 %v2406, 4294901760
      %v2408 = vsub.f32 %v2406, %v2407
      %v2409 = vand.u32 %v2408, 4294901760
      %2410 = vmatmul.mubr.f32.gmra.mrb[0].mxu0 %v2409
      %v2411 = vpop.f32.mrb[0].mxu0
      %v2412 = vadd.f32 0.0, %v2411
      %v2413 = vpop.f32.mrb[0].mxu0
      %2414 = vmatprep.mubr.f32.mxu0 0.0
      %v2415 = vand.u32 %v2332, 4294901760
      %v2416 = vsub.f32 %v2332, %v2415
      %v2417 = vand.u32 %v2416, 4294901760
      %v2418 = vsub.f32 %v2416, %v2417
      %v2419 = vand.u32 %v2418, 4294901760
      %2420 = vmatmul.mubr.f32.gmra.mrb[0].mxu0 %v2419
      %v2421 = vpop.f32.mrb[0].mxu0
      %v2422 = vadd.f32 0.0, %v2421
      %v2423 = vpop.f32.mrb[0].mxu0
      %2424 = vmatprep.mubr.f32.mxu0 0.0
      %v2425 = vand.u32 %v2335, 4294901760
      %v2426 = vsub.f32 %v2335, %v2425
      %v2427 = vand.u32 %v2426, 4294901760
      %v2428 = vsub.f32 %v2426, %v2427
      %v2429 = vand.u32 %v2428, 4294901760
      %2430 = vmatmul.mubr.f32.gmra.mrb[0].mxu0 %v2429
      %v2431 = vpop.f32.mrb[0].mxu0
      %v2432 = vadd.f32 0.0, %v2431
      %v2433 = vpop.f32.mrb[0].mxu0
      %2434 = vmatprep.mubr.f32.mxu0 0.0
      %v2435 = vand.u32 %v2338, 4294901760
      %v2436 = vsub.f32 %v2338, %v2435
      %v2437 = vand.u32 %v2436, 4294901760
      %v2438 = vsub.f32 %v2436, %v2437
      %v2439 = vand.u32 %v2438, 4294901760
      %2440 = vmatmul.mubr.f32.gmra.mrb[0].mxu0 %v2439
      %v2441 = vpop.f32.mrb[0].mxu0
      %v2442 = vadd.f32 0.0, %v2441
      %v2443 = vpop.f32.mrb[0].mxu0
      %2444 = vdwg.mxu0
      %2445 = vmatprep.subr.mxu0 0.0
      %2446 = vmatpush1.msra.mxu0 0.0
      %2447 = vmatprep.subr.mxu0 0.0
      %2448 = vmatpush1.msra.mxu0 0.0
      %2449 = vmatprep.subr.mxu0 0.0
      %2450 = vmatpush1.msra.mxu0 0.0
      %2451 = vmatprep.subr.mxu0 0.0
      %2452 = vmatpush1.msra.mxu0 0.0
      %2453 = vmatprep.subr.mxu0 0.0
      %2454 = vmatpush1.msra.mxu0 0.0
      %2455 = vmatprep.subr.mxu0 0.0
      %2456 = vmatpush1.msra.mxu0 0.0
      %2457 = vmatprep.subr.mxu0 0.0
      %2458 = vmatpush1.msra.mxu0 0.0
      %2459 = vmatprep.subr.mxu0 0.0
      %2460 = vmatpush1.msra.mxu0 0.0
      %2461 = vmatprep.subr.mxu0 0.0
      %2462 = vmatpush1.msra.mxu0 0.0
      %2463 = vmatprep.subr.mxu0 0.0
      %2464 = vmatpush1.msra.mxu0 0.0
      %2465 = vmatprep.subr.mxu0 0.0
      %2466 = vmatpush1.msra.mxu0 0.0
      %2467 = vmatprep.subr.mxu0 0.0
      %2468 = vmatpush1.msra.mxu0 0.0
      %2469 = vmatprep.subr.mxu0 0.0
      %2470 = vmatpush1.msra.mxu0 0.0
      %2471 = vmatprep.subr.mxu0 0.0
      %2472 = vmatpush1.msra.mxu0 0.0
      %2473 = vmatprep.subr.mxu0 0.0
      %2474 = vmatpush1.msra.mxu0 0.0
      %2475 = vmatprep.subr.mxu0 0.0
      %2476 = vmatpush1.msra.mxu0 0.0
      %2477 = vmatprep.subr.mxu0 0.0
      %2478 = vmatpush1.msra.mxu0 0.0
      %2479 = vmatprep.subr.mxu0 0.0
      %2480 = vmatpush1.msra.mxu0 0.0
      %2481 = vmatprep.subr.mxu0 0.0
      %2482 = vmatpush1.msra.mxu0 0.0
      %2483 = vmatprep.subr.mxu0 0.0
      %2484 = vmatpush1.msra.mxu0 0.0
      %2485 = vmatprep.subr.mxu0 0.0
      %2486 = vmatpush1.msra.mxu0 0.0
      %2487 = vmatprep.subr.mxu0 0.0
      %2488 = vmatpush1.msra.mxu0 0.0
      %2489 = vmatprep.subr.mxu0 0.0
      %2490 = vmatpush1.msra.mxu0 0.0
      %2491 = vmatprep.subr.mxu0 0.0
      %2492 = vmatpush1.msra.mxu0 0.0
      %2493 = vmatprep.subr.mxu0 0.0
      %2494 = vmatpush1.msra.mxu0 0.0
      %2495 = vmatprep.subr.mxu0 0.0
      %2496 = vmatpush1.msra.mxu0 0.0
      %2497 = vmatprep.subr.mxu0 0.0
      %2498 = vmatpush1.msra.mxu0 0.0
      %2499 = vmatprep.subr.mxu0 0.0
      %2500 = vmatpush1.msra.mxu0 0.0
      %2501 = vmatprep.subr.mxu0 0.0
      %2502 = vmatpush1.msra.mxu0 0.0
      %2503 = vmatprep.subr.mxu0 0.0
      %2504 = vmatpush1.msra.mxu0 0.0
      %2505 = vmatprep.subr.mxu0 0.0
      %2506 = vmatpush1.msra.mxu0 0.0
      %2507 = vmatprep.subr.mxu0 0.0
      %2508 = vmatpush1.msra.mxu0 0.0
      %2509 = vmatprep.mubr.f32.mxu0 0.0
      %v2510 = vand.u32 %v2329, 4294901760
      %2511 = vmatmul.mubr.f32.gmra.mrb[0].mxu0 %v2510
      %v2512 = vpop.f32.mrb[0].mxu0
      %v2513 = vadd.f32 %v2412, %v2512
      %v2514 = vpop.f32.mrb[0].mxu0
      %2515 = vmatprep.mubr.f32.mxu0 0.0
      %v2516 = vand.u32 %v2332, 4294901760
      %2517 = vmatmul.mubr.f32.gmra.mrb[0].mxu0 %v2516
      %v2518 = vpop.f32.mrb[0].mxu0
      %v2519 = vadd.f32 %v2422, %v2518
      %v2520 = vpop.f32.mrb[0].mxu0
      %2521 = vmatprep.mubr.f32.mxu0 0.0
      %v2522 = vand.u32 %v2335, 4294901760
      %2523 = vmatmul.mubr.f32.gmra.mrb[0].mxu0 %v2522
      %v2524 = vpop.f32.mrb[0].mxu0
      %v2525 = vadd.f32 %v2432, %v2524
      %v2526 = vpop.f32.mrb[0].mxu0
      %2527 = vmatprep.mubr.f32.mxu0 0.0
      %v2528 = vand.u32 %v2338, 4294901760
      %2529 = vmatmul.mubr.f32.gmra.mrb[0].mxu0 %v2528
      %v2530 = vpop.f32.mrb[0].mxu0
      %v2531 = vadd.f32 %v2442, %v2530
      %v2532 = vpop.f32.mrb[0].mxu0
      %2533 = vdwg.mxu0
      %2534 = vmatprep.subr.mxu0 0.0
      %2535 = vmatpush1.msra.mxu0 0.0
      %2536 = vmatprep.subr.mxu0 0.0
      %2537 = vmatpush1.msra.mxu0 0.0
      %2538 = vmatprep.subr.mxu0 0.0
      %2539 = vmatpush1.msra.mxu0 0.0
      %2540 = vmatprep.subr.mxu0 0.0
      %2541 = vmatpush1.msra.mxu0 0.0
      %2542 = vmatprep.subr.mxu0 0.0
      %2543 = vmatpush1.msra.mxu0 0.0
      %2544 = vmatprep.subr.mxu0 0.0
      %2545 = vmatpush1.msra.mxu0 0.0
      %2546 = vmatprep.subr.mxu0 0.0
      %2547 = vmatpush1.msra.mxu0 0.0
      %2548 = vmatprep.subr.mxu0 0.0
      %2549 = vmatpush1.msra.mxu0 0.0
      %2550 = vmatprep.subr.mxu0 0.0
      %2551 = vmatpush1.msra.mxu0 0.0
      %2552 = vmatprep.subr.mxu0 0.0
      %2553 = vmatpush1.msra.mxu0 0.0
      %2554 = vmatprep.subr.mxu0 0.0
      %2555 = vmatpush1.msra.mxu0 0.0
      %2556 = vmatprep.subr.mxu0 0.0
      %2557 = vmatpush1.msra.mxu0 0.0
      %2558 = vmatprep.subr.mxu0 0.0
      %2559 = vmatpush1.msra.mxu0 0.0
      %2560 = vmatprep.subr.mxu0 0.0
      %2561 = vmatpush1.msra.mxu0 0.0
      %2562 = vmatprep.subr.mxu0 0.0
      %2563 = vmatpush1.msra.mxu0 0.0
      %2564 = vmatprep.subr.mxu0 0.0
      %2565 = vmatpush1.msra.mxu0 0.0
      %2566 = vmatprep.subr.mxu0 0.0
      %2567 = vmatpush1.msra.mxu0 0.0
      %2568 = vmatprep.subr.mxu0 0.0
      %2569 = vmatpush1.msra.mxu0 0.0
      %2570 = vmatprep.subr.mxu0 0.0
      %2571 = vmatpush1.msra.mxu0 0.0
      %2572 = vmatprep.subr.mxu0 0.0
      %2573 = vmatpush1.msra.mxu0 0.0
      %2574 = vmatprep.subr.mxu0 0.0
      %2575 = vmatpush1.msra.mxu0 0.0
      %2576 = vmatprep.subr.mxu0 0.0
      %2577 = vmatpush1.msra.mxu0 0.0
      %2578 = vmatprep.subr.mxu0 0.0
      %2579 = vmatpush1.msra.mxu0 0.0
      %2580 = vmatprep.subr.mxu0 0.0
      %2581 = vmatpush1.msra.mxu0 0.0
      %2582 = vmatprep.subr.mxu0 0.0
      %2583 = vmatpush1.msra.mxu0 0.0
      %2584 = vmatprep.subr.mxu0 0.0
      %2585 = vmatpush1.msra.mxu0 0.0
      %2586 = vmatprep.subr.mxu0 0.0
      %2587 = vmatpush1.msra.mxu0 0.0
      %2588 = vmatprep.subr.mxu0 0.0
      %2589 = vmatpush1.msra.mxu0 0.0
      %2590 = vmatprep.subr.mxu0 0.0
      %2591 = vmatpush1.msra.mxu0 0.0
      %2592 = vmatprep.subr.mxu0 0.0
      %2593 = vmatpush1.msra.mxu0 0.0
      %2594 = vmatprep.subr.mxu0 0.0
      %2595 = vmatpush1.msra.mxu0 0.0
      %2596 = vmatprep.subr.mxu0 0.0
      %2597 = vmatpush1.msra.mxu0 0.0
      %2598 = vmatprep.mubr.f32.mxu0 0.0
      %v2599 = vand.u32 %v2329, 4294901760
      %v2600 = vsub.f32 %v2329, %v2599
      %2601 = vmatmul.mubr.f32.gmra.mrb[0].mxu0 %v2600
      %v2602 = vpop.f32.mrb[0].mxu0
      %v2603 = vadd.f32 %v2513, %v2602
      %v2604 = vpop.f32.mrb[0].mxu0
      %2605 = vmatprep.mubr.f32.mxu0 0.0
      %v2606 = vand.u32 %v2332, 4294901760
      %v2607 = vsub.f32 %v2332, %v2606
      %2608 = vmatmul.mubr.f32.gmra.mrb[0].mxu0 %v2607
      %v2609 = vpop.f32.mrb[0].mxu0
      %v2610 = vadd.f32 %v2519, %v2609
      %v2611 = vpop.f32.mrb[0].mxu0
      %2612 = vmatprep.mubr.f32.mxu0 0.0
      %v2613 = vand.u32 %v2335, 4294901760
      %v2614 = vsub.f32 %v2335, %v2613
      %2615 = vmatmul.mubr.f32.gmra.mrb[0].mxu0 %v2614
      %v2616 = vpop.f32.mrb[0].mxu0
      %v2617 = vadd.f32 %v2525, %v2616
      %v2618 = vpop.f32.mrb[0].mxu0
      %2619 = vmatprep.mubr.f32.mxu0 0.0
      %v2620 = vand.u32 %v2338, 4294901760
      %v2621 = vsub.f32 %v2338, %v2620
      %2622 = vmatmul.mubr.f32.gmra.mrb[0].mxu0 %v2621
      %v2623 = vpop.f32.mrb[0].mxu0
      %v2624 = vadd.f32 %v2531, %v2623
      %v2625 = vpop.f32.mrb[0].mxu0
      %2626 = vdwg.mxu0
      %2627 = vmatprep.subr.mxu0 0.0
      %2628 = vmatpush1.msra.mxu0 0.015625
      %2629 = vmatprep.subr.mxu0 0.0
      %2630 = vmatpush1.msra.mxu0 0.015625
      %2631 = vmatprep.subr.mxu0 0.0
      %2632 = vmatpush1.msra.mxu0 0.015625
      %2633 = vmatprep.subr.mxu0 0.0
      %2634 = vmatpush1.msra.mxu0 0.015625
      %2635 = vmatprep.subr.mxu0 0.0
      %2636 = vmatpush1.msra.mxu0 0.015625
      %2637 = vmatprep.subr.mxu0 0.0
      %2638 = vmatpush1.msra.mxu0 0.015625
      %2639 = vmatprep.subr.mxu0 0.0
      %2640 = vmatpush1.msra.mxu0 0.015625
      %2641 = vmatprep.subr.mxu0 0.0
      %2642 = vmatpush1.msra.mxu0 0.015625
      %2643 = vmatprep.subr.mxu0 0.0
      %2644 = vmatpush1.msra.mxu0 0.0
      %2645 = vmatprep.subr.mxu0 0.0
      %2646 = vmatpush1.msra.mxu0 0.0
      %2647 = vmatprep.subr.mxu0 0.0
      %2648 = vmatpush1.msra.mxu0 0.0
      %2649 = vmatprep.subr.mxu0 0.0
      %2650 = vmatpush1.msra.mxu0 0.0
      %2651 = vmatprep.subr.mxu0 0.0
      %2652 = vmatpush1.msra.mxu0 0.0
      %2653 = vmatprep.subr.mxu0 0.0
      %2654 = vmatpush1.msra.mxu0 0.0
      %2655 = vmatprep.subr.mxu0 0.0
      %2656 = vmatpush1.msra.mxu0 0.0
      %2657 = vmatprep.subr.mxu0 0.0
      %2658 = vmatpush1.msra.mxu0 0.0
      %2659 = vmatprep.subr.mxu0 0.0
      %2660 = vmatpush1.msra.mxu0 0.0
      %2661 = vmatprep.subr.mxu0 0.0
      %2662 = vmatpush1.msra.mxu0 0.0
      %2663 = vmatprep.subr.mxu0 0.0
      %2664 = vmatpush1.msra.mxu0 0.0
      %2665 = vmatprep.subr.mxu0 0.0
      %2666 = vmatpush1.msra.mxu0 0.0
      %2667 = vmatprep.subr.mxu0 0.0
      %2668 = vmatpush1.msra.mxu0 0.0
      %2669 = vmatprep.subr.mxu0 0.0
      %2670 = vmatpush1.msra.mxu0 0.0
      %2671 = vmatprep.subr.mxu0 0.0
      %2672 = vmatpush1.msra.mxu0 0.0
      %2673 = vmatprep.subr.mxu0 0.0
      %2674 = vmatpush1.msra.mxu0 0.0
      %2675 = vmatprep.subr.mxu0 0.0
      %2676 = vmatpush1.msra.mxu0 0.0
      %2677 = vmatprep.subr.mxu0 0.0
      %2678 = vmatpush1.msra.mxu0 0.0
      %2679 = vmatprep.subr.mxu0 0.0
      %2680 = vmatpush1.msra.mxu0 0.0
      %2681 = vmatprep.subr.mxu0 0.0
      %2682 = vmatpush1.msra.mxu0 0.0
      %2683 = vmatprep.subr.mxu0 0.0
      %2684 = vmatpush1.msra.mxu0 0.0
      %2685 = vmatprep.subr.mxu0 0.0
      %2686 = vmatpush1.msra.mxu0 0.0
      %2687 = vmatprep.subr.mxu0 0.0
      %2688 = vmatpush1.msra.mxu0 0.0
      %2689 = vmatprep.subr.mxu0 0.0
      %2690 = vmatpush1.msra.mxu0 0.0
      %2691 = vmatprep.mubr.f32.mxu0 0.0
      %v2692 = vand.u32 %v2329, 4294901760
      %v2693 = vsub.f32 %v2329, %v2692
      %v2694 = vand.u32 %v2693, 4294901760
      %2695 = vmatmul.mubr.f32.gmra.mrb[0].mxu0 %v2694
      %v2696 = vpop.f32.mrb[0].mxu0
      %v2697 = vadd.f32 %v2603, %v2696
      %v2698 = vpop.f32.mrb[0].mxu0
      %2699 = vmatprep.mubr.f32.mxu0 0.0
      %v2700 = vand.u32 %v2332, 4294901760
      %v2701 = vsub.f32 %v2332, %v2700
      %v2702 = vand.u32 %v2701, 4294901760
      %2703 = vmatmul.mubr.f32.gmra.mrb[0].mxu0 %v2702
      %v2704 = vpop.f32.mrb[0].mxu0
      %v2705 = vadd.f32 %v2610, %v2704
      %v2706 = vpop.f32.mrb[0].mxu0
      %2707 = vmatprep.mubr.f32.mxu0 0.0
      %v2708 = vand.u32 %v2335, 4294901760
      %v2709 = vsub.f32 %v2335, %v2708
      %v2710 = vand.u32 %v2709, 4294901760
      %2711 = vmatmul.mubr.f32.gmra.mrb[0].mxu0 %v2710
      %v2712 = vpop.f32.mrb[0].mxu0
      %v2713 = vadd.f32 %v2617, %v2712
      %v2714 = vpop.f32.mrb[0].mxu0
      %2715 = vmatprep.mubr.f32.mxu0 0.0
      %v2716 = vand.u32 %v2338, 4294901760
      %v2717 = vsub.f32 %v2338, %v2716
      %v2718 = vand.u32 %v2717, 4294901760
      %2719 = vmatmul.mubr.f32.gmra.mrb[0].mxu0 %v2718
      %v2720 = vpop.f32.mrb[0].mxu0
      %v2721 = vadd.f32 %v2624, %v2720
      %v2722 = vpop.f32.mrb[0].mxu0
      %2723 = vdwg.mxu0
      %2724 = vmatprep.subr.mxu0 0.0
      %2725 = vmatpush1.msra.mxu0 0.0
      %2726 = vmatprep.subr.mxu0 0.0
      %2727 = vmatpush1.msra.mxu0 0.0
      %2728 = vmatprep.subr.mxu0 0.0
      %2729 = vmatpush1.msra.mxu0 0.0
      %2730 = vmatprep.subr.mxu0 0.0
      %2731 = vmatpush1.msra.mxu0 0.0
      %2732 = vmatprep.subr.mxu0 0.0
      %2733 = vmatpush1.msra.mxu0 0.0
      %2734 = vmatprep.subr.mxu0 0.0
      %2735 = vmatpush1.msra.mxu0 0.0
      %2736 = vmatprep.subr.mxu0 0.0
      %2737 = vmatpush1.msra.mxu0 0.0
      %2738 = vmatprep.subr.mxu0 0.0
      %2739 = vmatpush1.msra.mxu0 0.0
      %2740 = vmatprep.subr.mxu0 0.0
      %2741 = vmatpush1.msra.mxu0 0.0
      %2742 = vmatprep.subr.mxu0 0.0
      %2743 = vmatpush1.msra.mxu0 0.0
      %2744 = vmatprep.subr.mxu0 0.0
      %2745 = vmatpush1.msra.mxu0 0.0
      %2746 = vmatprep.subr.mxu0 0.0
      %2747 = vmatpush1.msra.mxu0 0.0
      %2748 = vmatprep.subr.mxu0 0.0
      %2749 = vmatpush1.msra.mxu0 0.0
      %2750 = vmatprep.subr.mxu0 0.0
      %2751 = vmatpush1.msra.mxu0 0.0
      %2752 = vmatprep.subr.mxu0 0.0
      %2753 = vmatpush1.msra.mxu0 0.0
      %2754 = vmatprep.subr.mxu0 0.0
      %2755 = vmatpush1.msra.mxu0 0.0
      %2756 = vmatprep.subr.mxu0 0.0
      %2757 = vmatpush1.msra.mxu0 0.0
      %2758 = vmatprep.subr.mxu0 0.0
      %2759 = vmatpush1.msra.mxu0 0.0
      %2760 = vmatprep.subr.mxu0 0.0
      %2761 = vmatpush1.msra.mxu0 0.0
      %2762 = vmatprep.subr.mxu0 0.0
      %2763 = vmatpush1.msra.mxu0 0.0
      %2764 = vmatprep.subr.mxu0 0.0
      %2765 = vmatpush1.msra.mxu0 0.0
      %2766 = vmatprep.subr.mxu0 0.0
      %2767 = vmatpush1.msra.mxu0 0.0
      %2768 = vmatprep.subr.mxu0 0.0
      %2769 = vmatpush1.msra.mxu0 0.0
      %2770 = vmatprep.subr.mxu0 0.0
      %2771 = vmatpush1.msra.mxu0 0.0
      %2772 = vmatprep.subr.mxu0 0.0
      %2773 = vmatpush1.msra.mxu0 0.0
      %2774 = vmatprep.subr.mxu0 0.0
      %2775 = vmatpush1.msra.mxu0 0.0
      %2776 = vmatprep.subr.mxu0 0.0
      %2777 = vmatpush1.msra.mxu0 0.0
      %2778 = vmatprep.subr.mxu0 0.0
      %2779 = vmatpush1.msra.mxu0 0.0
      %2780 = vmatprep.subr.mxu0 0.0
      %2781 = vmatpush1.msra.mxu0 0.0
      %2782 = vmatprep.subr.mxu0 0.0
      %2783 = vmatpush1.msra.mxu0 0.0
      %2784 = vmatprep.subr.mxu0 0.0
      %2785 = vmatpush1.msra.mxu0 0.0
      %2786 = vmatprep.subr.mxu0 0.0
      %2787 = vmatpush1.msra.mxu0 0.0
      %2788 = vmatprep.mubr.f32.mxu0 0.0
      %v2789 = vand.u32 %v2329, 4294901760
      %2790 = vmatmul.mubr.f32.gmra.mrb[0].mxu0 %v2789
      %v2791 = vpop.f32.mrb[0].mxu0
      %v2792 = vadd.f32 %v2697, %v2791
      %v2793 = vpop.f32.mrb[0].mxu0
      %2794 = vmatprep.mubr.f32.mxu0 0.0
      %v2795 = vand.u32 %v2332, 4294901760
      %2796 = vmatmul.mubr.f32.gmra.mrb[0].mxu0 %v2795
      %v2797 = vpop.f32.mrb[0].mxu0
      %v2798 = vadd.f32 %v2705, %v2797
      %v2799 = vpop.f32.mrb[0].mxu0
      %2800 = vmatprep.mubr.f32.mxu0 0.0
      %v2801 = vand.u32 %v2335, 4294901760
      %2802 = vmatmul.mubr.f32.gmra.mrb[0].mxu0 %v2801
      %v2803 = vpop.f32.mrb[0].mxu0
      %v2804 = vadd.f32 %v2713, %v2803
      %v2805 = vpop.f32.mrb[0].mxu0
      %2806 = vmatprep.mubr.f32.mxu0 0.0
      %v2807 = vand.u32 %v2338, 4294901760
      %2808 = vmatmul.mubr.f32.gmra.mrb[0].mxu0 %v2807
      %v2809 = vpop.f32.mrb[0].mxu0
      %v2810 = vadd.f32 %v2721, %v2809
      %v2811 = vpop.f32.mrb[0].mxu0
      %2812 = vdwg.mxu0
      %2813 = vmatprep.subr.mxu0 0.0
      %2814 = vmatpush1.msra.mxu0 0.015625
      %2815 = vmatprep.subr.mxu0 0.0
      %2816 = vmatpush1.msra.mxu0 0.015625
      %2817 = vmatprep.subr.mxu0 0.0
      %2818 = vmatpush1.msra.mxu0 0.015625
      %2819 = vmatprep.subr.mxu0 0.0
      %2820 = vmatpush1.msra.mxu0 0.015625
      %2821 = vmatprep.subr.mxu0 0.0
      %2822 = vmatpush1.msra.mxu0 0.015625
      %2823 = vmatprep.subr.mxu0 0.0
      %2824 = vmatpush1.msra.mxu0 0.015625
      %2825 = vmatprep.subr.mxu0 0.0
      %2826 = vmatpush1.msra.mxu0 0.015625
      %2827 = vmatprep.subr.mxu0 0.0
      %2828 = vmatpush1.msra.mxu0 0.015625
      %2829 = vmatprep.subr.mxu0 0.0
      %2830 = vmatpush1.msra.mxu0 0.0
      %2831 = vmatprep.subr.mxu0 0.0
      %2832 = vmatpush1.msra.mxu0 0.0
      %2833 = vmatprep.subr.mxu0 0.0
      %2834 = vmatpush1.msra.mxu0 0.0
      %2835 = vmatprep.subr.mxu0 0.0
      %2836 = vmatpush1.msra.mxu0 0.0
      %2837 = vmatprep.subr.mxu0 0.0
      %2838 = vmatpush1.msra.mxu0 0.0
      %2839 = vmatprep.subr.mxu0 0.0
      %2840 = vmatpush1.msra.mxu0 0.0
      %2841 = vmatprep.subr.mxu0 0.0
      %2842 = vmatpush1.msra.mxu0 0.0
      %2843 = vmatprep.subr.mxu0 0.0
      %2844 = vmatpush1.msra.mxu0 0.0
      %2845 = vmatprep.subr.mxu0 0.0
      %2846 = vmatpush1.msra.mxu0 0.0
      %2847 = vmatprep.subr.mxu0 0.0
      %2848 = vmatpush1.msra.mxu0 0.0
      %2849 = vmatprep.subr.mxu0 0.0
      %2850 = vmatpush1.msra.mxu0 0.0
      %2851 = vmatprep.subr.mxu0 0.0
      %2852 = vmatpush1.msra.mxu0 0.0
      %2853 = vmatprep.subr.mxu0 0.0
      %2854 = vmatpush1.msra.mxu0 0.0
      %2855 = vmatprep.subr.mxu0 0.0
      %2856 = vmatpush1.msra.mxu0 0.0
      %2857 = vmatprep.subr.mxu0 0.0
      %2858 = vmatpush1.msra.mxu0 0.0
      %2859 = vmatprep.subr.mxu0 0.0
      %2860 = vmatpush1.msra.mxu0 0.0
      %2861 = vmatprep.subr.mxu0 0.0
      %2862 = vmatpush1.msra.mxu0 0.0
      %2863 = vmatprep.subr.mxu0 0.0
      %2864 = vmatpush1.msra.mxu0 0.0
      %2865 = vmatprep.subr.mxu0 0.0
      %2866 = vmatpush1.msra.mxu0 0.0
      %2867 = vmatprep.subr.mxu0 0.0
      %2868 = vmatpush1.msra.mxu0 0.0
      %2869 = vmatprep.subr.mxu0 0.0
      %2870 = vmatpush1.msra.mxu0 0.0
      %2871 = vmatprep.subr.mxu0 0.0
      %2872 = vmatpush1.msra.mxu0 0.0
      %2873 = vmatprep.subr.mxu0 0.0
      %2874 = vmatpush1.msra.mxu0 0.0
      %2875 = vmatprep.subr.mxu0 0.0
      %2876 = vmatpush1.msra.mxu0 0.0
      %2877 = vmatprep.mubr.f32.mxu0 0.0
      %v2878 = vand.u32 %v2329, 4294901760
      %2879 = vmatmul.mubr.f32.gmra.mrb[0].mxu0 %v2878
      %v2880 = vpop.f32.mrb[0].mxu0
      %v2881 = vadd.f32 %v2792, %v2880
      %v2882 = vpop.f32.mrb[0].mxu0
      %2883 = vmatprep.mubr.f32.mxu0 0.0
      %v2884 = vand.u32 %v2332, 4294901760
      %2885 = vmatmul.mubr.f32.gmra.mrb[0].mxu0 %v2884
      %v2886 = vpop.f32.mrb[0].mxu0
      %v2887 = vadd.f32 %v2798, %v2886
      %v2888 = vpop.f32.mrb[0].mxu0
      %2889 = vmatprep.mubr.f32.mxu0 0.0
      %v2890 = vand.u32 %v2335, 4294901760
      %2891 = vmatmul.mubr.f32.gmra.mrb[0].mxu0 %v2890
      %v2892 = vpop.f32.mrb[0].mxu0
      %v2893 = vadd.f32 %v2804, %v2892
      %v2894 = vpop.f32.mrb[0].mxu0
      %2895 = vmatprep.mubr.f32.mxu0 0.0
      %v2896 = vand.u32 %v2338, 4294901760
      %2897 = vmatmul.mubr.f32.gmra.mrb[0].mxu0 %v2896
      %v2898 = vpop.f32.mrb[0].mxu0
      %v2899 = vadd.f32 %v2810, %v2898
      %v2900 = vpop.f32.mrb[0].mxu0
      %2901 = vdwg.mxu0
      %v2902 = vmul.f32 %v2881, %v2881
      %v2903 = vmul.f32 %v2887, %v2887
      %v2904 = vsub.f32 %v2893, %v2902
      %v2905 = vsub.f32 %v2899, %v2903
      %v2906 = vsub.f32 %v2324, %v2881
      %v2907 = vsub.f32 %v2325, %v2887
      %v2908 = vadd.f32 %v2904, 1e-05
      %v2909 = vadd.f32 %v2905, 1e-05
      %v2910 = vrsqrt.pop %v2908
      %v2911 = vrsqrt.pop %v2909
      %v2912 = vmul.f32 %v2906, %v2910
      %v2913 = vmul.f32 %v2907, %v2911
      %v2914 = vld [vmem:[%s3] sm:$0xff]
      %v2915 = vld [vmem:[%s3 + $0x8] sm:$0xff]
      %v2916 = vld [vmem:[%s3 + $0x10] sm:$0xff]
      %v2917 = vld [vmem:[%s3 + $0x18] sm:$0xff]
      %v2918 = vld [vmem:[%s3 + $0x20] sm:$0xff]
      %v2919 = vld [vmem:[%s3 + $0x28] sm:$0xff]
      %v2920 = vld [vmem:[%s3 + $0x30] sm:$0xff]
      %v2921 = vld [vmem:[%s3 + $0x38] sm:$0xff]
      %v2922 = vlaneseq
      %v2923 = vshrl.u32 %v2922, 7
      %v2924 = vsub.s32 0, %v2923
      %v2925 = vrot.slane %v282, %v2924
      %v2927 = vsel %vm296, %v2912, 0
      %v2930 = vsel %vm296, %v2913, 0
      %2932 = vmatprep.subr.mxu0 0.0
      %v2933 = vand.u32 %v2914, 4294901760
      %2934 = vmatpush1.msra.mxu0 %v2933
      %2935 = vmatprep.subr.mxu0 0.0
      %v2936 = vand.u32 %v2915, 4294901760
      %2937 = vmatpush1.msra.mxu0 %v2936
      %2938 = vmatprep.subr.mxu0 0.0
      %v2939 = vand.u32 %v2916, 4294901760
      %2940 = vmatpush1.msra.mxu0 %v2939
      %2941 = vmatprep.subr.mxu0 0.0
      %v2942 = vand.u32 %v2917, 4294901760
      %2943 = vmatpush1.msra.mxu0 %v2942
      %2944 = vmatprep.subr.mxu0 0.0
      %v2945 = vand.u32 %v2918, 4294901760
      %2946 = vmatpush1.msra.mxu0 %v2945
      %2947 = vmatprep.subr.mxu0 0.0
      %v2948 = vand.u32 %v2919, 4294901760
      %2949 = vmatpush1.msra.mxu0 %v2948
      %2950 = vmatprep.subr.mxu0 0.0
      %v2951 = vand.u32 %v2920, 4294901760
      %2952 = vmatpush1.msra.mxu0 %v2951
      %2953 = vmatprep.subr.mxu0 0.0
      %v2954 = vand.u32 %v2921, 4294901760
      %2955 = vmatpush1.msra.mxu0 %v2954
      %2956 = vmatprep.subr.mxu0 0.0
      %2957 = vmatpush1.msra.mxu0 0.0
      %2958 = vmatprep.subr.mxu0 0.0
      %2959 = vmatpush1.msra.mxu0 0.0
      %2960 = vmatprep.subr.mxu0 0.0
      %2961 = vmatpush1.msra.mxu0 0.0
      %2962 = vmatprep.subr.mxu0 0.0
      %2963 = vmatpush1.msra.mxu0 0.0
      %2964 = vmatprep.subr.mxu0 0.0
      %2965 = vmatpush1.msra.mxu0 0.0
      %2966 = vmatprep.subr.mxu0 0.0
      %2967 = vmatpush1.msra.mxu0 0.0
      %2968 = vmatprep.subr.mxu0 0.0
      %2969 = vmatpush1.msra.mxu0 0.0
      %2970 = vmatprep.subr.mxu0 0.0
      %2971 = vmatpush1.msra.mxu0 0.0
      %2972 = vmatprep.subr.mxu0 0.0
      %2973 = vmatpush1.msra.mxu0 0.0
      %2974 = vmatprep.subr.mxu0 0.0
      %2975 = vmatpush1.msra.mxu0 0.0
      %2976 = vmatprep.subr.mxu0 0.0
      %2977 = vmatpush1.msra.mxu0 0.0
      %2978 = vmatprep.subr.mxu0 0.0
      %2979 = vmatpush1.msra.mxu0 0.0
      %2980 = vmatprep.subr.mxu0 0.0
      %2981 = vmatpush1.msra.mxu0 0.0
      %2982 = vmatprep.subr.mxu0 0.0
      %2983 = vmatpush1.msra.mxu0 0.0
      %2984 = vmatprep.subr.mxu0 0.0
      %2985 = vmatpush1.msra.mxu0 0.0
      %2986 = vmatprep.subr.mxu0 0.0
      %2987 = vmatpush1.msra.mxu0 0.0
      %2988 = vmatprep.subr.mxu0 0.0
      %2989 = vmatpush1.msra.mxu0 0.0
      %2990 = vmatprep.subr.mxu0 0.0
      %2991 = vmatpush1.msra.mxu0 0.0
      %2992 = vmatprep.subr.mxu0 0.0
      %2993 = vmatpush1.msra.mxu0 0.0
      %2994 = vmatprep.subr.mxu0 0.0
      %2995 = vmatpush1.msra.mxu0 0.0
      %2996 = vmatprep.subr.mxu0 0.0
      %2997 = vmatpush1.msra.mxu0 0.0
      %2998 = vmatprep.subr.mxu0 0.0
      %2999 = vmatpush1.msra.mxu0 0.0
      %3000 = vmatprep.subr.mxu0 0.0
      %3001 = vmatpush1.msra.mxu0 0.0
      %3002 = vmatprep.subr.mxu0 0.0
      %3003 = vmatpush1.msra.mxu0 0.0
      %3004 = vmatprep.mubr.f32.mxu0 0.0
      %v3005 = vand.u32 %v2927, 4294901760
      %v3006 = vsub.f32 %v2927, %v3005
      %v3007 = vand.u32 %v3006, 4294901760
      %v3008 = vsub.f32 %v3006, %v3007
      %v3009 = vand.u32 %v3008, 4294901760
      %3010 = vmatmul.mubr.f32.gmra.mrb[0].mxu0 %v3009
      %v3011 = vpop.f32.mrb[0].mxu0
      %v3012 = vadd.f32 %v2925, %v3011
      %v3013 = vpop.f32.mrb[0].mxu0
      %3014 = vmatprep.mubr.f32.mxu0 0.0
      %v3015 = vand.u32 %v2930, 4294901760
      %v3016 = vsub.f32 %v2930, %v3015
      %v3017 = vand.u32 %v3016, 4294901760
      %v3018 = vsub.f32 %v3016, %v3017
      %v3019 = vand.u32 %v3018, 4294901760
      %3020 = vmatmul.mubr.f32.gmra.mrb[0].mxu0 %v3019
      %v3021 = vpop.f32.mrb[0].mxu0
      %v3022 = vadd.f32 %v2925, %v3021
      %v3023 = vpop.f32.mrb[0].mxu0
      %3024 = vdwg.mxu0
      %3025 = vmatprep.subr.mxu0 0.0
      %v3026 = vand.u32 %v2914, 4294901760
      %v3027 = vsub.f32 %v2914, %v3026
      %v3028 = vand.u32 %v3027, 4294901760
      %v3029 = vsub.f32 %v3027, %v3028
      %v3030 = vand.u32 %v3029, 4294901760
      %3031 = vmatpush1.msra.mxu0 %v3030
      %3032 = vmatprep.subr.mxu0 0.0
      %v3033 = vand.u32 %v2915, 4294901760
      %v3034 = vsub.f32 %v2915, %v3033
      %v3035 = vand.u32 %v3034, 4294901760
      %v3036 = vsub.f32 %v3034, %v3035
      %v3037 = vand.u32 %v3036, 4294901760
      %3038 = vmatpush1.msra.mxu0 %v3037
      %3039 = vmatprep.subr.mxu0 0.0
      %v3040 = vand.u32 %v2916, 4294901760
      %v3041 = vsub.f32 %v2916, %v3040
      %v3042 = vand.u32 %v3041, 4294901760
      %v3043 = vsub.f32 %v3041, %v3042
      %v3044 = vand.u32 %v3043, 4294901760
      %3045 = vmatpush1.msra.mxu0 %v3044
      %3046 = vmatprep.subr.mxu0 0.0
      %v3047 = vand.u32 %v2917, 4294901760
      %v3048 = vsub.f32 %v2917, %v3047
      %v3049 = vand.u32 %v3048, 4294901760
      %v3050 = vsub.f32 %v3048, %v3049
      %v3051 = vand.u32 %v3050, 4294901760
      %3052 = vmatpush1.msra.mxu0 %v3051
      %3053 = vmatprep.subr.mxu0 0.0
      %v3054 = vand.u32 %v2918, 4294901760
      %v3055 = vsub.f32 %v2918, %v3054
      %v3056 = vand.u32 %v3055, 4294901760
      %v3057 = vsub.f32 %v3055, %v3056
      %v3058 = vand.u32 %v3057, 4294901760
      %3059 = vmatpush1.msra.mxu0 %v3058
      %3060 = vmatprep.subr.mxu0 0.0
      %v3061 = vand.u32 %v2919, 4294901760
      %v3062 = vsub.f32 %v2919, %v3061
      %v3063 = vand.u32 %v3062, 4294901760
      %v3064 = vsub.f32 %v3062, %v3063
      %v3065 = vand.u32 %v3064, 4294901760
      %3066 = vmatpush1.msra.mxu0 %v3065
      %3067 = vmatprep.subr.mxu0 0.0
      %v3068 = vand.u32 %v2920, 4294901760
      %v3069 = vsub.f32 %v2920, %v3068
      %v3070 = vand.u32 %v3069, 4294901760
      %v3071 = vsub.f32 %v3069, %v3070
      %v3072 = vand.u32 %v3071, 4294901760
      %3073 = vmatpush1.msra.mxu0 %v3072
      %3074 = vmatprep.subr.mxu0 0.0
      %v3075 = vand.u32 %v2921, 4294901760
      %v3076 = vsub.f32 %v2921, %v3075
      %v3077 = vand.u32 %v3076, 4294901760
      %v3078 = vsub.f32 %v3076, %v3077
      %v3079 = vand.u32 %v3078, 4294901760
      %3080 = vmatpush1.msra.mxu0 %v3079
      %3081 = vmatprep.subr.mxu0 0.0
      %3082 = vmatpush1.msra.mxu0 0.0
      %3083 = vmatprep.subr.mxu0 0.0
      %3084 = vmatpush1.msra.mxu0 0.0
      %3085 = vmatprep.subr.mxu0 0.0
      %3086 = vmatpush1.msra.mxu0 0.0
      %3087 = vmatprep.subr.mxu0 0.0
      %3088 = vmatpush1.msra.mxu0 0.0
      %3089 = vmatprep.subr.mxu0 0.0
      %3090 = vmatpush1.msra.mxu0 0.0
      %3091 = vmatprep.subr.mxu0 0.0
      %3092 = vmatpush1.msra.mxu0 0.0
      %3093 = vmatprep.subr.mxu0 0.0
      %3094 = vmatpush1.msra.mxu0 0.0
      %3095 = vmatprep.subr.mxu0 0.0
      %3096 = vmatpush1.msra.mxu0 0.0
      %3097 = vmatprep.subr.mxu0 0.0
      %3098 = vmatpush1.msra.mxu0 0.0
      %3099 = vmatprep.subr.mxu0 0.0
      %3100 = vmatpush1.msra.mxu0 0.0
      %3101 = vmatprep.subr.mxu0 0.0
      %3102 = vmatpush1.msra.mxu0 0.0
      %3103 = vmatprep.subr.mxu0 0.0
      %3104 = vmatpush1.msra.mxu0 0.0
      %3105 = vmatprep.subr.mxu0 0.0
      %3106 = vmatpush1.msra.mxu0 0.0
      %3107 = vmatprep.subr.mxu0 0.0
      %3108 = vmatpush1.msra.mxu0 0.0
      %3109 = vmatprep.subr.mxu0 0.0
      %3110 = vmatpush1.msra.mxu0 0.0
      %3111 = vmatprep.subr.mxu0 0.0
      %3112 = vmatpush1.msra.mxu0 0.0
      %3113 = vmatprep.subr.mxu0 0.0
      %3114 = vmatpush1.msra.mxu0 0.0
      %3115 = vmatprep.subr.mxu0 0.0
      %3116 = vmatpush1.msra.mxu0 0.0
      %3117 = vmatprep.subr.mxu0 0.0
      %3118 = vmatpush1.msra.mxu0 0.0
      %3119 = vmatprep.subr.mxu0 0.0
      %3120 = vmatpush1.msra.mxu0 0.0
      %3121 = vmatprep.subr.mxu0 0.0
      %3122 = vmatpush1.msra.mxu0 0.0
      %3123 = vmatprep.subr.mxu0 0.0
      %3124 = vmatpush1.msra.mxu0 0.0
      %3125 = vmatprep.subr.mxu0 0.0
      %3126 = vmatpush1.msra.mxu0 0.0
      %3127 = vmatprep.subr.mxu0 0.0
      %3128 = vmatpush1.msra.mxu0 0.0
      %3129 = vmatprep.mubr.f32.mxu0 0.0
      %v3130 = vand.u32 %v2927, 4294901760
      %3131 = vmatmul.mubr.f32.gmra.mrb[0].mxu0 %v3130
      %v3132 = vpop.f32.mrb[0].mxu0
      %v3133 = vadd.f32 %v3012, %v3132
      %v3134 = vpop.f32.mrb[0].mxu0
      %3135 = vmatprep.mubr.f32.mxu0 0.0
      %v3136 = vand.u32 %v2930, 4294901760
      %3137 = vmatmul.mubr.f32.gmra.mrb[0].mxu0 %v3136
      %v3138 = vpop.f32.mrb[0].mxu0
      %v3139 = vadd.f32 %v3022, %v3138
      %v3140 = vpop.f32.mrb[0].mxu0
      %3141 = vdwg.mxu0
      %3142 = vmatprep.subr.mxu0 0.0
      %v3143 = vand.u32 %v2914, 4294901760
      %v3144 = vsub.f32 %v2914, %v3143
      %3145 = vmatpush1.msra.mxu0 %v3144
      %3146 = vmatprep.subr.mxu0 0.0
      %v3147 = vand.u32 %v2915, 4294901760
      %v3148 = vsub.f32 %v2915, %v3147
      %3149 = vmatpush1.msra.mxu0 %v3148
      %3150 = vmatprep.subr.mxu0 0.0
      %v3151 = vand.u32 %v2916, 4294901760
      %v3152 = vsub.f32 %v2916, %v3151
      %3153 = vmatpush1.msra.mxu0 %v3152
      %3154 = vmatprep.subr.mxu0 0.0
      %v3155 = vand.u32 %v2917, 4294901760
      %v3156 = vsub.f32 %v2917, %v3155
      %3157 = vmatpush1.msra.mxu0 %v3156
      %3158 = vmatprep.subr.mxu0 0.0
      %v3159 = vand.u32 %v2918, 4294901760
      %v3160 = vsub.f32 %v2918, %v3159
      %3161 = vmatpush1.msra.mxu0 %v3160
      %3162 = vmatprep.subr.mxu0 0.0
      %v3163 = vand.u32 %v2919, 4294901760
      %v3164 = vsub.f32 %v2919, %v3163
      %3165 = vmatpush1.msra.mxu0 %v3164
      %3166 = vmatprep.subr.mxu0 0.0
      %v3167 = vand.u32 %v2920, 4294901760
      %v3168 = vsub.f32 %v2920, %v3167
      %3169 = vmatpush1.msra.mxu0 %v3168
      %3170 = vmatprep.subr.mxu0 0.0
      %v3171 = vand.u32 %v2921, 4294901760
      %v3172 = vsub.f32 %v2921, %v3171
      %3173 = vmatpush1.msra.mxu0 %v3172
      %3174 = vmatprep.subr.mxu0 0.0
      %3175 = vmatpush1.msra.mxu0 0.0
      %3176 = vmatprep.subr.mxu0 0.0
      %3177 = vmatpush1.msra.mxu0 0.0
      %3178 = vmatprep.subr.mxu0 0.0
      %3179 = vmatpush1.msra.mxu0 0.0
      %3180 = vmatprep.subr.mxu0 0.0
      %3181 = vmatpush1.msra.mxu0 0.0
      %3182 = vmatprep.subr.mxu0 0.0
      %3183 = vmatpush1.msra.mxu0 0.0
      %3184 = vmatprep.subr.mxu0 0.0
      %3185 = vmatpush1.msra.mxu0 0.0
      %3186 = vmatprep.subr.mxu0 0.0
      %3187 = vmatpush1.msra.mxu0 0.0
      %3188 = vmatprep.subr.mxu0 0.0
      %3189 = vmatpush1.msra.mxu0 0.0
      %3190 = vmatprep.subr.mxu0 0.0
      %3191 = vmatpush1.msra.mxu0 0.0
      %3192 = vmatprep.subr.mxu0 0.0
      %3193 = vmatpush1.msra.mxu0 0.0
      %3194 = vmatprep.subr.mxu0 0.0
      %3195 = vmatpush1.msra.mxu0 0.0
      %3196 = vmatprep.subr.mxu0 0.0
      %3197 = vmatpush1.msra.mxu0 0.0
      %3198 = vmatprep.subr.mxu0 0.0
      %3199 = vmatpush1.msra.mxu0 0.0
      %3200 = vmatprep.subr.mxu0 0.0
      %3201 = vmatpush1.msra.mxu0 0.0
      %3202 = vmatprep.subr.mxu0 0.0
      %3203 = vmatpush1.msra.mxu0 0.0
      %3204 = vmatprep.subr.mxu0 0.0
      %3205 = vmatpush1.msra.mxu0 0.0
      %3206 = vmatprep.subr.mxu0 0.0
      %3207 = vmatpush1.msra.mxu0 0.0
      %3208 = vmatprep.subr.mxu0 0.0
      %3209 = vmatpush1.msra.mxu0 0.0
      %3210 = vmatprep.subr.mxu0 0.0
      %3211 = vmatpush1.msra.mxu0 0.0
      %3212 = vmatprep.subr.mxu0 0.0
      %3213 = vmatpush1.msra.mxu0 0.0
      %3214 = vmatprep.subr.mxu0 0.0
      %3215 = vmatpush1.msra.mxu0 0.0
      %3216 = vmatprep.subr.mxu0 0.0
      %3217 = vmatpush1.msra.mxu0 0.0
      %3218 = vmatprep.subr.mxu0 0.0
      %3219 = vmatpush1.msra.mxu0 0.0
      %3220 = vmatprep.subr.mxu0 0.0
      %3221 = vmatpush1.msra.mxu0 0.0
      %3222 = vmatprep.mubr.f32.mxu0 0.0
      %v3223 = vand.u32 %v2927, 4294901760
      %v3224 = vsub.f32 %v2927, %v3223
      %3225 = vmatmul.mubr.f32.gmra.mrb[0].mxu0 %v3224
      %v3226 = vpop.f32.mrb[0].mxu0
      %v3227 = vadd.f32 %v3133, %v3226
      %v3228 = vpop.f32.mrb[0].mxu0
      %3229 = vmatprep.mubr.f32.mxu0 0.0
      %v3230 = vand.u32 %v2930, 4294901760
      %v3231 = vsub.f32 %v2930, %v3230
      %3232 = vmatmul.mubr.f32.gmra.mrb[0].mxu0 %v3231
      %v3233 = vpop.f32.mrb[0].mxu0
      %v3234 = vadd.f32 %v3139, %v3233
      %v3235 = vpop.f32.mrb[0].mxu0
      %3236 = vdwg.mxu0
      %3237 = vmatprep.subr.mxu0 0.0
      %v3238 = vand.u32 %v2914, 4294901760
      %3239 = vmatpush1.msra.mxu0 %v3238
      %3240 = vmatprep.subr.mxu0 0.0
      %v3241 = vand.u32 %v2915, 4294901760
      %3242 = vmatpush1.msra.mxu0 %v3241
      %3243 = vmatprep.subr.mxu0 0.0
      %v3244 = vand.u32 %v2916, 4294901760
      %3245 = vmatpush1.msra.mxu0 %v3244
      %3246 = vmatprep.subr.mxu0 0.0
      %v3247 = vand.u32 %v2917, 4294901760
      %3248 = vmatpush1.msra.mxu0 %v3247
      %3249 = vmatprep.subr.mxu0 0.0
      %v3250 = vand.u32 %v2918, 4294901760
      %3251 = vmatpush1.msra.mxu0 %v3250
      %3252 = vmatprep.subr.mxu0 0.0
      %v3253 = vand.u32 %v2919, 4294901760
      %3254 = vmatpush1.msra.mxu0 %v3253
      %3255 = vmatprep.subr.mxu0 0.0
      %v3256 = vand.u32 %v2920, 4294901760
      %3257 = vmatpush1.msra.mxu0 %v3256
      %3258 = vmatprep.subr.mxu0 0.0
      %v3259 = vand.u32 %v2921, 4294901760
      %3260 = vmatpush1.msra.mxu0 %v3259
      %3261 = vmatprep.subr.mxu0 0.0
      %3262 = vmatpush1.msra.mxu0 0.0
      %3263 = vmatprep.subr.mxu0 0.0
      %3264 = vmatpush1.msra.mxu0 0.0
      %3265 = vmatprep.subr.mxu0 0.0
      %3266 = vmatpush1.msra.mxu0 0.0
      %3267 = vmatprep.subr.mxu0 0.0
      %3268 = vmatpush1.msra.mxu0 0.0
      %3269 = vmatprep.subr.mxu0 0.0
      %3270 = vmatpush1.msra.mxu0 0.0
      %3271 = vmatprep.subr.mxu0 0.0
      %3272 = vmatpush1.msra.mxu0 0.0
      %3273 = vmatprep.subr.mxu0 0.0
      %3274 = vmatpush1.msra.mxu0 0.0
      %3275 = vmatprep.subr.mxu0 0.0
      %3276 = vmatpush1.msra.mxu0 0.0
      %3277 = vmatprep.subr.mxu0 0.0
      %3278 = vmatpush1.msra.mxu0 0.0
      %3279 = vmatprep.subr.mxu0 0.0
      %3280 = vmatpush1.msra.mxu0 0.0
      %3281 = vmatprep.subr.mxu0 0.0
      %3282 = vmatpush1.msra.mxu0 0.0
      %3283 = vmatprep.subr.mxu0 0.0
      %3284 = vmatpush1.msra.mxu0 0.0
      %3285 = vmatprep.subr.mxu0 0.0
      %3286 = vmatpush1.msra.mxu0 0.0
      %3287 = vmatprep.subr.mxu0 0.0
      %3288 = vmatpush1.msra.mxu0 0.0
      %3289 = vmatprep.subr.mxu0 0.0
      %3290 = vmatpush1.msra.mxu0 0.0
      %3291 = vmatprep.subr.mxu0 0.0
      %3292 = vmatpush1.msra.mxu0 0.0
      %3293 = vmatprep.subr.mxu0 0.0
      %3294 = vmatpush1.msra.mxu0 0.0
      %3295 = vmatprep.subr.mxu0 0.0
      %3296 = vmatpush1.msra.mxu0 0.0
      %3297 = vmatprep.subr.mxu0 0.0
      %3298 = vmatpush1.msra.mxu0 0.0
      %3299 = vmatprep.subr.mxu0 0.0
      %3300 = vmatpush1.msra.mxu0 0.0
      %3301 = vmatprep.subr.mxu0 0.0
      %3302 = vmatpush1.msra.mxu0 0.0
      %3303 = vmatprep.subr.mxu0 0.0
      %3304 = vmatpush1.msra.mxu0 0.0
      %3305 = vmatprep.subr.mxu0 0.0
      %3306 = vmatpush1.msra.mxu0 0.0
      %3307 = vmatprep.subr.mxu0 0.0
      %3308 = vmatpush1.msra.mxu0 0.0
      %3309 = vmatprep.mubr.f32.mxu0 0.0
      %v3310 = vand.u32 %v2927, 4294901760
      %v3311 = vsub.f32 %v2927, %v3310
      %v3312 = vand.u32 %v3311, 4294901760
      %3313 = vmatmul.mubr.f32.gmra.mrb[0].mxu0 %v3312
      %v3314 = vpop.f32.mrb[0].mxu0
      %v3315 = vadd.f32 %v3227, %v3314
      %v3316 = vpop.f32.mrb[0].mxu0
      %3317 = vmatprep.mubr.f32.mxu0 0.0
      %v3318 = vand.u32 %v2930, 4294901760
      %v3319 = vsub.f32 %v2930, %v3318
      %v3320 = vand.u32 %v3319, 4294901760
      %3321 = vmatmul.mubr.f32.gmra.mrb[0].mxu0 %v3320
      %v3322 = vpop.f32.mrb[0].mxu0
      %v3323 = vadd.f32 %v3234, %v3322
      %v3324 = vpop.f32.mrb[0].mxu0
      %3325 = vdwg.mxu0
      %3326 = vmatprep.subr.mxu0 0.0
      %v3327 = vand.u32 %v2914, 4294901760
      %v3328 = vsub.f32 %v2914, %v3327
      %v3329 = vand.u32 %v3328, 4294901760
      %3330 = vmatpush1.msra.mxu0 %v3329
      %3331 = vmatprep.subr.mxu0 0.0
      %v3332 = vand.u32 %v2915, 4294901760
      %v3333 = vsub.f32 %v2915, %v3332
      %v3334 = vand.u32 %v3333, 4294901760
      %3335 = vmatpush1.msra.mxu0 %v3334
      %3336 = vmatprep.subr.mxu0 0.0
      %v3337 = vand.u32 %v2916, 4294901760
      %v3338 = vsub.f32 %v2916, %v3337
      %v3339 = vand.u32 %v3338, 4294901760
      %3340 = vmatpush1.msra.mxu0 %v3339
      %3341 = vmatprep.subr.mxu0 0.0
      %v3342 = vand.u32 %v2917, 4294901760
      %v3343 = vsub.f32 %v2917, %v3342
      %v3344 = vand.u32 %v3343, 4294901760
      %3345 = vmatpush1.msra.mxu0 %v3344
      %3346 = vmatprep.subr.mxu0 0.0
      %v3347 = vand.u32 %v2918, 4294901760
      %v3348 = vsub.f32 %v2918, %v3347
      %v3349 = vand.u32 %v3348, 4294901760
      %3350 = vmatpush1.msra.mxu0 %v3349
      %3351 = vmatprep.subr.mxu0 0.0
      %v3352 = vand.u32 %v2919, 4294901760
      %v3353 = vsub.f32 %v2919, %v3352
      %v3354 = vand.u32 %v3353, 4294901760
      %3355 = vmatpush1.msra.mxu0 %v3354
      %3356 = vmatprep.subr.mxu0 0.0
      %v3357 = vand.u32 %v2920, 4294901760
      %v3358 = vsub.f32 %v2920, %v3357
      %v3359 = vand.u32 %v3358, 4294901760
      %3360 = vmatpush1.msra.mxu0 %v3359
      %3361 = vmatprep.subr.mxu0 0.0
      %v3362 = vand.u32 %v2921, 4294901760
      %v3363 = vsub.f32 %v2921, %v3362
      %v3364 = vand.u32 %v3363, 4294901760
      %3365 = vmatpush1.msra.mxu0 %v3364
      %3366 = vmatprep.subr.mxu0 0.0
      %3367 = vmatpush1.msra.mxu0 0.0
      %3368 = vmatprep.subr.mxu0 0.0
      %3369 = vmatpush1.msra.mxu0 0.0
      %3370 = vmatprep.subr.mxu0 0.0
      %3371 = vmatpush1.msra.mxu0 0.0
      %3372 = vmatprep.subr.mxu0 0.0
      %3373 = vmatpush1.msra.mxu0 0.0
      %3374 = vmatprep.subr.mxu0 0.0
      %3375 = vmatpush1.msra.mxu0 0.0
      %3376 = vmatprep.subr.mxu0 0.0
      %3377 = vmatpush1.msra.mxu0 0.0
      %3378 = vmatprep.subr.mxu0 0.0
      %3379 = vmatpush1.msra.mxu0 0.0
      %3380 = vmatprep.subr.mxu0 0.0
      %3381 = vmatpush1.msra.mxu0 0.0
      %3382 = vmatprep.subr.mxu0 0.0
      %3383 = vmatpush1.msra.mxu0 0.0
      %3384 = vmatprep.subr.mxu0 0.0
      %3385 = vmatpush1.msra.mxu0 0.0
      %3386 = vmatprep.subr.mxu0 0.0
      %3387 = vmatpush1.msra.mxu0 0.0
      %3388 = vmatprep.subr.mxu0 0.0
      %3389 = vmatpush1.msra.mxu0 0.0
      %3390 = vmatprep.subr.mxu0 0.0
      %3391 = vmatpush1.msra.mxu0 0.0
      %3392 = vmatprep.subr.mxu0 0.0
      %3393 = vmatpush1.msra.mxu0 0.0
      %3394 = vmatprep.subr.mxu0 0.0
      %3395 = vmatpush1.msra.mxu0 0.0
      %3396 = vmatprep.subr.mxu0 0.0
      %3397 = vmatpush1.msra.mxu0 0.0
      %3398 = vmatprep.subr.mxu0 0.0
      %3399 = vmatpush1.msra.mxu0 0.0
      %3400 = vmatprep.subr.mxu0 0.0
      %3401 = vmatpush1.msra.mxu0 0.0
      %3402 = vmatprep.subr.mxu0 0.0
      %3403 = vmatpush1.msra.mxu0 0.0
      %3404 = vmatprep.subr.mxu0 0.0
      %3405 = vmatpush1.msra.mxu0 0.0
      %3406 = vmatprep.subr.mxu0 0.0
      %3407 = vmatpush1.msra.mxu0 0.0
      %3408 = vmatprep.subr.mxu0 0.0
      %3409 = vmatpush1.msra.mxu0 0.0
      %3410 = vmatprep.subr.mxu0 0.0
      %3411 = vmatpush1.msra.mxu0 0.0
      %3412 = vmatprep.subr.mxu0 0.0
      %3413 = vmatpush1.msra.mxu0 0.0
      %3414 = vmatprep.mubr.f32.mxu0 0.0
      %v3415 = vand.u32 %v2927, 4294901760
      %3416 = vmatmul.mubr.f32.gmra.mrb[0].mxu0 %v3415
      %v3417 = vpop.f32.mrb[0].mxu0
      %v3418 = vadd.f32 %v3315, %v3417
      %v3419 = vpop.f32.mrb[0].mxu0
      %3420 = vmatprep.mubr.f32.mxu0 0.0
      %v3421 = vand.u32 %v2930, 4294901760
      %3422 = vmatmul.mubr.f32.gmra.mrb[0].mxu0 %v3421
      %v3423 = vpop.f32.mrb[0].mxu0
      %v3424 = vadd.f32 %v3323, %v3423
      %v3425 = vpop.f32.mrb[0].mxu0
      %3426 = vdwg.mxu0
      %3427 = vmatprep.subr.mxu0 0.0
      %v3428 = vand.u32 %v2914, 4294901760
      %3429 = vmatpush1.msra.mxu0 %v3428
      %3430 = vmatprep.subr.mxu0 0.0
      %v3431 = vand.u32 %v2915, 4294901760
      %3432 = vmatpush1.msra.mxu0 %v3431
      %3433 = vmatprep.subr.mxu0 0.0
      %v3434 = vand.u32 %v2916, 4294901760
      %3435 = vmatpush1.msra.mxu0 %v3434
      %3436 = vmatprep.subr.mxu0 0.0
      %v3437 = vand.u32 %v2917, 4294901760
      %3438 = vmatpush1.msra.mxu0 %v3437
      %3439 = vmatprep.subr.mxu0 0.0
      %v3440 = vand.u32 %v2918, 4294901760
      %3441 = vmatpush1.msra.mxu0 %v3440
      %3442 = vmatprep.subr.mxu0 0.0
      %v3443 = vand.u32 %v2919, 4294901760
      %3444 = vmatpush1.msra.mxu0 %v3443
      %3445 = vmatprep.subr.mxu0 0.0
      %v3446 = vand.u32 %v2920, 4294901760
      %3447 = vmatpush1.msra.mxu0 %v3446
      %3448 = vmatprep.subr.mxu0 0.0
      %v3449 = vand.u32 %v2921, 4294901760
      %3450 = vmatpush1.msra.mxu0 %v3449
      %3451 = vmatprep.subr.mxu0 0.0
      %3452 = vmatpush1.msra.mxu0 0.0
      %3453 = vmatprep.subr.mxu0 0.0
      %3454 = vmatpush1.msra.mxu0 0.0
      %3455 = vmatprep.subr.mxu0 0.0
      %3456 = vmatpush1.msra.mxu0 0.0
      %3457 = vmatprep.subr.mxu0 0.0
      %3458 = vmatpush1.msra.mxu0 0.0
      %3459 = vmatprep.subr.mxu0 0.0
      %3460 = vmatpush1.msra.mxu0 0.0
      %3461 = vmatprep.subr.mxu0 0.0
      %3462 = vmatpush1.msra.mxu0 0.0
      %3463 = vmatprep.subr.mxu0 0.0
      %3464 = vmatpush1.msra.mxu0 0.0
      %3465 = vmatprep.subr.mxu0 0.0
      %3466 = vmatpush1.msra.mxu0 0.0
      %3467 = vmatprep.subr.mxu0 0.0
      %3468 = vmatpush1.msra.mxu0 0.0
      %3469 = vmatprep.subr.mxu0 0.0
      %3470 = vmatpush1.msra.mxu0 0.0
      %3471 = vmatprep.subr.mxu0 0.0
      %3472 = vmatpush1.msra.mxu0 0.0
      %3473 = vmatprep.subr.mxu0 0.0
      %3474 = vmatpush1.msra.mxu0 0.0
      %3475 = vmatprep.subr.mxu0 0.0
      %3476 = vmatpush1.msra.mxu0 0.0
      %3477 = vmatprep.subr.mxu0 0.0
      %3478 = vmatpush1.msra.mxu0 0.0
      %3479 = vmatprep.subr.mxu0 0.0
      %3480 = vmatpush1.msra.mxu0 0.0
      %3481 = vmatprep.subr.mxu0 0.0
      %3482 = vmatpush1.msra.mxu0 0.0
      %3483 = vmatprep.subr.mxu0 0.0
      %3484 = vmatpush1.msra.mxu0 0.0
      %3485 = vmatprep.subr.mxu0 0.0
      %3486 = vmatpush1.msra.mxu0 0.0
      %3487 = vmatprep.subr.mxu0 0.0
      %3488 = vmatpush1.msra.mxu0 0.0
      %3489 = vmatprep.subr.mxu0 0.0
      %3490 = vmatpush1.msra.mxu0 0.0
      %3491 = vmatprep.subr.mxu0 0.0
      %3492 = vmatpush1.msra.mxu0 0.0
      %3493 = vmatprep.subr.mxu0 0.0
      %3494 = vmatpush1.msra.mxu0 0.0
      %3495 = vmatprep.subr.mxu0 0.0
      %3496 = vmatpush1.msra.mxu0 0.0
      %3497 = vmatprep.subr.mxu0 0.0
      %3498 = vmatpush1.msra.mxu0 0.0
      %3499 = vmatprep.mubr.f32.mxu0 0.0
      %v3500 = vand.u32 %v2927, 4294901760
      %3501 = vmatmul.mubr.f32.gmra.mrb[0].mxu0 %v3500
      %v3502 = vpop.f32.mrb[0].mxu0
      %v3503 = vadd.f32 %v3418, %v3502
      %v3504 = vpop.f32.mrb[0].mxu0
      %3505 = vmatprep.mubr.f32.mxu0 0.0
      %v3506 = vand.u32 %v2930, 4294901760
      %3507 = vmatmul.mubr.f32.gmra.mrb[0].mxu0 %v3506
      %v3508 = vpop.f32.mrb[0].mxu0
      %v3509 = vadd.f32 %v3424, %v3508
      %v3510 = vpop.f32.mrb[0].mxu0
      %3511 = vdwg.mxu0
      %v3512 = vmul.f32 %v3503, 0.5
      %v3513 = vmul.f32 %v3509, 0.5
      %v3514 = vmul.f32 %v3503, 0.70710677
      %v3515 = vmul.f32 %v3509, 0.70710677
      %v3516 = verf.f32.pop %v3514
      %v3517 = verf.f32.pop %v3515
      %v3518 = vadd.f32 %v3516, 1.0
      %v3519 = vadd.f32 %v3517, 1.0
      %v3520 = vmul.f32 %v3512, %v3518
      %v3521 = vmul.f32 %v3513, %v3519
      %v3522 = vld [vmem:[%s4] sm:$0xff]
      %v3523 = vld [vmem:[%s4 + $0x8] sm:$0xff]
      %v3524 = vld [vmem:[%s4 + $0x10] sm:$0xff]
      %v3525 = vld [vmem:[%s4 + $0x18] sm:$0xff]
      %v3526 = vld [vmem:[%s4 + $0x20] sm:$0xff]
      %v3527 = vld [vmem:[%s4 + $0x28] sm:$0xff]
      %v3528 = vld [vmem:[%s4 + $0x30] sm:$0xff]
      %v3529 = vld [vmem:[%s4 + $0x38] sm:$0xff]
      %v3530 = vld [vmem:[%s4 + $0x40] sm:$0xff]
      %v3531 = vld [vmem:[%s4 + $0x48] sm:$0xff]
      %v3532 = vld [vmem:[%s4 + $0x50] sm:$0xff]
      %v3533 = vld [vmem:[%s4 + $0x58] sm:$0xff]
      %v3534 = vld [vmem:[%s4 + $0x60] sm:$0xff]
      %v3535 = vld [vmem:[%s4 + $0x68] sm:$0xff]
      %v3536 = vld [vmem:[%s4 + $0x70] sm:$0xff]
      %v3537 = vld [vmem:[%s4 + $0x78] sm:$0xff]
      %v3538 = vlaneseq
      %v3539 = vshrl.u32 %v3538, 7
      %v3540 = vsub.s32 0, %v3539
      %v3541 = vrot.slane %v283, %v3540
      %3542 = vmatprep.subr.mxu0 0.0
      %v3543 = vand.u32 %v3522, 4294901760
      %3544 = vmatpush1.msra.mxu0 %v3543
      %3545 = vmatprep.subr.mxu0 0.0
      %v3546 = vand.u32 %v3523, 4294901760
      %3547 = vmatpush1.msra.mxu0 %v3546
      %3548 = vmatprep.subr.mxu0 0.0
      %v3549 = vand.u32 %v3524, 4294901760
      %3550 = vmatpush1.msra.mxu0 %v3549
      %3551 = vmatprep.subr.mxu0 0.0
      %v3552 = vand.u32 %v3525, 4294901760
      %3553 = vmatpush1.msra.mxu0 %v3552
      %3554 = vmatprep.subr.mxu0 0.0
      %v3555 = vand.u32 %v3526, 4294901760
      %3556 = vmatpush1.msra.mxu0 %v3555
      %3557 = vmatprep.subr.mxu0 0.0
      %v3558 = vand.u32 %v3527, 4294901760
      %3559 = vmatpush1.msra.mxu0 %v3558
      %3560 = vmatprep.subr.mxu0 0.0
      %v3561 = vand.u32 %v3528, 4294901760
      %3562 = vmatpush1.msra.mxu0 %v3561
      %3563 = vmatprep.subr.mxu0 0.0
      %v3564 = vand.u32 %v3529, 4294901760
      %3565 = vmatpush1.msra.mxu0 %v3564
      %3566 = vmatprep.subr.mxu0 0.0
      %v3567 = vand.u32 %v3530, 4294901760
      %3568 = vmatpush1.msra.mxu0 %v3567
      %3569 = vmatprep.subr.mxu0 0.0
      %v3570 = vand.u32 %v3531, 4294901760
      %3571 = vmatpush1.msra.mxu0 %v3570
      %3572 = vmatprep.subr.mxu0 0.0
      %v3573 = vand.u32 %v3532, 4294901760
      %3574 = vmatpush1.msra.mxu0 %v3573
      %3575 = vmatprep.subr.mxu0 0.0
      %v3576 = vand.u32 %v3533, 4294901760
      %3577 = vmatpush1.msra.mxu0 %v3576
      %3578 = vmatprep.subr.mxu0 0.0
      %v3579 = vand.u32 %v3534, 4294901760
      %3580 = vmatpush1.msra.mxu0 %v3579
      %3581 = vmatprep.subr.mxu0 0.0
      %v3582 = vand.u32 %v3535, 4294901760
      %3583 = vmatpush1.msra.mxu0 %v3582
      %3584 = vmatprep.subr.mxu0 0.0
      %v3585 = vand.u32 %v3536, 4294901760
      %3586 = vmatpush1.msra.mxu0 %v3585
      %3587 = vmatprep.subr.mxu0 0.0
      %v3588 = vand.u32 %v3537, 4294901760
      %3589 = vmatpush1.msra.mxu0 %v3588
      %3590 = vmatprep.subr.mxu0 0.0
      %3591 = vmatpush1.msra.mxu0 0.0
      %3592 = vmatprep.subr.mxu0 0.0
      %3593 = vmatpush1.msra.mxu0 0.0
      %3594 = vmatprep.subr.mxu0 0.0
      %3595 = vmatpush1.msra.mxu0 0.0
      %3596 = vmatprep.subr.mxu0 0.0
      %3597 = vmatpush1.msra.mxu0 0.0
      %3598 = vmatprep.subr.mxu0 0.0
      %3599 = vmatpush1.msra.mxu0 0.0
      %3600 = vmatprep.subr.mxu0 0.0
      %3601 = vmatpush1.msra.mxu0 0.0
      %3602 = vmatprep.subr.mxu0 0.0
      %3603 = vmatpush1.msra.mxu0 0.0
      %3604 = vmatprep.subr.mxu0 0.0
      %3605 = vmatpush1.msra.mxu0 0.0
      %3606 = vmatprep.subr.mxu0 0.0
      %3607 = vmatpush1.msra.mxu0 0.0
      %3608 = vmatprep.subr.mxu0 0.0
      %3609 = vmatpush1.msra.mxu0 0.0
      %3610 = vmatprep.subr.mxu0 0.0
      %3611 = vmatpush1.msra.mxu0 0.0
      %3612 = vmatprep.subr.mxu0 0.0
      %3613 = vmatpush1.msra.mxu0 0.0
      %3614 = vmatprep.subr.mxu0 0.0
      %3615 = vmatpush1.msra.mxu0 0.0
      %3616 = vmatprep.subr.mxu0 0.0
      %3617 = vmatpush1.msra.mxu0 0.0
      %3618 = vmatprep.subr.mxu0 0.0
      %3619 = vmatpush1.msra.mxu0 0.0
      %3620 = vmatprep.subr.mxu0 0.0
      %3621 = vmatpush1.msra.mxu0 0.0
      %3622 = vmatprep.mubr.f32.mxu0 0.0
      %v3623 = vand.u32 %v3520, 4294901760
      %v3624 = vsub.f32 %v3520, %v3623
      %v3625 = vand.u32 %v3624, 4294901760
      %v3626 = vsub.f32 %v3624, %v3625
      %v3627 = vand.u32 %v3626, 4294901760
      %3628 = vmatmul.mubr.f32.gmra.mrb[0].mxu0 %v3627
      %v3629 = vpop.f32.mrb[0].mxu0
      %v3630 = vadd.f32 %v3541, %v3629
      %v3631 = vpop.f32.mrb[0].mxu0
      %3632 = vmatprep.mubr.f32.mxu0 0.0
      %v3633 = vand.u32 %v3521, 4294901760
      %v3634 = vsub.f32 %v3521, %v3633
      %v3635 = vand.u32 %v3634, 4294901760
      %v3636 = vsub.f32 %v3634, %v3635
      %v3637 = vand.u32 %v3636, 4294901760
      %3638 = vmatmul.mubr.f32.gmra.mrb[0].mxu0 %v3637
      %v3639 = vpop.f32.mrb[0].mxu0
      %v3640 = vadd.f32 %v3541, %v3639
      %v3641 = vpop.f32.mrb[0].mxu0
      %3642 = vdwg.mxu0
      %3643 = vmatprep.subr.mxu0 0.0
      %v3644 = vand.u32 %v3522, 4294901760
      %v3645 = vsub.f32 %v3522, %v3644
      %v3646 = vand.u32 %v3645, 4294901760
      %v3647 = vsub.f32 %v3645, %v3646
      %v3648 = vand.u32 %v3647, 4294901760
      %3649 = vmatpush1.msra.mxu0 %v3648
      %3650 = vmatprep.subr.mxu0 0.0
      %v3651 = vand.u32 %v3523, 4294901760
      %v3652 = vsub.f32 %v3523, %v3651
      %v3653 = vand.u32 %v3652, 4294901760
      %v3654 = vsub.f32 %v3652, %v3653
      %v3655 = vand.u32 %v3654, 4294901760
      %3656 = vmatpush1.msra.mxu0 %v3655
      %3657 = vmatprep.subr.mxu0 0.0
      %v3658 = vand.u32 %v3524, 4294901760
      %v3659 = vsub.f32 %v3524, %v3658
      %v3660 = vand.u32 %v3659, 4294901760
      %v3661 = vsub.f32 %v3659, %v3660
      %v3662 = vand.u32 %v3661, 4294901760
      %3663 = vmatpush1.msra.mxu0 %v3662
      %3664 = vmatprep.subr.mxu0 0.0
      %v3665 = vand.u32 %v3525, 4294901760
      %v3666 = vsub.f32 %v3525, %v3665
      %v3667 = vand.u32 %v3666, 4294901760
      %v3668 = vsub.f32 %v3666, %v3667
      %v3669 = vand.u32 %v3668, 4294901760
      %3670 = vmatpush1.msra.mxu0 %v3669
      %3671 = vmatprep.subr.mxu0 0.0
      %v3672 = vand.u32 %v3526, 4294901760
      %v3673 = vsub.f32 %v3526, %v3672
      %v3674 = vand.u32 %v3673, 4294901760
      %v3675 = vsub.f32 %v3673, %v3674
      %v3676 = vand.u32 %v3675, 4294901760
      %3677 = vmatpush1.msra.mxu0 %v3676
      %3678 = vmatprep.subr.mxu0 0.0
      %v3679 = vand.u32 %v3527, 4294901760
      %v3680 = vsub.f32 %v3527, %v3679
      %v3681 = vand.u32 %v3680, 4294901760
      %v3682 = vsub.f32 %v3680, %v3681
      %v3683 = vand.u32 %v3682, 4294901760
      %3684 = vmatpush1.msra.mxu0 %v3683
      %3685 = vmatprep.subr.mxu0 0.0
      %v3686 = vand.u32 %v3528, 4294901760
      %v3687 = vsub.f32 %v3528, %v3686
      %v3688 = vand.u32 %v3687, 4294901760
      %v3689 = vsub.f32 %v3687, %v3688
      %v3690 = vand.u32 %v3689, 4294901760
      %3691 = vmatpush1.msra.mxu0 %v3690
      %3692 = vmatprep.subr.mxu0 0.0
      %v3693 = vand.u32 %v3529, 4294901760
      %v3694 = vsub.f32 %v3529, %v3693
      %v3695 = vand.u32 %v3694, 4294901760
      %v3696 = vsub.f32 %v3694, %v3695
      %v3697 = vand.u32 %v3696, 4294901760
      %3698 = vmatpush1.msra.mxu0 %v3697
      %3699 = vmatprep.subr.mxu0 0.0
      %v3700 = vand.u32 %v3530, 4294901760
      %v3701 = vsub.f32 %v3530, %v3700
      %v3702 = vand.u32 %v3701, 4294901760
      %v3703 = vsub.f32 %v3701, %v3702
      %v3704 = vand.u32 %v3703, 4294901760
      %3705 = vmatpush1.msra.mxu0 %v3704
      %3706 = vmatprep.subr.mxu0 0.0
      %v3707 = vand.u32 %v3531, 4294901760
      %v3708 = vsub.f32 %v3531, %v3707
      %v3709 = vand.u32 %v3708, 4294901760
      %v3710 = vsub.f32 %v3708, %v3709
      %v3711 = vand.u32 %v3710, 4294901760
      %3712 = vmatpush1.msra.mxu0 %v3711
      %3713 = vmatprep.subr.mxu0 0.0
      %v3714 = vand.u32 %v3532, 4294901760
      %v3715 = vsub.f32 %v3532, %v3714
      %v3716 = vand.u32 %v3715, 4294901760
      %v3717 = vsub.f32 %v3715, %v3716
      %v3718 = vand.u32 %v3717, 4294901760
      %3719 = vmatpush1.msra.mxu0 %v3718
      %3720 = vmatprep.subr.mxu0 0.0
      %v3721 = vand.u32 %v3533, 4294901760
      %v3722 = vsub.f32 %v3533, %v3721
      %v3723 = vand.u32 %v3722, 4294901760
      %v3724 = vsub.f32 %v3722, %v3723
      %v3725 = vand.u32 %v3724, 4294901760
      %3726 = vmatpush1.msra.mxu0 %v3725
      %3727 = vmatprep.subr.mxu0 0.0
      %v3728 = vand.u32 %v3534, 4294901760
      %v3729 = vsub.f32 %v3534, %v3728
      %v3730 = vand.u32 %v3729, 4294901760
      %v3731 = vsub.f32 %v3729, %v3730
      %v3732 = vand.u32 %v3731, 4294901760
      %3733 = vmatpush1.msra.mxu0 %v3732
      %3734 = vmatprep.subr.mxu0 0.0
      %v3735 = vand.u32 %v3535, 4294901760
      %v3736 = vsub.f32 %v3535, %v3735
      %v3737 = vand.u32 %v3736, 4294901760
      %v3738 = vsub.f32 %v3736, %v3737
      %v3739 = vand.u32 %v3738, 4294901760
      %3740 = vmatpush1.msra.mxu0 %v3739
      %3741 = vmatprep.subr.mxu0 0.0
      %v3742 = vand.u32 %v3536, 4294901760
      %v3743 = vsub.f32 %v3536, %v3742
      %v3744 = vand.u32 %v3743, 4294901760
      %v3745 = vsub.f32 %v3743, %v3744
      %v3746 = vand.u32 %v3745, 4294901760
      %3747 = vmatpush1.msra.mxu0 %v3746
      %3748 = vmatprep.subr.mxu0 0.0
      %v3749 = vand.u32 %v3537, 4294901760
      %v3750 = vsub.f32 %v3537, %v3749
      %v3751 = vand.u32 %v3750, 4294901760
      %v3752 = vsub.f32 %v3750, %v3751
      %v3753 = vand.u32 %v3752, 4294901760
      %3754 = vmatpush1.msra.mxu0 %v3753
      %3755 = vmatprep.subr.mxu0 0.0
      %3756 = vmatpush1.msra.mxu0 0.0
      %3757 = vmatprep.subr.mxu0 0.0
      %3758 = vmatpush1.msra.mxu0 0.0
      %3759 = vmatprep.subr.mxu0 0.0
      %3760 = vmatpush1.msra.mxu0 0.0
      %3761 = vmatprep.subr.mxu0 0.0
      %3762 = vmatpush1.msra.mxu0 0.0
      %3763 = vmatprep.subr.mxu0 0.0
      %3764 = vmatpush1.msra.mxu0 0.0
      %3765 = vmatprep.subr.mxu0 0.0
      %3766 = vmatpush1.msra.mxu0 0.0
      %3767 = vmatprep.subr.mxu0 0.0
      %3768 = vmatpush1.msra.mxu0 0.0
      %3769 = vmatprep.subr.mxu0 0.0
      %3770 = vmatpush1.msra.mxu0 0.0
      %3771 = vmatprep.subr.mxu0 0.0
      %3772 = vmatpush1.msra.mxu0 0.0
      %3773 = vmatprep.subr.mxu0 0.0
      %3774 = vmatpush1.msra.mxu0 0.0
      %3775 = vmatprep.subr.mxu0 0.0
      %3776 = vmatpush1.msra.mxu0 0.0
      %3777 = vmatprep.subr.mxu0 0.0
      %3778 = vmatpush1.msra.mxu0 0.0
      %3779 = vmatprep.subr.mxu0 0.0
      %3780 = vmatpush1.msra.mxu0 0.0
      %3781 = vmatprep.subr.mxu0 0.0
      %3782 = vmatpush1.msra.mxu0 0.0
      %3783 = vmatprep.subr.mxu0 0.0
      %3784 = vmatpush1.msra.mxu0 0.0
      %3785 = vmatprep.subr.mxu0 0.0
      %3786 = vmatpush1.msra.mxu0 0.0
      %3787 = vmatprep.mubr.f32.mxu0 0.0
      %v3788 = vand.u32 %v3520, 4294901760
      %3789 = vmatmul.mubr.f32.gmra.mrb[0].mxu0 %v3788
      %v3790 = vpop.f32.mrb[0].mxu0
      %v3791 = vadd.f32 %v3630, %v3790
      %v3792 = vpop.f32.mrb[0].mxu0
      %3793 = vmatprep.mubr.f32.mxu0 0.0
      %v3794 = vand.u32 %v3521, 4294901760
      %3795 = vmatmul.mubr.f32.gmra.mrb[0].mxu0 %v3794
      %v3796 = vpop.f32.mrb[0].mxu0
      %v3797 = vadd.f32 %v3640, %v3796
      %v3798 = vpop.f32.mrb[0].mxu0
      %3799 = vdwg.mxu0
      %3800 = vmatprep.subr.mxu0 0.0
      %v3801 = vand.u32 %v3522, 4294901760
      %v3802 = vsub.f32 %v3522, %v3801
      %3803 = vmatpush1.msra.mxu0 %v3802
      %3804 = vmatprep.subr.mxu0 0.0
      %v3805 = vand.u32 %v3523, 4294901760
      %v3806 = vsub.f32 %v3523, %v3805
      %3807 = vmatpush1.msra.mxu0 %v3806
      %3808 = vmatprep.subr.mxu0 0.0
      %v3809 = vand.u32 %v3524, 4294901760
      %v3810 = vsub.f32 %v3524, %v3809
      %3811 = vmatpush1.msra.mxu0 %v3810
      %3812 = vmatprep.subr.mxu0 0.0
      %v3813 = vand.u32 %v3525, 4294901760
      %v3814 = vsub.f32 %v3525, %v3813
      %3815 = vmatpush1.msra.mxu0 %v3814
      %3816 = vmatprep.subr.mxu0 0.0
      %v3817 = vand.u32 %v3526, 4294901760
      %v3818 = vsub.f32 %v3526, %v3817
      %3819 = vmatpush1.msra.mxu0 %v3818
      %3820 = vmatprep.subr.mxu0 0.0
      %v3821 = vand.u32 %v3527, 4294901760
      %v3822 = vsub.f32 %v3527, %v3821
      %3823 = vmatpush1.msra.mxu0 %v3822
      %3824 = vmatprep.subr.mxu0 0.0
      %v3825 = vand.u32 %v3528, 4294901760
      %v3826 = vsub.f32 %v3528, %v3825
      %3827 = vmatpush1.msra.mxu0 %v3826
      %3828 = vmatprep.subr.mxu0 0.0
      %v3829 = vand.u32 %v3529, 4294901760
      %v3830 = vsub.f32 %v3529, %v3829
      %3831 = vmatpush1.msra.mxu0 %v3830
      %3832 = vmatprep.subr.mxu0 0.0
      %v3833 = vand.u32 %v3530, 4294901760
      %v3834 = vsub.f32 %v3530, %v3833
      %3835 = vmatpush1.msra.mxu0 %v3834
      %3836 = vmatprep.subr.mxu0 0.0
      %v3837 = vand.u32 %v3531, 4294901760
      %v3838 = vsub.f32 %v3531, %v3837
      %3839 = vmatpush1.msra.mxu0 %v3838
      %3840 = vmatprep.subr.mxu0 0.0
      %v3841 = vand.u32 %v3532, 4294901760
      %v3842 = vsub.f32 %v3532, %v3841
      %3843 = vmatpush1.msra.mxu0 %v3842
      %3844 = vmatprep.subr.mxu0 0.0
      %v3845 = vand.u32 %v3533, 4294901760
      %v3846 = vsub.f32 %v3533, %v3845
      %3847 = vmatpush1.msra.mxu0 %v3846
      %3848 = vmatprep.subr.mxu0 0.0
      %v3849 = vand.u32 %v3534, 4294901760
      %v3850 = vsub.f32 %v3534, %v3849
      %3851 = vmatpush1.msra.mxu0 %v3850
      %3852 = vmatprep.subr.mxu0 0.0
      %v3853 = vand.u32 %v3535, 4294901760
      %v3854 = vsub.f32 %v3535, %v3853
      %3855 = vmatpush1.msra.mxu0 %v3854
      %3856 = vmatprep.subr.mxu0 0.0
      %v3857 = vand.u32 %v3536, 4294901760
      %v3858 = vsub.f32 %v3536, %v3857
      %3859 = vmatpush1.msra.mxu0 %v3858
      %3860 = vmatprep.subr.mxu0 0.0
      %v3861 = vand.u32 %v3537, 4294901760
      %v3862 = vsub.f32 %v3537, %v3861
      %3863 = vmatpush1.msra.mxu0 %v3862
      %3864 = vmatprep.subr.mxu0 0.0
      %3865 = vmatpush1.msra.mxu0 0.0
      %3866 = vmatprep.subr.mxu0 0.0
      %3867 = vmatpush1.msra.mxu0 0.0
      %3868 = vmatprep.subr.mxu0 0.0
      %3869 = vmatpush1.msra.mxu0 0.0
      %3870 = vmatprep.subr.mxu0 0.0
      %3871 = vmatpush1.msra.mxu0 0.0
      %3872 = vmatprep.subr.mxu0 0.0
      %3873 = vmatpush1.msra.mxu0 0.0
      %3874 = vmatprep.subr.mxu0 0.0
      %3875 = vmatpush1.msra.mxu0 0.0
      %3876 = vmatprep.subr.mxu0 0.0
      %3877 = vmatpush1.msra.mxu0 0.0
      %3878 = vmatprep.subr.mxu0 0.0
      %3879 = vmatpush1.msra.mxu0 0.0
      %3880 = vmatprep.subr.mxu0 0.0
      %3881 = vmatpush1.msra.mxu0 0.0
      %3882 = vmatprep.subr.mxu0 0.0
      %3883 = vmatpush1.msra.mxu0 0.0
      %3884 = vmatprep.subr.mxu0 0.0
      %3885 = vmatpush1.msra.mxu0 0.0
      %3886 = vmatprep.subr.mxu0 0.0
      %3887 = vmatpush1.msra.mxu0 0.0
      %3888 = vmatprep.subr.mxu0 0.0
      %3889 = vmatpush1.msra.mxu0 0.0
      %3890 = vmatprep.subr.mxu0 0.0
      %3891 = vmatpush1.msra.mxu0 0.0
      %3892 = vmatprep.subr.mxu0 0.0
      %3893 = vmatpush1.msra.mxu0 0.0
      %3894 = vmatprep.subr.mxu0 0.0
      %3895 = vmatpush1.msra.mxu0 0.0
      %3896 = vmatprep.mubr.f32.mxu0 0.0
      %v3897 = vand.u32 %v3520, 4294901760
      %v3898 = vsub.f32 %v3520, %v3897
      %3899 = vmatmul.mubr.f32.gmra.mrb[0].mxu0 %v3898
      %v3900 = vpop.f32.mrb[0].mxu0
      %v3901 = vadd.f32 %v3791, %v3900
      %v3902 = vpop.f32.mrb[0].mxu0
      %3903 = vmatprep.mubr.f32.mxu0 0.0
      %v3904 = vand.u32 %v3521, 4294901760
      %v3905 = vsub.f32 %v3521, %v3904
      %3906 = vmatmul.mubr.f32.gmra.mrb[0].mxu0 %v3905
      %v3907 = vpop.f32.mrb[0].mxu0
      %v3908 = vadd.f32 %v3797, %v3907
      %v3909 = vpop.f32.mrb[0].mxu0
      %3910 = vdwg.mxu0
      %3911 = vmatprep.subr.mxu0 0.0
      %v3912 = vand.u32 %v3522, 4294901760
      %3913 = vmatpush1.msra.mxu0 %v3912
      %3914 = vmatprep.subr.mxu0 0.0
      %v3915 = vand.u32 %v3523, 4294901760
      %3916 = vmatpush1.msra.mxu0 %v3915
      %3917 = vmatprep.subr.mxu0 0.0
      %v3918 = vand.u32 %v3524, 4294901760
      %3919 = vmatpush1.msra.mxu0 %v3918
      %3920 = vmatprep.subr.mxu0 0.0
      %v3921 = vand.u32 %v3525, 4294901760
      %3922 = vmatpush1.msra.mxu0 %v3921
      %3923 = vmatprep.subr.mxu0 0.0
      %v3924 = vand.u32 %v3526, 4294901760
      %3925 = vmatpush1.msra.mxu0 %v3924
      %3926 = vmatprep.subr.mxu0 0.0
      %v3927 = vand.u32 %v3527, 4294901760
      %3928 = vmatpush1.msra.mxu0 %v3927
      %3929 = vmatprep.subr.mxu0 0.0
      %v3930 = vand.u32 %v3528, 4294901760
      %3931 = vmatpush1.msra.mxu0 %v3930
      %3932 = vmatprep.subr.mxu0 0.0
      %v3933 = vand.u32 %v3529, 4294901760
      %3934 = vmatpush1.msra.mxu0 %v3933
      %3935 = vmatprep.subr.mxu0 0.0
      %v3936 = vand.u32 %v3530, 4294901760
      %3937 = vmatpush1.msra.mxu0 %v3936
      %3938 = vmatprep.subr.mxu0 0.0
      %v3939 = vand.u32 %v3531, 4294901760
      %3940 = vmatpush1.msra.mxu0 %v3939
      %3941 = vmatprep.subr.mxu0 0.0
      %v3942 = vand.u32 %v3532, 4294901760
      %3943 = vmatpush1.msra.mxu0 %v3942
      %3944 = vmatprep.subr.mxu0 0.0
      %v3945 = vand.u32 %v3533, 4294901760
      %3946 = vmatpush1.msra.mxu0 %v3945
      %3947 = vmatprep.subr.mxu0 0.0
      %v3948 = vand.u32 %v3534, 4294901760
      %3949 = vmatpush1.msra.mxu0 %v3948
      %3950 = vmatprep.subr.mxu0 0.0
      %v3951 = vand.u32 %v3535, 4294901760
      %3952 = vmatpush1.msra.mxu0 %v3951
      %3953 = vmatprep.subr.mxu0 0.0
      %v3954 = vand.u32 %v3536, 4294901760
      %3955 = vmatpush1.msra.mxu0 %v3954
      %3956 = vmatprep.subr.mxu0 0.0
      %v3957 = vand.u32 %v3537, 4294901760
      %3958 = vmatpush1.msra.mxu0 %v3957
      %3959 = vmatprep.subr.mxu0 0.0
      %3960 = vmatpush1.msra.mxu0 0.0
      %3961 = vmatprep.subr.mxu0 0.0
      %3962 = vmatpush1.msra.mxu0 0.0
      %3963 = vmatprep.subr.mxu0 0.0
      %3964 = vmatpush1.msra.mxu0 0.0
      %3965 = vmatprep.subr.mxu0 0.0
      %3966 = vmatpush1.msra.mxu0 0.0
      %3967 = vmatprep.subr.mxu0 0.0
      %3968 = vmatpush1.msra.mxu0 0.0
      %3969 = vmatprep.subr.mxu0 0.0
      %3970 = vmatpush1.msra.mxu0 0.0
      %3971 = vmatprep.subr.mxu0 0.0
      %3972 = vmatpush1.msra.mxu0 0.0
      %3973 = vmatprep.subr.mxu0 0.0
      %3974 = vmatpush1.msra.mxu0 0.0
      %3975 = vmatprep.subr.mxu0 0.0
      %3976 = vmatpush1.msra.mxu0 0.0
      %3977 = vmatprep.subr.mxu0 0.0
      %3978 = vmatpush1.msra.mxu0 0.0
      %3979 = vmatprep.subr.mxu0 0.0
      %3980 = vmatpush1.msra.mxu0 0.0
      %3981 = vmatprep.subr.mxu0 0.0
      %3982 = vmatpush1.msra.mxu0 0.0
      %3983 = vmatprep.subr.mxu0 0.0
      %3984 = vmatpush1.msra.mxu0 0.0
      %3985 = vmatprep.subr.mxu0 0.0
      %3986 = vmatpush1.msra.mxu0 0.0
      %3987 = vmatprep.subr.mxu0 0.0
      %3988 = vmatpush1.msra.mxu0 0.0
      %3989 = vmatprep.subr.mxu0 0.0
      %3990 = vmatpush1.msra.mxu0 0.0
      %3991 = vmatprep.mubr.f32.mxu0 0.0
      %v3992 = vand.u32 %v3520, 4294901760
      %v3993 = vsub.f32 %v3520, %v3992
      %v3994 = vand.u32 %v3993, 4294901760
      %3995 = vmatmul.mubr.f32.gmra.mrb[0].mxu0 %v3994
      %v3996 = vpop.f32.mrb[0].mxu0
      %v3997 = vadd.f32 %v3901, %v3996
      %v3998 = vpop.f32.mrb[0].mxu0
      %3999 = vmatprep.mubr.f32.mxu0 0.0
      %v4000 = vand.u32 %v3521, 4294901760
      %v4001 = vsub.f32 %v3521, %v4000
      %v4002 = vand.u32 %v4001, 4294901760
      %4003 = vmatmul.mubr.f32.gmra.mrb[0].mxu0 %v4002
      %v4004 = vpop.f32.mrb[0].mxu0
      %v4005 = vadd.f32 %v3908, %v4004
      %v4006 = vpop.f32.mrb[0].mxu0
      %4007 = vdwg.mxu0
      %4008 = vmatprep.subr.mxu0 0.0
      %v4009 = vand.u32 %v3522, 4294901760
      %v4010 = vsub.f32 %v3522, %v4009
      %v4011 = vand.u32 %v4010, 4294901760
      %4012 = vmatpush1.msra.mxu0 %v4011
      %4013 = vmatprep.subr.mxu0 0.0
      %v4014 = vand.u32 %v3523, 4294901760
      %v4015 = vsub.f32 %v3523, %v4014
      %v4016 = vand.u32 %v4015, 4294901760
      %4017 = vmatpush1.msra.mxu0 %v4016
      %4018 = vmatprep.subr.mxu0 0.0
      %v4019 = vand.u32 %v3524, 4294901760
      %v4020 = vsub.f32 %v3524, %v4019
      %v4021 = vand.u32 %v4020, 4294901760
      %4022 = vmatpush1.msra.mxu0 %v4021
      %4023 = vmatprep.subr.mxu0 0.0
      %v4024 = vand.u32 %v3525, 4294901760
      %v4025 = vsub.f32 %v3525, %v4024
      %v4026 = vand.u32 %v4025, 4294901760
      %4027 = vmatpush1.msra.mxu0 %v4026
      %4028 = vmatprep.subr.mxu0 0.0
      %v4029 = vand.u32 %v3526, 4294901760
      %v4030 = vsub.f32 %v3526, %v4029
      %v4031 = vand.u32 %v4030, 4294901760
      %4032 = vmatpush1.msra.mxu0 %v4031
      %4033 = vmatprep.subr.mxu0 0.0
      %v4034 = vand.u32 %v3527, 4294901760
      %v4035 = vsub.f32 %v3527, %v4034
      %v4036 = vand.u32 %v4035, 4294901760
      %4037 = vmatpush1.msra.mxu0 %v4036
      %4038 = vmatprep.subr.mxu0 0.0
      %v4039 = vand.u32 %v3528, 4294901760
      %v4040 = vsub.f32 %v3528, %v4039
      %v4041 = vand.u32 %v4040, 4294901760
      %4042 = vmatpush1.msra.mxu0 %v4041
      %4043 = vmatprep.subr.mxu0 0.0
      %v4044 = vand.u32 %v3529, 4294901760
      %v4045 = vsub.f32 %v3529, %v4044
      %v4046 = vand.u32 %v4045, 4294901760
      %4047 = vmatpush1.msra.mxu0 %v4046
      %4048 = vmatprep.subr.mxu0 0.0
      %v4049 = vand.u32 %v3530, 4294901760
      %v4050 = vsub.f32 %v3530, %v4049
      %v4051 = vand.u32 %v4050, 4294901760
      %4052 = vmatpush1.msra.mxu0 %v4051
      %4053 = vmatprep.subr.mxu0 0.0
      %v4054 = vand.u32 %v3531, 4294901760
      %v4055 = vsub.f32 %v3531, %v4054
      %v4056 = vand.u32 %v4055, 4294901760
      %4057 = vmatpush1.msra.mxu0 %v4056
      %4058 = vmatprep.subr.mxu0 0.0
      %v4059 = vand.u32 %v3532, 4294901760
      %v4060 = vsub.f32 %v3532, %v4059
      %v4061 = vand.u32 %v4060, 4294901760
      %4062 = vmatpush1.msra.mxu0 %v4061
      %4063 = vmatprep.subr.mxu0 0.0
      %v4064 = vand.u32 %v3533, 4294901760
      %v4065 = vsub.f32 %v3533, %v4064
      %v4066 = vand.u32 %v4065, 4294901760
      %4067 = vmatpush1.msra.mxu0 %v4066
      %4068 = vmatprep.subr.mxu0 0.0
      %v4069 = vand.u32 %v3534, 4294901760
      %v4070 = vsub.f32 %v3534, %v4069
      %v4071 = vand.u32 %v4070, 4294901760
      %4072 = vmatpush1.msra.mxu0 %v4071
      %4073 = vmatprep.subr.mxu0 0.0
      %v4074 = vand.u32 %v3535, 4294901760
      %v4075 = vsub.f32 %v3535, %v4074
      %v4076 = vand.u32 %v4075, 4294901760
      %4077 = vmatpush1.msra.mxu0 %v4076
      %4078 = vmatprep.subr.mxu0 0.0
      %v4079 = vand.u32 %v3536, 4294901760
      %v4080 = vsub.f32 %v3536, %v4079
      %v4081 = vand.u32 %v4080, 4294901760
      %4082 = vmatpush1.msra.mxu0 %v4081
      %4083 = vmatprep.subr.mxu0 0.0
      %v4084 = vand.u32 %v3537, 4294901760
      %v4085 = vsub.f32 %v3537, %v4084
      %v4086 = vand.u32 %v4085, 4294901760
      %4087 = vmatpush1.msra.mxu0 %v4086
      %4088 = vmatprep.subr.mxu0 0.0
      %4089 = vmatpush1.msra.mxu0 0.0
      %4090 = vmatprep.subr.mxu0 0.0
      %4091 = vmatpush1.msra.mxu0 0.0
      %4092 = vmatprep.subr.mxu0 0.0
      %4093 = vmatpush1.msra.mxu0 0.0
      %4094 = vmatprep.subr.mxu0 0.0
      %4095 = vmatpush1.msra.mxu0 0.0
      %4096 = vmatprep.subr.mxu0 0.0
      %4097 = vmatpush1.msra.mxu0 0.0
      %4098 = vmatprep.subr.mxu0 0.0
      %4099 = vmatpush1.msra.mxu0 0.0
      %4100 = vmatprep.subr.mxu0 0.0
      %4101 = vmatpush1.msra.mxu0 0.0
      %4102 = vmatprep.subr.mxu0 0.0
      %4103 = vmatpush1.msra.mxu0 0.0
      %4104 = vmatprep.subr.mxu0 0.0
      %4105 = vmatpush1.msra.mxu0 0.0
      %4106 = vmatprep.subr.mxu0 0.0
      %4107 = vmatpush1.msra.mxu0 0.0
      %4108 = vmatprep.subr.mxu0 0.0
      %4109 = vmatpush1.msra.mxu0 0.0
      %4110 = vmatprep.subr.mxu0 0.0
      %4111 = vmatpush1.msra.mxu0 0.0
      %4112 = vmatprep.subr.mxu0 0.0
      %4113 = vmatpush1.msra.mxu0 0.0
      %4114 = vmatprep.subr.mxu0 0.0
      %4115 = vmatpush1.msra.mxu0 0.0
      %4116 = vmatprep.subr.mxu0 0.0
      %4117 = vmatpush1.msra.mxu0 0.0
      %4118 = vmatprep.subr.mxu0 0.0
      %4119 = vmatpush1.msra.mxu0 0.0
      %4120 = vmatprep.mubr.f32.mxu0 0.0
      %v4121 = vand.u32 %v3520, 4294901760
      %4122 = vmatmul.mubr.f32.gmra.mrb[0].mxu0 %v4121
      %v4123 = vpop.f32.mrb[0].mxu0
      %v4124 = vadd.f32 %v3997, %v4123
      %v4125 = vpop.f32.mrb[0].mxu0
      %4126 = vmatprep.mubr.f32.mxu0 0.0
      %v4127 = vand.u32 %v3521, 4294901760
      %4128 = vmatmul.mubr.f32.gmra.mrb[0].mxu0 %v4127
      %v4129 = vpop.f32.mrb[0].mxu0
      %v4130 = vadd.f32 %v4005, %v4129
      %v4131 = vpop.f32.mrb[0].mxu0
      %4132 = vdwg.mxu0
      %4133 = vmatprep.subr.mxu0 0.0
      %v4134 = vand.u32 %v3522, 4294901760
      %4135 = vmatpush1.msra.mxu0 %v4134
      %4136 = vmatprep.subr.mxu0 0.0
      %v4137 = vand.u32 %v3523, 4294901760
      %4138 = vmatpush1.msra.mxu0 %v4137
      %4139 = vmatprep.subr.mxu0 0.0
      %v4140 = vand.u32 %v3524, 4294901760
      %4141 = vmatpush1.msra.mxu0 %v4140
      %4142 = vmatprep.subr.mxu0 0.0
      %v4143 = vand.u32 %v3525, 4294901760
      %4144 = vmatpush1.msra.mxu0 %v4143
      %4145 = vmatprep.subr.mxu0 0.0
      %v4146 = vand.u32 %v3526, 4294901760
      %4147 = vmatpush1.msra.mxu0 %v4146
      %4148 = vmatprep.subr.mxu0 0.0
      %v4149 = vand.u32 %v3527, 4294901760
      %4150 = vmatpush1.msra.mxu0 %v4149
      %4151 = vmatprep.subr.mxu0 0.0
      %v4152 = vand.u32 %v3528, 4294901760
      %4153 = vmatpush1.msra.mxu0 %v4152
      %4154 = vmatprep.subr.mxu0 0.0
      %v4155 = vand.u32 %v3529, 4294901760
      %4156 = vmatpush1.msra.mxu0 %v4155
      %4157 = vmatprep.subr.mxu0 0.0
      %v4158 = vand.u32 %v3530, 4294901760
      %4159 = vmatpush1.msra.mxu0 %v4158
      %4160 = vmatprep.subr.mxu0 0.0
      %v4161 = vand.u32 %v3531, 4294901760
      %4162 = vmatpush1.msra.mxu0 %v4161
      %4163 = vmatprep.subr.mxu0 0.0
      %v4164 = vand.u32 %v3532, 4294901760
      %4165 = vmatpush1.msra.mxu0 %v4164
      %4166 = vmatprep.subr.mxu0 0.0
      %v4167 = vand.u32 %v3533, 4294901760
      %4168 = vmatpush1.msra.mxu0 %v4167
      %4169 = vmatprep.subr.mxu0 0.0
      %v4170 = vand.u32 %v3534, 4294901760
      %4171 = vmatpush1.msra.mxu0 %v4170
      %4172 = vmatprep.subr.mxu0 0.0
      %v4173 = vand.u32 %v3535, 4294901760
      %4174 = vmatpush1.msra.mxu0 %v4173
      %4175 = vmatprep.subr.mxu0 0.0
      %v4176 = vand.u32 %v3536, 4294901760
      %4177 = vmatpush1.msra.mxu0 %v4176
      %4178 = vmatprep.subr.mxu0 0.0
      %v4179 = vand.u32 %v3537, 4294901760
      %4180 = vmatpush1.msra.mxu0 %v4179
      %4181 = vmatprep.subr.mxu0 0.0
      %4182 = vmatpush1.msra.mxu0 0.0
      %4183 = vmatprep.subr.mxu0 0.0
      %4184 = vmatpush1.msra.mxu0 0.0
      %4185 = vmatprep.subr.mxu0 0.0
      %4186 = vmatpush1.msra.mxu0 0.0
      %4187 = vmatprep.subr.mxu0 0.0
      %4188 = vmatpush1.msra.mxu0 0.0
      %4189 = vmatprep.subr.mxu0 0.0
      %4190 = vmatpush1.msra.mxu0 0.0
      %4191 = vmatprep.subr.mxu0 0.0
      %4192 = vmatpush1.msra.mxu0 0.0
      %4193 = vmatprep.subr.mxu0 0.0
      %4194 = vmatpush1.msra.mxu0 0.0
      %4195 = vmatprep.subr.mxu0 0.0
      %4196 = vmatpush1.msra.mxu0 0.0
      %4197 = vmatprep.subr.mxu0 0.0
      %4198 = vmatpush1.msra.mxu0 0.0
      %4199 = vmatprep.subr.mxu0 0.0
      %4200 = vmatpush1.msra.mxu0 0.0
      %4201 = vmatprep.subr.mxu0 0.0
      %4202 = vmatpush1.msra.mxu0 0.0
      %4203 = vmatprep.subr.mxu0 0.0
      %4204 = vmatpush1.msra.mxu0 0.0
      %4205 = vmatprep.subr.mxu0 0.0
      %4206 = vmatpush1.msra.mxu0 0.0
      %4207 = vmatprep.subr.mxu0 0.0
      %4208 = vmatpush1.msra.mxu0 0.0
      %4209 = vmatprep.subr.mxu0 0.0
      %4210 = vmatpush1.msra.mxu0 0.0
      %4211 = vmatprep.subr.mxu0 0.0
      %4212 = vmatpush1.msra.mxu0 0.0
      %4213 = vmatprep.mubr.f32.mxu0 0.0
      %v4214 = vand.u32 %v3520, 4294901760
      %4215 = vmatmul.mubr.f32.gmra.mrb[0].mxu0 %v4214
      %v4216 = vpop.f32.mrb[0].mxu0
      %v4217 = vadd.f32 %v4124, %v4216
      %v4218 = vpop.f32.mrb[0].mxu0
      %4219 = vmatprep.mubr.f32.mxu0 0.0
      %v4220 = vand.u32 %v3521, 4294901760
      %4221 = vmatmul.mubr.f32.gmra.mrb[0].mxu0 %v4220
      %v4222 = vpop.f32.mrb[0].mxu0
      %v4223 = vadd.f32 %v4130, %v4222
      %v4224 = vpop.f32.mrb[0].mxu0
      %4225 = vdwg.mxu0
      %v4226 = vadd.f32 %v4217, %v2324
      %v4227 = vadd.f32 %v4223, %v2325
      %4228 = vst.msk [vmem:[%s278] sm:$0xff] %vm296, %v4226
      %4229 = vst.msk [vmem:[%s278 + $0x8] sm:$0xff] %vm296, %v4227
      %p4230 = scmp.lt.s32.totalorder %s18, 1
      %s4231 = scalar_select %p4230, %s18, 1
      %s4232 = smul.addr %s4231, 2
      %s4233 = smul.addr %s4232, 8
      %s4234 = scalar_lea.vmem %s7, %s4233
      // Predicated region
      $region49: #{mlp_forward.1} parent=47 // pred_check
        %p4235 = pneg %p188
      $region50: #{mlp_forward.1} parent=47 // pred_check_branch
        %4237 = sbr.rel (%p4235) target = $region52
      $region51: #{mlp_forward.1} parent=47 // pred_region
        _
      $region52: #{mlp_forward.1} parent=47 // pred_fallthru
        _
    $region48: #{mlp_forward.1} parent=5 // pred_fallthru
      _
    %p4238 = scmp.le.s32.totalorder 2, %s13
    // Predicated region
    $region53: #{mlp_forward.1} parent=5 // pred_check
      %p4239 = pneg %p4238
    $region54: #{mlp_forward.1} parent=5 // pred_check_branch
      %4241 = sbr.rel (%p4239) target = $region56
    $region55: #{mlp_forward.1} parent=5 // pred_region
      %s4242 = ssub.s32 %s13, 2
      // Predicated region
      $region57: #{mlp_forward.1} parent=55 // pred_check
        %p4243 = pneg %p194
      $region58: #{mlp_forward.1} parent=55 // pred_check_branch
        %4245 = sbr.rel (%p4243) target = $region60
      $region59: #{mlp_forward.1} parent=55 // pred_region
        %p4246 = scmp.lt.s32.totalorder %s19, 1
        %s4247 = scalar_select %p4246, %s19, 1
        %s4248 = smul.addr %s4247, 2
        %s4249 = smul.addr %s4248, 8
        %s4250 = scalar_lea.vmem %s7, %s4249
      $region60: #{mlp_forward.1} parent=55 // pred_fallthru
        _
    $region56: #{mlp_forward.1} parent=5 // pred_fallthru
      _
  $region6: #{mlp_forward.1} parent=0 // loop_footer
    %s17 = sadd.s32 1, %s13
  $region7: #{mlp_forward.1} parent=0 // loop_footer_branch
    %12 = sbr.rel target = $region3
  $region8: #{mlp_forward.1} parent=0 // loop_exit
    _

</llo_original>
